<compile_context>
chip_gen: v5e
topology: v5e:2x2
jax: 0.10.0
libtpu: 0.0.40
codegen_flags: <defaults>
</compile_context>

<pallas_src>
import numpy as np

import jax
import jax.numpy as jnp
from jax import lax
from jax.experimental import pallas as pl
from jax.experimental.pallas import tpu as pltpu


# ---------------------------------------------------------------------------
# Layer plan (mirrors MaxpoolEncoder.__init__ exactly)
# ---------------------------------------------------------------------------
def build_plan(in_ch, inter_ch, out_ch, in_size, stop=0):
    binary = format(in_size, "b")[1:]
    f_in, f_out = in_ch, inter_ch
    s = in_size
    plan = []
    for i, bit in enumerate(binary):
        if i >= len(binary) - stop:
            break
        crop = (bit == "1")                      # ReflectionPad2d((-1,0,-1,0)) after pool
        s_out = s // 2 - (1 if crop else 0)      # MaxPool2d(2) floors, crop removes 1
        plan.append(dict(cin=f_in, cout=f_out, crop=crop, s_in=s, s_out=s_out))
        s = s_out
        f_in = inter_ch
        if i == len(binary) - 2:
            f_out = out_ch
    for li, m in enumerate(plan):
        m["relu"] = li < len(plan) - 1           # final ReLU is popped in the module
    assert len(plan) >= 1
    return plan


def make_params(key, plan):
    """Deterministic synthetic Conv2d weights/biases in PyTorch OIHW layout."""
    params = []
    for m in plan:
        key, kw, kb = jax.random.split(key, 3)
        w = jax.random.normal(kw, (m["cout"], m["cin"], 3, 3), jnp.float32)
        w = w / jnp.sqrt(9.0 * m["cin"])
        b = 0.01 * jax.random.normal(kb, (m["cout"],), jnp.float32)
        params.append((w, b))
    return params


# ---------------------------------------------------------------------------
# Host-side 0/1 selection matrices (reflect pad + 3x3 taps; 2x2 pool + crop)
# ---------------------------------------------------------------------------
def _reflect(i, n):
    if i < 0:
        return -i
    if i >= n:
        return 2 * n - 2 - i
    return i


def _tap_gather(s):
    """A[t] (HW, HW): column q is a one-hot of the reflect-padded source pixel
    for 3x3 tap t at output pixel q, i.e. (h @ A[t])[:, q] = h[:, src(t, q)]."""
    hw = s * s
    A = np.zeros((9, hw, hw), np.float32)
    for t in range(9):
        dy, dx = t // 3 - 1, t % 3 - 1
        for q in range(hw):
            y, x = divmod(q, s)
            p = _reflect(y + dy, s) * s + _reflect(x + dx, s)
            A[t, p, q] = 1.0
    return A


def _pool_select(s_in, crop):
    """P[k] (HW_in, HW_out): selects phase k of the 2x2/stride-2 max pool; the
    post-pool (-1,0,-1,0) reflection crop (drop first row/col) is folded in."""
    off = 1 if crop else 0
    s_out = s_in // 2 - off
    P = np.zeros((4, s_in * s_in, s_out * s_out), np.float32)
    for k in range(4):
        a, b = k // 2, k % 2
        for q in range(s_out * s_out):
            oy, ox = divmod(q, s_out)
            sy, sx = 2 * (oy + off) + a, 2 * (ox + off) + b
            P[k, sy * s_in + sx, q] = 1.0
    return P


def prepare_layer_inputs(params, plan):
    """Flat list of per-layer kernel operands: [A, Wt, b, P] * n_layers."""
    flat = []
    for (w, b), m in zip(params, plan):
        A = jnp.asarray(_tap_gather(m["s_in"]))                          # (9, HW, HW)
        Wt = jnp.transpose(w, (2, 3, 0, 1)).reshape(9, m["cout"], m["cin"])
        b2 = jnp.reshape(b, (m["cout"], 1))
        P = jnp.asarray(_pool_select(m["s_in"], m["crop"]))              # (4, HW, HWo)
        flat += [A, Wt, b2, P]
    return flat


# ---------------------------------------------------------------------------
# Fused Pallas kernel: all layers, activations resident in VMEM
# ---------------------------------------------------------------------------
def _make_kernel(relu_flags):
    n_layers = len(relu_flags)

    def kernel(*refs):
        x_ref, o_ref = refs[0], refs[-1]
        h = x_ref[0]                                       # (Cin0, H0*W0), lane-dense
        for li in range(n_layers):
            A_ref, Wt_ref, b_ref, P_ref = refs[1 + 4 * li: 5 + 4 * li]
            # 3x3 reflect-padded conv:  z = sum_t Wt[t] @ h @ A[t] + b
            acc = None
            for t in range(9):
                y = jnp.dot(Wt_ref[t], h, preferred_element_type=jnp.float32)
                g = jnp.dot(y, A_ref[t], preferred_element_type=jnp.float32)
                acc = g if acc is None else acc + g
            z = acc + b_ref[...]                           # bias broadcast over lanes
            # 2x2/stride-2 max pool (+ optional crop): max of 4 gathered phases
            pooled = None
            for k in range(4):
                pk = jnp.dot(z, P_ref[k], preferred_element_type=jnp.float32)
                pooled = pk if pooled is None else jnp.maximum(pooled, pk)
            if relu_flags[li]:
                pooled = jnp.maximum(pooled, 0.0)
            h = pooled
        o_ref[0] = h.astype(o_ref.dtype)

    return kernel


def _const_spec(arr):
    zeros = (0,) * arr.ndim
    return pl.BlockSpec(arr.shape, lambda b, _z=zeros: _z)


def maxpool_encoder_pallas(x_nchw, layer_inputs, plan):
    B = x_nchw.shape[0]
    c0, s0 = plan[0]["cin"], plan[0]["s_in"]
    c_last = plan[-1]["cout"]
    hw_last = plan[-1]["s_out"] ** 2

    x_flat = x_nchw.reshape(B, c0, s0 * s0).astype(jnp.float32)

    in_specs = [pl.BlockSpec((1, c0, s0 * s0), lambda b: (b, 0, 0))]
    in_specs += [_const_spec(a) for a in layer_inputs]

    out = pl.pallas_call(
        _make_kernel([m["relu"] for m in plan]),
        out_shape=jax.ShapeDtypeStruct((B, c_last, hw_last), jnp.float32),
        grid_spec=pltpu.PrefetchScalarGridSpec(
            num_scalar_prefetch=0,
            grid=(B,),
            in_specs=in_specs,
            out_specs=pl.BlockSpec((1, c_last, hw_last), lambda b: (b, 0, 0)),
        ),
        compiler_params=pltpu.CompilerParams(
            dimension_semantics=("parallel",),
            vmem_limit_bytes=32 * 1024 * 1024,
        ),
    )(x_flat, *layer_inputs)
    # nn.Flatten(1, 3): (B, C, H*W) -> (B, C*H*W)  (NCHW order, matches PyTorch)
    return out.reshape(B, c_last * hw_last)


# ---------------------------------------------------------------------------
# Pure-JAX reference (lax.conv + reduce_window) for validation
# ---------------------------------------------------------------------------
def maxpool_encoder_ref(x, params, plan):
    h = x.astype(jnp.float32)
    for (w, b), m in zip(params, plan):
        hp = jnp.pad(h, ((0, 0), (0, 0), (1, 1), (1, 1)), mode="reflect")
        dn = lax.conv_dimension_numbers(hp.shape, w.shape, ("NCHW", "OIHW", "NCHW"))
        z = lax.conv_general_dilated(hp, w, (1, 1), "VALID", dimension_numbers=dn,
                                     precision=lax.Precision.HIGHEST)
        z = z + b[None, :, None, None]
        z = lax.reduce_window(z, -jnp.inf, lax.max, (1, 1, 2, 2), (1, 1, 2, 2), "VALID")
        if m["crop"]:
            z = z[:, :, 1:, 1:]
        if m["relu"]:
            z = jnp.maximum(z, 0.0)
        h = z
    return h.reshape(h.shape[0], -1)


if __name__ == "__main__":
    B, in_ch, inter_ch, out_ch, in_size = 2, 4, 8, 3, 16
    plan = build_plan(in_ch, inter_ch, out_ch, in_size, stop=0)

    key = jax.random.PRNGKey(0)
    key, kx = jax.random.split(key)
    x = jax.random.normal(kx, (B, in_ch, in_size, in_size), jnp.float32)
    params = make_params(key, plan)
    layer_inputs = prepare_layer_inputs(params, plan)

    fn = jax.jit(lambda xx: maxpool_encoder_pallas(xx, layer_inputs, plan))
    out = jax.block_until_ready(fn(x))

    ref = maxpool_encoder_ref(x, params, plan)
    assert out.shape == (B, out_ch), out.shape
    # Tolerance leaves headroom for possible bf16-pass MXU matmul rounding vs the
    # XLA reference; structural errors would be O(0.1-1), far above this.
    assert jnp.allclose(out, ref, atol=2e-2, rtol=2e-2), float(
        jnp.max(jnp.abs(out - ref)))
    print("KERNEL_OK")
</pallas_src>

<mosaic_0001>
module attributes {stable_mosaic.version = 11 : i64} {
  func.func @kernel(%arg0: i32, %arg1: memref<1x4x256xf32, #tpu.memory_space<vmem>>, %arg2: memref<9x256x256xf32, #tpu.memory_space<vmem>>, %arg3: memref<9x8x4xf32, #tpu.memory_space<vmem>>, %arg4: memref<8x1xf32, #tpu.memory_space<vmem>>, %arg5: memref<4x256x64xf32, #tpu.memory_space<vmem>>, %arg6: memref<9x64x64xf32, #tpu.memory_space<vmem>>, %arg7: memref<9x8x8xf32, #tpu.memory_space<vmem>>, %arg8: memref<8x1xf32, #tpu.memory_space<vmem>>, %arg9: memref<4x64x16xf32, #tpu.memory_space<vmem>>, %arg10: memref<9x16x16xf32, #tpu.memory_space<vmem>>, %arg11: memref<9x8x8xf32, #tpu.memory_space<vmem>>, %arg12: memref<8x1xf32, #tpu.memory_space<vmem>>, %arg13: memref<4x16x4xf32, #tpu.memory_space<vmem>>, %arg14: memref<9x4x4xf32, #tpu.memory_space<vmem>>, %arg15: memref<9x3x8xf32, #tpu.memory_space<vmem>>, %arg16: memref<3x1xf32, #tpu.memory_space<vmem>>, %arg17: memref<4x4x1xf32, #tpu.memory_space<vmem>>, %arg18: memref<1x3x1xf32, #tpu.memory_space<vmem>>) attributes {dimension_semantics = [#tpu.dimension_semantics<parallel>], iteration_bounds = array<i64: 2>, scalar_prefetch = 0 : i64, scratch_operands = 0 : i64, tpu.core_type = #tpu.core_type<tc>, window_params = [{transform_indices = @transform_0, window_bounds = array<i64: 1, 4, 256>}, {pipeline_mode = #tpu.pipeline_mode<synchronous>, transform_indices = @transform_1, window_bounds = array<i64: 9, 256, 256>}, {pipeline_mode = #tpu.pipeline_mode<synchronous>, transform_indices = @transform_2, window_bounds = array<i64: 9, 8, 4>}, {pipeline_mode = #tpu.pipeline_mode<synchronous>, transform_indices = @transform_3, window_bounds = array<i64: 8, 1>}, {pipeline_mode = #tpu.pipeline_mode<synchronous>, transform_indices = @transform_4, window_bounds = array<i64: 4, 256, 64>}, {pipeline_mode = #tpu.pipeline_mode<synchronous>, transform_indices = @transform_5, window_bounds = array<i64: 9, 64, 64>}, {pipeline_mode = #tpu.pipeline_mode<synchronous>, transform_indices = @transform_6, window_bounds = array<i64: 9, 8, 8>}, {pipeline_mode = #tpu.pipeline_mode<synchronous>, transform_indices = @transform_7, window_bounds = array<i64: 8, 1>}, {pipeline_mode = #tpu.pipeline_mode<synchronous>, transform_indices = @transform_8, window_bounds = array<i64: 4, 64, 16>}, {pipeline_mode = #tpu.pipeline_mode<synchronous>, transform_indices = @transform_9, window_bounds = array<i64: 9, 16, 16>}, {pipeline_mode = #tpu.pipeline_mode<synchronous>, transform_indices = @transform_10, window_bounds = array<i64: 9, 8, 8>}, {pipeline_mode = #tpu.pipeline_mode<synchronous>, transform_indices = @transform_11, window_bounds = array<i64: 8, 1>}, {pipeline_mode = #tpu.pipeline_mode<synchronous>, transform_indices = @transform_12, window_bounds = array<i64: 4, 16, 4>}, {pipeline_mode = #tpu.pipeline_mode<synchronous>, transform_indices = @transform_13, window_bounds = array<i64: 9, 4, 4>}, {pipeline_mode = #tpu.pipeline_mode<synchronous>, transform_indices = @transform_14, window_bounds = array<i64: 9, 3, 8>}, {pipeline_mode = #tpu.pipeline_mode<synchronous>, transform_indices = @transform_15, window_bounds = array<i64: 3, 1>}, {pipeline_mode = #tpu.pipeline_mode<synchronous>, transform_indices = @transform_16, window_bounds = array<i64: 4, 4, 1>}, {transform_indices = @transform_17, window_bounds = array<i64: 1, 3, 1>}]} {
    %c0 = arith.constant 0 : index
    %c0_0 = arith.constant 0 : index
    %c0_1 = arith.constant 0 : index
    %0 = vector.load %arg1[%c0, %c0_0, %c0_1] : memref<1x4x256xf32, #tpu.memory_space<vmem>>, vector<1x4x256xf32>
    %1 = vector.shape_cast %0 : vector<1x4x256xf32> to vector<4x256xf32>
    %c0_2 = arith.constant 0 : index
    %c0_3 = arith.constant 0 : index
    %c0_4 = arith.constant 0 : index
    %2 = vector.load %arg3[%c0_2, %c0_3, %c0_4] : memref<9x8x4xf32, #tpu.memory_space<vmem>>, vector<1x8x4xf32>
    %3 = vector.shape_cast %2 : vector<1x8x4xf32> to vector<8x4xf32>
    %cst = arith.constant dense<0.000000e+00> : vector<8x256xf32>
    %4 = tpu.matmul %3, %1, %cst {dimension_numbers = #tpu.dot_dimension_numbers<[1], [0], [0], [1], [0, 0, 1, 1], [], []>} : vector<8x4xf32>, vector<4x256xf32>, vector<8x256xf32> -> vector<8x256xf32>
    %c0_5 = arith.constant 0 : index
    %c0_6 = arith.constant 0 : index
    %c0_7 = arith.constant 0 : index
    %5 = vector.load %arg2[%c0_5, %c0_6, %c0_7] : memref<9x256x256xf32, #tpu.memory_space<vmem>>, vector<1x256x256xf32>
    %6 = vector.shape_cast %5 : vector<1x256x256xf32> to vector<256x256xf32>
    %cst_8 = arith.constant dense<0.000000e+00> : vector<8x256xf32>
    %7 = tpu.matmul %4, %6, %cst_8 {dimension_numbers = #tpu.dot_dimension_numbers<[1], [0], [0], [1], [0, 0, 1, 1], [], []>} : vector<8x256xf32>, vector<256x256xf32>, vector<8x256xf32> -> vector<8x256xf32>
    %c1 = arith.constant 1 : index
    %c0_9 = arith.constant 0 : index
    %c0_10 = arith.constant 0 : index
    %8 = vector.load %arg3[%c1, %c0_9, %c0_10] : memref<9x8x4xf32, #tpu.memory_space<vmem>>, vector<1x8x4xf32>
    %9 = vector.shape_cast %8 : vector<1x8x4xf32> to vector<8x4xf32>
    %cst_11 = arith.constant dense<0.000000e+00> : vector<8x256xf32>
    %10 = tpu.matmul %9, %1, %cst_11 {dimension_numbers = #tpu.dot_dimension_numbers<[1], [0], [0], [1], [0, 0, 1, 1], [], []>} : vector<8x4xf32>, vector<4x256xf32>, vector<8x256xf32> -> vector<8x256xf32>
    %c1_12 = arith.constant 1 : index
    %c0_13 = arith.constant 0 : index
    %c0_14 = arith.constant 0 : index
    %11 = vector.load %arg2[%c1_12, %c0_13, %c0_14] : memref<9x256x256xf32, #tpu.memory_space<vmem>>, vector<1x256x256xf32>
    %12 = vector.shape_cast %11 : vector<1x256x256xf32> to vector<256x256xf32>
    %cst_15 = arith.constant dense<0.000000e+00> : vector<8x256xf32>
    %13 = tpu.matmul %10, %12, %cst_15 {dimension_numbers = #tpu.dot_dimension_numbers<[1], [0], [0], [1], [0, 0, 1, 1], [], []>} : vector<8x256xf32>, vector<256x256xf32>, vector<8x256xf32> -> vector<8x256xf32>
    %14 = arith.addf %7, %13 : vector<8x256xf32>
    %c2 = arith.constant 2 : index
    %c0_16 = arith.constant 0 : index
    %c0_17 = arith.constant 0 : index
    %15 = vector.load %arg3[%c2, %c0_16, %c0_17] : memref<9x8x4xf32, #tpu.memory_space<vmem>>, vector<1x8x4xf32>
    %16 = vector.shape_cast %15 : vector<1x8x4xf32> to vector<8x4xf32>
    %cst_18 = arith.constant dense<0.000000e+00> : vector<8x256xf32>
    %17 = tpu.matmul %16, %1, %cst_18 {dimension_numbers = #tpu.dot_dimension_numbers<[1], [0], [0], [1], [0, 0, 1, 1], [], []>} : vector<8x4xf32>, vector<4x256xf32>, vector<8x256xf32> -> vector<8x256xf32>
    %c2_19 = arith.constant 2 : index
    %c0_20 = arith.constant 0 : index
    %c0_21 = arith.constant 0 : index
    %18 = vector.load %arg2[%c2_19, %c0_20, %c0_21] : memref<9x256x256xf32, #tpu.memory_space<vmem>>, vector<1x256x256xf32>
    %19 = vector.shape_cast %18 : vector<1x256x256xf32> to vector<256x256xf32>
    %cst_22 = arith.constant dense<0.000000e+00> : vector<8x256xf32>
    %20 = tpu.matmul %17, %19, %cst_22 {dimension_numbers = #tpu.dot_dimension_numbers<[1], [0], [0], [1], [0, 0, 1, 1], [], []>} : vector<8x256xf32>, vector<256x256xf32>, vector<8x256xf32> -> vector<8x256xf32>
    %21 = arith.addf %14, %20 : vector<8x256xf32>
    %c3 = arith.constant 3 : index
    %c0_23 = arith.constant 0 : index
    %c0_24 = arith.constant 0 : index
    %22 = vector.load %arg3[%c3, %c0_23, %c0_24] : memref<9x8x4xf32, #tpu.memory_space<vmem>>, vector<1x8x4xf32>
    %23 = vector.shape_cast %22 : vector<1x8x4xf32> to vector<8x4xf32>
    %cst_25 = arith.constant dense<0.000000e+00> : vector<8x256xf32>
    %24 = tpu.matmul %23, %1, %cst_25 {dimension_numbers = #tpu.dot_dimension_numbers<[1], [0], [0], [1], [0, 0, 1, 1], [], []>} : vector<8x4xf32>, vector<4x256xf32>, vector<8x256xf32> -> vector<8x256xf32>
    %c3_26 = arith.constant 3 : index
    %c0_27 = arith.constant 0 : index
    %c0_28 = arith.constant 0 : index
    %25 = vector.load %arg2[%c3_26, %c0_27, %c0_28] : memref<9x256x256xf32, #tpu.memory_space<vmem>>, vector<1x256x256xf32>
    %26 = vector.shape_cast %25 : vector<1x256x256xf32> to vector<256x256xf32>
    %cst_29 = arith.constant dense<0.000000e+00> : vector<8x256xf32>
    %27 = tpu.matmul %24, %26, %cst_29 {dimension_numbers = #tpu.dot_dimension_numbers<[1], [0], [0], [1], [0, 0, 1, 1], [], []>} : vector<8x256xf32>, vector<256x256xf32>, vector<8x256xf32> -> vector<8x256xf32>
    %28 = arith.addf %21, %27 : vector<8x256xf32>
    %c4 = arith.constant 4 : index
    %c0_30 = arith.constant 0 : index
    %c0_31 = arith.constant 0 : index
    %29 = vector.load %arg3[%c4, %c0_30, %c0_31] : memref<9x8x4xf32, #tpu.memory_space<vmem>>, vector<1x8x4xf32>
    %30 = vector.shape_cast %29 : vector<1x8x4xf32> to vector<8x4xf32>
    %cst_32 = arith.constant dense<0.000000e+00> : vector<8x256xf32>
    %31 = tpu.matmul %30, %1, %cst_32 {dimension_numbers = #tpu.dot_dimension_numbers<[1], [0], [0], [1], [0, 0, 1, 1], [], []>} : vector<8x4xf32>, vector<4x256xf32>, vector<8x256xf32> -> vector<8x256xf32>
    %c4_33 = arith.constant 4 : index
    %c0_34 = arith.constant 0 : index
    %c0_35 = arith.constant 0 : index
    %32 = vector.load %arg2[%c4_33, %c0_34, %c0_35] : memref<9x256x256xf32, #tpu.memory_space<vmem>>, vector<1x256x256xf32>
    %33 = vector.shape_cast %32 : vector<1x256x256xf32> to vector<256x256xf32>
    %cst_36 = arith.constant dense<0.000000e+00> : vector<8x256xf32>
    %34 = tpu.matmul %31, %33, %cst_36 {dimension_numbers = #tpu.dot_dimension_numbers<[1], [0], [0], [1], [0, 0, 1, 1], [], []>} : vector<8x256xf32>, vector<256x256xf32>, vector<8x256xf32> -> vector<8x256xf32>
    %35 = arith.addf %28, %34 : vector<8x256xf32>
    %c5 = arith.constant 5 : index
    %c0_37 = arith.constant 0 : index
    %c0_38 = arith.constant 0 : index
    %36 = vector.load %arg3[%c5, %c0_37, %c0_38] : memref<9x8x4xf32, #tpu.memory_space<vmem>>, vector<1x8x4xf32>
    %37 = vector.shape_cast %36 : vector<1x8x4xf32> to vector<8x4xf32>
    %cst_39 = arith.constant dense<0.000000e+00> : vector<8x256xf32>
    %38 = tpu.matmul %37, %1, %cst_39 {dimension_numbers = #tpu.dot_dimension_numbers<[1], [0], [0], [1], [0, 0, 1, 1], [], []>} : vector<8x4xf32>, vector<4x256xf32>, vector<8x256xf32> -> vector<8x256xf32>
    %c5_40 = arith.constant 5 : index
    %c0_41 = arith.constant 0 : index
    %c0_42 = arith.constant 0 : index
    %39 = vector.load %arg2[%c5_40, %c0_41, %c0_42] : memref<9x256x256xf32, #tpu.memory_space<vmem>>, vector<1x256x256xf32>
    %40 = vector.shape_cast %39 : vector<1x256x256xf32> to vector<256x256xf32>
    %cst_43 = arith.constant dense<0.000000e+00> : vector<8x256xf32>
    %41 = tpu.matmul %38, %40, %cst_43 {dimension_numbers = #tpu.dot_dimension_numbers<[1], [0], [0], [1], [0, 0, 1, 1], [], []>} : vector<8x256xf32>, vector<256x256xf32>, vector<8x256xf32> -> vector<8x256xf32>
    %42 = arith.addf %35, %41 : vector<8x256xf32>
    %c6 = arith.constant 6 : index
    %c0_44 = arith.constant 0 : index
    %c0_45 = arith.constant 0 : index
    %43 = vector.load %arg3[%c6, %c0_44, %c0_45] : memref<9x8x4xf32, #tpu.memory_space<vmem>>, vector<1x8x4xf32>
    %44 = vector.shape_cast %43 : vector<1x8x4xf32> to vector<8x4xf32>
    %cst_46 = arith.constant dense<0.000000e+00> : vector<8x256xf32>
    %45 = tpu.matmul %44, %1, %cst_46 {dimension_numbers = #tpu.dot_dimension_numbers<[1], [0], [0], [1], [0, 0, 1, 1], [], []>} : vector<8x4xf32>, vector<4x256xf32>, vector<8x256xf32> -> vector<8x256xf32>
    %c6_47 = arith.constant 6 : index
    %c0_48 = arith.constant 0 : index
    %c0_49 = arith.constant 0 : index
    %46 = vector.load %arg2[%c6_47, %c0_48, %c0_49] : memref<9x256x256xf32, #tpu.memory_space<vmem>>, vector<1x256x256xf32>
    %47 = vector.shape_cast %46 : vector<1x256x256xf32> to vector<256x256xf32>
    %cst_50 = arith.constant dense<0.000000e+00> : vector<8x256xf32>
    %48 = tpu.matmul %45, %47, %cst_50 {dimension_numbers = #tpu.dot_dimension_numbers<[1], [0], [0], [1], [0, 0, 1, 1], [], []>} : vector<8x256xf32>, vector<256x256xf32>, vector<8x256xf32> -> vector<8x256xf32>
    %49 = arith.addf %42, %48 : vector<8x256xf32>
    %c7 = arith.constant 7 : index
    %c0_51 = arith.constant 0 : index
    %c0_52 = arith.constant 0 : index
    %50 = vector.load %arg3[%c7, %c0_51, %c0_52] : memref<9x8x4xf32, #tpu.memory_space<vmem>>, vector<1x8x4xf32>
    %51 = vector.shape_cast %50 : vector<1x8x4xf32> to vector<8x4xf32>
    %cst_53 = arith.constant dense<0.000000e+00> : vector<8x256xf32>
    %52 = tpu.matmul %51, %1, %cst_53 {dimension_numbers = #tpu.dot_dimension_numbers<[1], [0], [0], [1], [0, 0, 1, 1], [], []>} : vector<8x4xf32>, vector<4x256xf32>, vector<8x256xf32> -> vector<8x256xf32>
    %c7_54 = arith.constant 7 : index
    %c0_55 = arith.constant 0 : index
    %c0_56 = arith.constant 0 : index
    %53 = vector.load %arg2[%c7_54, %c0_55, %c0_56] : memref<9x256x256xf32, #tpu.memory_space<vmem>>, vector<1x256x256xf32>
    %54 = vector.shape_cast %53 : vector<1x256x256xf32> to vector<256x256xf32>
    %cst_57 = arith.constant dense<0.000000e+00> : vector<8x256xf32>
    %55 = tpu.matmul %52, %54, %cst_57 {dimension_numbers = #tpu.dot_dimension_numbers<[1], [0], [0], [1], [0, 0, 1, 1], [], []>} : vector<8x256xf32>, vector<256x256xf32>, vector<8x256xf32> -> vector<8x256xf32>
    %56 = arith.addf %49, %55 : vector<8x256xf32>
    %c8 = arith.constant 8 : index
    %c0_58 = arith.constant 0 : index
    %c0_59 = arith.constant 0 : index
    %57 = vector.load %arg3[%c8, %c0_58, %c0_59] : memref<9x8x4xf32, #tpu.memory_space<vmem>>, vector<1x8x4xf32>
    %58 = vector.shape_cast %57 : vector<1x8x4xf32> to vector<8x4xf32>
    %cst_60 = arith.constant dense<0.000000e+00> : vector<8x256xf32>
    %59 = tpu.matmul %58, %1, %cst_60 {dimension_numbers = #tpu.dot_dimension_numbers<[1], [0], [0], [1], [0, 0, 1, 1], [], []>} : vector<8x4xf32>, vector<4x256xf32>, vector<8x256xf32> -> vector<8x256xf32>
    %c8_61 = arith.constant 8 : index
    %c0_62 = arith.constant 0 : index
    %c0_63 = arith.constant 0 : index
    %60 = vector.load %arg2[%c8_61, %c0_62, %c0_63] : memref<9x256x256xf32, #tpu.memory_space<vmem>>, vector<1x256x256xf32>
    %61 = vector.shape_cast %60 : vector<1x256x256xf32> to vector<256x256xf32>
    %cst_64 = arith.constant dense<0.000000e+00> : vector<8x256xf32>
    %62 = tpu.matmul %59, %61, %cst_64 {dimension_numbers = #tpu.dot_dimension_numbers<[1], [0], [0], [1], [0, 0, 1, 1], [], []>} : vector<8x256xf32>, vector<256x256xf32>, vector<8x256xf32> -> vector<8x256xf32>
    %63 = arith.addf %56, %62 : vector<8x256xf32>
    %c0_65 = arith.constant 0 : index
    %c0_66 = arith.constant 0 : index
    %64 = vector.load %arg4[%c0_65, %c0_66] : memref<8x1xf32, #tpu.memory_space<vmem>>, vector<8x1xf32>
    %65 = vector.broadcast %64 : vector<8x1xf32> to vector<8x256xf32>
    %66 = arith.addf %63, %65 : vector<8x256xf32>
    %c0_67 = arith.constant 0 : index
    %c0_68 = arith.constant 0 : index
    %c0_69 = arith.constant 0 : index
    %67 = vector.load %arg5[%c0_67, %c0_68, %c0_69] : memref<4x256x64xf32, #tpu.memory_space<vmem>>, vector<1x256x64xf32>
    %68 = vector.shape_cast %67 : vector<1x256x64xf32> to vector<256x64xf32>
    %cst_70 = arith.constant dense<0.000000e+00> : vector<8x64xf32>
    %69 = tpu.matmul %66, %68, %cst_70 {dimension_numbers = #tpu.dot_dimension_numbers<[1], [0], [0], [1], [0, 0, 1, 1], [], []>} : vector<8x256xf32>, vector<256x64xf32>, vector<8x64xf32> -> vector<8x64xf32>
    %c1_71 = arith.constant 1 : index
    %c0_72 = arith.constant 0 : index
    %c0_73 = arith.constant 0 : index
    %70 = vector.load %arg5[%c1_71, %c0_72, %c0_73] : memref<4x256x64xf32, #tpu.memory_space<vmem>>, vector<1x256x64xf32>
    %71 = vector.shape_cast %70 : vector<1x256x64xf32> to vector<256x64xf32>
    %cst_74 = arith.constant dense<0.000000e+00> : vector<8x64xf32>
    %72 = tpu.matmul %66, %71, %cst_74 {dimension_numbers = #tpu.dot_dimension_numbers<[1], [0], [0], [1], [0, 0, 1, 1], [], []>} : vector<8x256xf32>, vector<256x64xf32>, vector<8x64xf32> -> vector<8x64xf32>
    %73 = arith.maximumf %69, %72 : vector<8x64xf32>
    %c2_75 = arith.constant 2 : index
    %c0_76 = arith.constant 0 : index
    %c0_77 = arith.constant 0 : index
    %74 = vector.load %arg5[%c2_75, %c0_76, %c0_77] : memref<4x256x64xf32, #tpu.memory_space<vmem>>, vector<1x256x64xf32>
    %75 = vector.shape_cast %74 : vector<1x256x64xf32> to vector<256x64xf32>
    %cst_78 = arith.constant dense<0.000000e+00> : vector<8x64xf32>
    %76 = tpu.matmul %66, %75, %cst_78 {dimension_numbers = #tpu.dot_dimension_numbers<[1], [0], [0], [1], [0, 0, 1, 1], [], []>} : vector<8x256xf32>, vector<256x64xf32>, vector<8x64xf32> -> vector<8x64xf32>
    %77 = arith.maximumf %73, %76 : vector<8x64xf32>
    %c3_79 = arith.constant 3 : index
    %c0_80 = arith.constant 0 : index
    %c0_81 = arith.constant 0 : index
    %78 = vector.load %arg5[%c3_79, %c0_80, %c0_81] : memref<4x256x64xf32, #tpu.memory_space<vmem>>, vector<1x256x64xf32>
    %79 = vector.shape_cast %78 : vector<1x256x64xf32> to vector<256x64xf32>
    %cst_82 = arith.constant dense<0.000000e+00> : vector<8x64xf32>
    %80 = tpu.matmul %66, %79, %cst_82 {dimension_numbers = #tpu.dot_dimension_numbers<[1], [0], [0], [1], [0, 0, 1, 1], [], []>} : vector<8x256xf32>, vector<256x64xf32>, vector<8x64xf32> -> vector<8x64xf32>
    %81 = arith.maximumf %77, %80 : vector<8x64xf32>
    %cst_83 = arith.constant 0.000000e+00 : f32
    %82 = vector.broadcast %cst_83 : f32 to vector<8x64xf32>
    %83 = arith.maximumf %81, %82 : vector<8x64xf32>
    %c0_84 = arith.constant 0 : index
    %c0_85 = arith.constant 0 : index
    %c0_86 = arith.constant 0 : index
    %84 = vector.load %arg7[%c0_84, %c0_85, %c0_86] : memref<9x8x8xf32, #tpu.memory_space<vmem>>, vector<1x8x8xf32>
    %85 = vector.shape_cast %84 : vector<1x8x8xf32> to vector<8x8xf32>
    %cst_87 = arith.constant dense<0.000000e+00> : vector<8x64xf32>
    %86 = tpu.matmul %85, %83, %cst_87 {dimension_numbers = #tpu.dot_dimension_numbers<[1], [0], [0], [1], [0, 0, 1, 1], [], []>} : vector<8x8xf32>, vector<8x64xf32>, vector<8x64xf32> -> vector<8x64xf32>
    %c0_88 = arith.constant 0 : index
    %c0_89 = arith.constant 0 : index
    %c0_90 = arith.constant 0 : index
    %87 = vector.load %arg6[%c0_88, %c0_89, %c0_90] : memref<9x64x64xf32, #tpu.memory_space<vmem>>, vector<1x64x64xf32>
    %88 = vector.shape_cast %87 : vector<1x64x64xf32> to vector<64x64xf32>
    %cst_91 = arith.constant dense<0.000000e+00> : vector<8x64xf32>
    %89 = tpu.matmul %86, %88, %cst_91 {dimension_numbers = #tpu.dot_dimension_numbers<[1], [0], [0], [1], [0, 0, 1, 1], [], []>} : vector<8x64xf32>, vector<64x64xf32>, vector<8x64xf32> -> vector<8x64xf32>
    %c1_92 = arith.constant 1 : index
    %c0_93 = arith.constant 0 : index
    %c0_94 = arith.constant 0 : index
    %90 = vector.load %arg7[%c1_92, %c0_93, %c0_94] : memref<9x8x8xf32, #tpu.memory_space<vmem>>, vector<1x8x8xf32>
    %91 = vector.shape_cast %90 : vector<1x8x8xf32> to vector<8x8xf32>
    %cst_95 = arith.constant dense<0.000000e+00> : vector<8x64xf32>
    %92 = tpu.matmul %91, %83, %cst_95 {dimension_numbers = #tpu.dot_dimension_numbers<[1], [0], [0], [1], [0, 0, 1, 1], [], []>} : vector<8x8xf32>, vector<8x64xf32>, vector<8x64xf32> -> vector<8x64xf32>
    %c1_96 = arith.constant 1 : index
    %c0_97 = arith.constant 0 : index
    %c0_98 = arith.constant 0 : index
    %93 = vector.load %arg6[%c1_96, %c0_97, %c0_98] : memref<9x64x64xf32, #tpu.memory_space<vmem>>, vector<1x64x64xf32>
    %94 = vector.shape_cast %93 : vector<1x64x64xf32> to vector<64x64xf32>
    %cst_99 = arith.constant dense<0.000000e+00> : vector<8x64xf32>
    %95 = tpu.matmul %92, %94, %cst_99 {dimension_numbers = #tpu.dot_dimension_numbers<[1], [0], [0], [1], [0, 0, 1, 1], [], []>} : vector<8x64xf32>, vector<64x64xf32>, vector<8x64xf32> -> vector<8x64xf32>
    %96 = arith.addf %89, %95 : vector<8x64xf32>
    %c2_100 = arith.constant 2 : index
    %c0_101 = arith.constant 0 : index
    %c0_102 = arith.constant 0 : index
    %97 = vector.load %arg7[%c2_100, %c0_101, %c0_102] : memref<9x8x8xf32, #tpu.memory_space<vmem>>, vector<1x8x8xf32>
    %98 = vector.shape_cast %97 : vector<1x8x8xf32> to vector<8x8xf32>
    %cst_103 = arith.constant dense<0.000000e+00> : vector<8x64xf32>
    %99 = tpu.matmul %98, %83, %cst_103 {dimension_numbers = #tpu.dot_dimension_numbers<[1], [0], [0], [1], [0, 0, 1, 1], [], []>} : vector<8x8xf32>, vector<8x64xf32>, vector<8x64xf32> -> vector<8x64xf32>
    %c2_104 = arith.constant 2 : index
    %c0_105 = arith.constant 0 : index
    %c0_106 = arith.constant 0 : index
    %100 = vector.load %arg6[%c2_104, %c0_105, %c0_106] : memref<9x64x64xf32, #tpu.memory_space<vmem>>, vector<1x64x64xf32>
    %101 = vector.shape_cast %100 : vector<1x64x64xf32> to vector<64x64xf32>
    %cst_107 = arith.constant dense<0.000000e+00> : vector<8x64xf32>
    %102 = tpu.matmul %99, %101, %cst_107 {dimension_numbers = #tpu.dot_dimension_numbers<[1], [0], [0], [1], [0, 0, 1, 1], [], []>} : vector<8x64xf32>, vector<64x64xf32>, vector<8x64xf32> -> vector<8x64xf32>
    %103 = arith.addf %96, %102 : vector<8x64xf32>
    %c3_108 = arith.constant 3 : index
    %c0_109 = arith.constant 0 : index
    %c0_110 = arith.constant 0 : index
    %104 = vector.load %arg7[%c3_108, %c0_109, %c0_110] : memref<9x8x8xf32, #tpu.memory_space<vmem>>, vector<1x8x8xf32>
    %105 = vector.shape_cast %104 : vector<1x8x8xf32> to vector<8x8xf32>
    %cst_111 = arith.constant dense<0.000000e+00> : vector<8x64xf32>
    %106 = tpu.matmul %105, %83, %cst_111 {dimension_numbers = #tpu.dot_dimension_numbers<[1], [0], [0], [1], [0, 0, 1, 1], [], []>} : vector<8x8xf32>, vector<8x64xf32>, vector<8x64xf32> -> vector<8x64xf32>
    %c3_112 = arith.constant 3 : index
    %c0_113 = arith.constant 0 : index
    %c0_114 = arith.constant 0 : index
    %107 = vector.load %arg6[%c3_112, %c0_113, %c0_114] : memref<9x64x64xf32, #tpu.memory_space<vmem>>, vector<1x64x64xf32>
    %108 = vector.shape_cast %107 : vector<1x64x64xf32> to vector<64x64xf32>
    %cst_115 = arith.constant dense<0.000000e+00> : vector<8x64xf32>
    %109 = tpu.matmul %106, %108, %cst_115 {dimension_numbers = #tpu.dot_dimension_numbers<[1], [0], [0], [1], [0, 0, 1, 1], [], []>} : vector<8x64xf32>, vector<64x64xf32>, vector<8x64xf32> -> vector<8x64xf32>
    %110 = arith.addf %103, %109 : vector<8x64xf32>
    %c4_116 = arith.constant 4 : index
    %c0_117 = arith.constant 0 : index
    %c0_118 = arith.constant 0 : index
    %111 = vector.load %arg7[%c4_116, %c0_117, %c0_118] : memref<9x8x8xf32, #tpu.memory_space<vmem>>, vector<1x8x8xf32>
    %112 = vector.shape_cast %111 : vector<1x8x8xf32> to vector<8x8xf32>
    %cst_119 = arith.constant dense<0.000000e+00> : vector<8x64xf32>
    %113 = tpu.matmul %112, %83, %cst_119 {dimension_numbers = #tpu.dot_dimension_numbers<[1], [0], [0], [1], [0, 0, 1, 1], [], []>} : vector<8x8xf32>, vector<8x64xf32>, vector<8x64xf32> -> vector<8x64xf32>
    %c4_120 = arith.constant 4 : index
    %c0_121 = arith.constant 0 : index
    %c0_122 = arith.constant 0 : index
    %114 = vector.load %arg6[%c4_120, %c0_121, %c0_122] : memref<9x64x64xf32, #tpu.memory_space<vmem>>, vector<1x64x64xf32>
    %115 = vector.shape_cast %114 : vector<1x64x64xf32> to vector<64x64xf32>
    %cst_123 = arith.constant dense<0.000000e+00> : vector<8x64xf32>
    %116 = tpu.matmul %113, %115, %cst_123 {dimension_numbers = #tpu.dot_dimension_numbers<[1], [0], [0], [1], [0, 0, 1, 1], [], []>} : vector<8x64xf32>, vector<64x64xf32>, vector<8x64xf32> -> vector<8x64xf32>
    %117 = arith.addf %110, %116 : vector<8x64xf32>
    %c5_124 = arith.constant 5 : index
    %c0_125 = arith.constant 0 : index
    %c0_126 = arith.constant 0 : index
    %118 = vector.load %arg7[%c5_124, %c0_125, %c0_126] : memref<9x8x8xf32, #tpu.memory_space<vmem>>, vector<1x8x8xf32>
    %119 = vector.shape_cast %118 : vector<1x8x8xf32> to vector<8x8xf32>
    %cst_127 = arith.constant dense<0.000000e+00> : vector<8x64xf32>
    %120 = tpu.matmul %119, %83, %cst_127 {dimension_numbers = #tpu.dot_dimension_numbers<[1], [0], [0], [1], [0, 0, 1, 1], [], []>} : vector<8x8xf32>, vector<8x64xf32>, vector<8x64xf32> -> vector<8x64xf32>
    %c5_128 = arith.constant 5 : index
    %c0_129 = arith.constant 0 : index
    %c0_130 = arith.constant 0 : index
    %121 = vector.load %arg6[%c5_128, %c0_129, %c0_130] : memref<9x64x64xf32, #tpu.memory_space<vmem>>, vector<1x64x64xf32>
    %122 = vector.shape_cast %121 : vector<1x64x64xf32> to vector<64x64xf32>
    %cst_131 = arith.constant dense<0.000000e+00> : vector<8x64xf32>
    %123 = tpu.matmul %120, %122, %cst_131 {dimension_numbers = #tpu.dot_dimension_numbers<[1], [0], [0], [1], [0, 0, 1, 1], [], []>} : vector<8x64xf32>, vector<64x64xf32>, vector<8x64xf32> -> vector<8x64xf32>
    %124 = arith.addf %117, %123 : vector<8x64xf32>
    %c6_132 = arith.constant 6 : index
    %c0_133 = arith.constant 0 : index
    %c0_134 = arith.constant 0 : index
    %125 = vector.load %arg7[%c6_132, %c0_133, %c0_134] : memref<9x8x8xf32, #tpu.memory_space<vmem>>, vector<1x8x8xf32>
    %126 = vector.shape_cast %125 : vector<1x8x8xf32> to vector<8x8xf32>
    %cst_135 = arith.constant dense<0.000000e+00> : vector<8x64xf32>
    %127 = tpu.matmul %126, %83, %cst_135 {dimension_numbers = #tpu.dot_dimension_numbers<[1], [0], [0], [1], [0, 0, 1, 1], [], []>} : vector<8x8xf32>, vector<8x64xf32>, vector<8x64xf32> -> vector<8x64xf32>
    %c6_136 = arith.constant 6 : index
    %c0_137 = arith.constant 0 : index
    %c0_138 = arith.constant 0 : index
    %128 = vector.load %arg6[%c6_136, %c0_137, %c0_138] : memref<9x64x64xf32, #tpu.memory_space<vmem>>, vector<1x64x64xf32>
    %129 = vector.shape_cast %128 : vector<1x64x64xf32> to vector<64x64xf32>
    %cst_139 = arith.constant dense<0.000000e+00> : vector<8x64xf32>
    %130 = tpu.matmul %127, %129, %cst_139 {dimension_numbers = #tpu.dot_dimension_numbers<[1], [0], [0], [1], [0, 0, 1, 1], [], []>} : vector<8x64xf32>, vector<64x64xf32>, vector<8x64xf32> -> vector<8x64xf32>
    %131 = arith.addf %124, %130 : vector<8x64xf32>
    %c7_140 = arith.constant 7 : index
    %c0_141 = arith.constant 0 : index
    %c0_142 = arith.constant 0 : index
    %132 = vector.load %arg7[%c7_140, %c0_141, %c0_142] : memref<9x8x8xf32, #tpu.memory_space<vmem>>, vector<1x8x8xf32>
    %133 = vector.shape_cast %132 : vector<1x8x8xf32> to vector<8x8xf32>
    %cst_143 = arith.constant dense<0.000000e+00> : vector<8x64xf32>
    %134 = tpu.matmul %133, %83, %cst_143 {dimension_numbers = #tpu.dot_dimension_numbers<[1], [0], [0], [1], [0, 0, 1, 1], [], []>} : vector<8x8xf32>, vector<8x64xf32>, vector<8x64xf32> -> vector<8x64xf32>
    %c7_144 = arith.constant 7 : index
    %c0_145 = arith.constant 0 : index
    %c0_146 = arith.constant 0 : index
    %135 = vector.load %arg6[%c7_144, %c0_145, %c0_146] : memref<9x64x64xf32, #tpu.memory_space<vmem>>, vector<1x64x64xf32>
    %136 = vector.shape_cast %135 : vector<1x64x64xf32> to vector<64x64xf32>
    %cst_147 = arith.constant dense<0.000000e+00> : vector<8x64xf32>
    %137 = tpu.matmul %134, %136, %cst_147 {dimension_numbers = #tpu.dot_dimension_numbers<[1], [0], [0], [1], [0, 0, 1, 1], [], []>} : vector<8x64xf32>, vector<64x64xf32>, vector<8x64xf32> -> vector<8x64xf32>
    %138 = arith.addf %131, %137 : vector<8x64xf32>
    %c8_148 = arith.constant 8 : index
    %c0_149 = arith.constant 0 : index
    %c0_150 = arith.constant 0 : index
    %139 = vector.load %arg7[%c8_148, %c0_149, %c0_150] : memref<9x8x8xf32, #tpu.memory_space<vmem>>, vector<1x8x8xf32>
    %140 = vector.shape_cast %139 : vector<1x8x8xf32> to vector<8x8xf32>
    %cst_151 = arith.constant dense<0.000000e+00> : vector<8x64xf32>
    %141 = tpu.matmul %140, %83, %cst_151 {dimension_numbers = #tpu.dot_dimension_numbers<[1], [0], [0], [1], [0, 0, 1, 1], [], []>} : vector<8x8xf32>, vector<8x64xf32>, vector<8x64xf32> -> vector<8x64xf32>
    %c8_152 = arith.constant 8 : index
    %c0_153 = arith.constant 0 : index
    %c0_154 = arith.constant 0 : index
    %142 = vector.load %arg6[%c8_152, %c0_153, %c0_154] : memref<9x64x64xf32, #tpu.memory_space<vmem>>, vector<1x64x64xf32>
    %143 = vector.shape_cast %142 : vector<1x64x64xf32> to vector<64x64xf32>
    %cst_155 = arith.constant dense<0.000000e+00> : vector<8x64xf32>
    %144 = tpu.matmul %141, %143, %cst_155 {dimension_numbers = #tpu.dot_dimension_numbers<[1], [0], [0], [1], [0, 0, 1, 1], [], []>} : vector<8x64xf32>, vector<64x64xf32>, vector<8x64xf32> -> vector<8x64xf32>
    %145 = arith.addf %138, %144 : vector<8x64xf32>
    %c0_156 = arith.constant 0 : index
    %c0_157 = arith.constant 0 : index
    %146 = vector.load %arg8[%c0_156, %c0_157] : memref<8x1xf32, #tpu.memory_space<vmem>>, vector<8x1xf32>
    %147 = vector.broadcast %146 : vector<8x1xf32> to vector<8x64xf32>
    %148 = arith.addf %145, %147 : vector<8x64xf32>
    %c0_158 = arith.constant 0 : index
    %c0_159 = arith.constant 0 : index
    %c0_160 = arith.constant 0 : index
    %149 = vector.load %arg9[%c0_158, %c0_159, %c0_160] : memref<4x64x16xf32, #tpu.memory_space<vmem>>, vector<1x64x16xf32>
    %150 = vector.shape_cast %149 : vector<1x64x16xf32> to vector<64x16xf32>
    %cst_161 = arith.constant dense<0.000000e+00> : vector<8x16xf32>
    %151 = tpu.matmul %148, %150, %cst_161 {dimension_numbers = #tpu.dot_dimension_numbers<[1], [0], [0], [1], [0, 0, 1, 1], [], []>} : vector<8x64xf32>, vector<64x16xf32>, vector<8x16xf32> -> vector<8x16xf32>
    %c1_162 = arith.constant 1 : index
    %c0_163 = arith.constant 0 : index
    %c0_164 = arith.constant 0 : index
    %152 = vector.load %arg9[%c1_162, %c0_163, %c0_164] : memref<4x64x16xf32, #tpu.memory_space<vmem>>, vector<1x64x16xf32>
    %153 = vector.shape_cast %152 : vector<1x64x16xf32> to vector<64x16xf32>
    %cst_165 = arith.constant dense<0.000000e+00> : vector<8x16xf32>
    %154 = tpu.matmul %148, %153, %cst_165 {dimension_numbers = #tpu.dot_dimension_numbers<[1], [0], [0], [1], [0, 0, 1, 1], [], []>} : vector<8x64xf32>, vector<64x16xf32>, vector<8x16xf32> -> vector<8x16xf32>
    %155 = arith.maximumf %151, %154 : vector<8x16xf32>
    %c2_166 = arith.constant 2 : index
    %c0_167 = arith.constant 0 : index
    %c0_168 = arith.constant 0 : index
    %156 = vector.load %arg9[%c2_166, %c0_167, %c0_168] : memref<4x64x16xf32, #tpu.memory_space<vmem>>, vector<1x64x16xf32>
    %157 = vector.shape_cast %156 : vector<1x64x16xf32> to vector<64x16xf32>
    %cst_169 = arith.constant dense<0.000000e+00> : vector<8x16xf32>
    %158 = tpu.matmul %148, %157, %cst_169 {dimension_numbers = #tpu.dot_dimension_numbers<[1], [0], [0], [1], [0, 0, 1, 1], [], []>} : vector<8x64xf32>, vector<64x16xf32>, vector<8x16xf32> -> vector<8x16xf32>
    %159 = arith.maximumf %155, %158 : vector<8x16xf32>
    %c3_170 = arith.constant 3 : index
    %c0_171 = arith.constant 0 : index
    %c0_172 = arith.constant 0 : index
    %160 = vector.load %arg9[%c3_170, %c0_171, %c0_172] : memref<4x64x16xf32, #tpu.memory_space<vmem>>, vector<1x64x16xf32>
    %161 = vector.shape_cast %160 : vector<1x64x16xf32> to vector<64x16xf32>
    %cst_173 = arith.constant dense<0.000000e+00> : vector<8x16xf32>
    %162 = tpu.matmul %148, %161, %cst_173 {dimension_numbers = #tpu.dot_dimension_numbers<[1], [0], [0], [1], [0, 0, 1, 1], [], []>} : vector<8x64xf32>, vector<64x16xf32>, vector<8x16xf32> -> vector<8x16xf32>
    %163 = arith.maximumf %159, %162 : vector<8x16xf32>
    %cst_174 = arith.constant 0.000000e+00 : f32
    %164 = vector.broadcast %cst_174 : f32 to vector<8x16xf32>
    %165 = arith.maximumf %163, %164 : vector<8x16xf32>
    %c0_175 = arith.constant 0 : index
    %c0_176 = arith.constant 0 : index
    %c0_177 = arith.constant 0 : index
    %166 = vector.load %arg11[%c0_175, %c0_176, %c0_177] : memref<9x8x8xf32, #tpu.memory_space<vmem>>, vector<1x8x8xf32>
    %167 = vector.shape_cast %166 : vector<1x8x8xf32> to vector<8x8xf32>
    %cst_178 = arith.constant dense<0.000000e+00> : vector<8x16xf32>
    %168 = tpu.matmul %167, %165, %cst_178 {dimension_numbers = #tpu.dot_dimension_numbers<[1], [0], [0], [1], [0, 0, 1, 1], [], []>} : vector<8x8xf32>, vector<8x16xf32>, vector<8x16xf32> -> vector<8x16xf32>
    %c0_179 = arith.constant 0 : index
    %c0_180 = arith.constant 0 : index
    %c0_181 = arith.constant 0 : index
    %169 = vector.load %arg10[%c0_179, %c0_180, %c0_181] : memref<9x16x16xf32, #tpu.memory_space<vmem>>, vector<1x16x16xf32>
    %170 = vector.shape_cast %169 : vector<1x16x16xf32> to vector<16x16xf32>
    %cst_182 = arith.constant dense<0.000000e+00> : vector<8x16xf32>
    %171 = tpu.matmul %168, %170, %cst_182 {dimension_numbers = #tpu.dot_dimension_numbers<[1], [0], [0], [1], [0, 0, 1, 1], [], []>} : vector<8x16xf32>, vector<16x16xf32>, vector<8x16xf32> -> vector<8x16xf32>
    %c1_183 = arith.constant 1 : index
    %c0_184 = arith.constant 0 : index
    %c0_185 = arith.constant 0 : index
    %172 = vector.load %arg11[%c1_183, %c0_184, %c0_185] : memref<9x8x8xf32, #tpu.memory_space<vmem>>, vector<1x8x8xf32>
    %173 = vector.shape_cast %172 : vector<1x8x8xf32> to vector<8x8xf32>
    %cst_186 = arith.constant dense<0.000000e+00> : vector<8x16xf32>
    %174 = tpu.matmul %173, %165, %cst_186 {dimension_numbers = #tpu.dot_dimension_numbers<[1], [0], [0], [1], [0, 0, 1, 1], [], []>} : vector<8x8xf32>, vector<8x16xf32>, vector<8x16xf32> -> vector<8x16xf32>
    %c1_187 = arith.constant 1 : index
    %c0_188 = arith.constant 0 : index
    %c0_189 = arith.constant 0 : index
    %175 = vector.load %arg10[%c1_187, %c0_188, %c0_189] : memref<9x16x16xf32, #tpu.memory_space<vmem>>, vector<1x16x16xf32>
    %176 = vector.shape_cast %175 : vector<1x16x16xf32> to vector<16x16xf32>
    %cst_190 = arith.constant dense<0.000000e+00> : vector<8x16xf32>
    %177 = tpu.matmul %174, %176, %cst_190 {dimension_numbers = #tpu.dot_dimension_numbers<[1], [0], [0], [1], [0, 0, 1, 1], [], []>} : vector<8x16xf32>, vector<16x16xf32>, vector<8x16xf32> -> vector<8x16xf32>
    %178 = arith.addf %171, %177 : vector<8x16xf32>
    %c2_191 = arith.constant 2 : index
    %c0_192 = arith.constant 0 : index
    %c0_193 = arith.constant 0 : index
    %179 = vector.load %arg11[%c2_191, %c0_192, %c0_193] : memref<9x8x8xf32, #tpu.memory_space<vmem>>, vector<1x8x8xf32>
    %180 = vector.shape_cast %179 : vector<1x8x8xf32> to vector<8x8xf32>
    %cst_194 = arith.constant dense<0.000000e+00> : vector<8x16xf32>
    %181 = tpu.matmul %180, %165, %cst_194 {dimension_numbers = #tpu.dot_dimension_numbers<[1], [0], [0], [1], [0, 0, 1, 1], [], []>} : vector<8x8xf32>, vector<8x16xf32>, vector<8x16xf32> -> vector<8x16xf32>
    %c2_195 = arith.constant 2 : index
    %c0_196 = arith.constant 0 : index
    %c0_197 = arith.constant 0 : index
    %182 = vector.load %arg10[%c2_195, %c0_196, %c0_197] : memref<9x16x16xf32, #tpu.memory_space<vmem>>, vector<1x16x16xf32>
    %183 = vector.shape_cast %182 : vector<1x16x16xf32> to vector<16x16xf32>
    %cst_198 = arith.constant dense<0.000000e+00> : vector<8x16xf32>
    %184 = tpu.matmul %181, %183, %cst_198 {dimension_numbers = #tpu.dot_dimension_numbers<[1], [0], [0], [1], [0, 0, 1, 1], [], []>} : vector<8x16xf32>, vector<16x16xf32>, vector<8x16xf32> -> vector<8x16xf32>
    %185 = arith.addf %178, %184 : vector<8x16xf32>
    %c3_199 = arith.constant 3 : index
    %c0_200 = arith.constant 0 : index
    %c0_201 = arith.constant 0 : index
    %186 = vector.load %arg11[%c3_199, %c0_200, %c0_201] : memref<9x8x8xf32, #tpu.memory_space<vmem>>, vector<1x8x8xf32>
    %187 = vector.shape_cast %186 : vector<1x8x8xf32> to vector<8x8xf32>
    %cst_202 = arith.constant dense<0.000000e+00> : vector<8x16xf32>
    %188 = tpu.matmul %187, %165, %cst_202 {dimension_numbers = #tpu.dot_dimension_numbers<[1], [0], [0], [1], [0, 0, 1, 1], [], []>} : vector<8x8xf32>, vector<8x16xf32>, vector<8x16xf32> -> vector<8x16xf32>
    %c3_203 = arith.constant 3 : index
    %c0_204 = arith.constant 0 : index
    %c0_205 = arith.constant 0 : index
    %189 = vector.load %arg10[%c3_203, %c0_204, %c0_205] : memref<9x16x16xf32, #tpu.memory_space<vmem>>, vector<1x16x16xf32>
    %190 = vector.shape_cast %189 : vector<1x16x16xf32> to vector<16x16xf32>
    %cst_206 = arith.constant dense<0.000000e+00> : vector<8x16xf32>
    %191 = tpu.matmul %188, %190, %cst_206 {dimension_numbers = #tpu.dot_dimension_numbers<[1], [0], [0], [1], [0, 0, 1, 1], [], []>} : vector<8x16xf32>, vector<16x16xf32>, vector<8x16xf32> -> vector<8x16xf32>
    %192 = arith.addf %185, %191 : vector<8x16xf32>
    %c4_207 = arith.constant 4 : index
    %c0_208 = arith.constant 0 : index
    %c0_209 = arith.constant 0 : index
    %193 = vector.load %arg11[%c4_207, %c0_208, %c0_209] : memref<9x8x8xf32, #tpu.memory_space<vmem>>, vector<1x8x8xf32>
    %194 = vector.shape_cast %193 : vector<1x8x8xf32> to vector<8x8xf32>
    %cst_210 = arith.constant dense<0.000000e+00> : vector<8x16xf32>
    %195 = tpu.matmul %194, %165, %cst_210 {dimension_numbers = #tpu.dot_dimension_numbers<[1], [0], [0], [1], [0, 0, 1, 1], [], []>} : vector<8x8xf32>, vector<8x16xf32>, vector<8x16xf32> -> vector<8x16xf32>
    %c4_211 = arith.constant 4 : index
    %c0_212 = arith.constant 0 : index
    %c0_213 = arith.constant 0 : index
    %196 = vector.load %arg10[%c4_211, %c0_212, %c0_213] : memref<9x16x16xf32, #tpu.memory_space<vmem>>, vector<1x16x16xf32>
    %197 = vector.shape_cast %196 : vector<1x16x16xf32> to vector<16x16xf32>
    %cst_214 = arith.constant dense<0.000000e+00> : vector<8x16xf32>
    %198 = tpu.matmul %195, %197, %cst_214 {dimension_numbers = #tpu.dot_dimension_numbers<[1], [0], [0], [1], [0, 0, 1, 1], [], []>} : vector<8x16xf32>, vector<16x16xf32>, vector<8x16xf32> -> vector<8x16xf32>
    %199 = arith.addf %192, %198 : vector<8x16xf32>
    %c5_215 = arith.constant 5 : index
    %c0_216 = arith.constant 0 : index
    %c0_217 = arith.constant 0 : index
    %200 = vector.load %arg11[%c5_215, %c0_216, %c0_217] : memref<9x8x8xf32, #tpu.memory_space<vmem>>, vector<1x8x8xf32>
    %201 = vector.shape_cast %200 : vector<1x8x8xf32> to vector<8x8xf32>
    %cst_218 = arith.constant dense<0.000000e+00> : vector<8x16xf32>
    %202 = tpu.matmul %201, %165, %cst_218 {dimension_numbers = #tpu.dot_dimension_numbers<[1], [0], [0], [1], [0, 0, 1, 1], [], []>} : vector<8x8xf32>, vector<8x16xf32>, vector<8x16xf32> -> vector<8x16xf32>
    %c5_219 = arith.constant 5 : index
    %c0_220 = arith.constant 0 : index
    %c0_221 = arith.constant 0 : index
    %203 = vector.load %arg10[%c5_219, %c0_220, %c0_221] : memref<9x16x16xf32, #tpu.memory_space<vmem>>, vector<1x16x16xf32>
    %204 = vector.shape_cast %203 : vector<1x16x16xf32> to vector<16x16xf32>
    %cst_222 = arith.constant dense<0.000000e+00> : vector<8x16xf32>
    %205 = tpu.matmul %202, %204, %cst_222 {dimension_numbers = #tpu.dot_dimension_numbers<[1], [0], [0], [1], [0, 0, 1, 1], [], []>} : vector<8x16xf32>, vector<16x16xf32>, vector<8x16xf32> -> vector<8x16xf32>
    %206 = arith.addf %199, %205 : vector<8x16xf32>
    %c6_223 = arith.constant 6 : index
    %c0_224 = arith.constant 0 : index
    %c0_225 = arith.constant 0 : index
    %207 = vector.load %arg11[%c6_223, %c0_224, %c0_225] : memref<9x8x8xf32, #tpu.memory_space<vmem>>, vector<1x8x8xf32>
    %208 = vector.shape_cast %207 : vector<1x8x8xf32> to vector<8x8xf32>
    %cst_226 = arith.constant dense<0.000000e+00> : vector<8x16xf32>
    %209 = tpu.matmul %208, %165, %cst_226 {dimension_numbers = #tpu.dot_dimension_numbers<[1], [0], [0], [1], [0, 0, 1, 1], [], []>} : vector<8x8xf32>, vector<8x16xf32>, vector<8x16xf32> -> vector<8x16xf32>
    %c6_227 = arith.constant 6 : index
    %c0_228 = arith.constant 0 : index
    %c0_229 = arith.constant 0 : index
    %210 = vector.load %arg10[%c6_227, %c0_228, %c0_229] : memref<9x16x16xf32, #tpu.memory_space<vmem>>, vector<1x16x16xf32>
    %211 = vector.shape_cast %210 : vector<1x16x16xf32> to vector<16x16xf32>
    %cst_230 = arith.constant dense<0.000000e+00> : vector<8x16xf32>
    %212 = tpu.matmul %209, %211, %cst_230 {dimension_numbers = #tpu.dot_dimension_numbers<[1], [0], [0], [1], [0, 0, 1, 1], [], []>} : vector<8x16xf32>, vector<16x16xf32>, vector<8x16xf32> -> vector<8x16xf32>
    %213 = arith.addf %206, %212 : vector<8x16xf32>
    %c7_231 = arith.constant 7 : index
    %c0_232 = arith.constant 0 : index
    %c0_233 = arith.constant 0 : index
    %214 = vector.load %arg11[%c7_231, %c0_232, %c0_233] : memref<9x8x8xf32, #tpu.memory_space<vmem>>, vector<1x8x8xf32>
    %215 = vector.shape_cast %214 : vector<1x8x8xf32> to vector<8x8xf32>
    %cst_234 = arith.constant dense<0.000000e+00> : vector<8x16xf32>
    %216 = tpu.matmul %215, %165, %cst_234 {dimension_numbers = #tpu.dot_dimension_numbers<[1], [0], [0], [1], [0, 0, 1, 1], [], []>} : vector<8x8xf32>, vector<8x16xf32>, vector<8x16xf32> -> vector<8x16xf32>
    %c7_235 = arith.constant 7 : index
    %c0_236 = arith.constant 0 : index
    %c0_237 = arith.constant 0 : index
    %217 = vector.load %arg10[%c7_235, %c0_236, %c0_237] : memref<9x16x16xf32, #tpu.memory_space<vmem>>, vector<1x16x16xf32>
    %218 = vector.shape_cast %217 : vector<1x16x16xf32> to vector<16x16xf32>
    %cst_238 = arith.constant dense<0.000000e+00> : vector<8x16xf32>
    %219 = tpu.matmul %216, %218, %cst_238 {dimension_numbers = #tpu.dot_dimension_numbers<[1], [0], [0], [1], [0, 0, 1, 1], [], []>} : vector<8x16xf32>, vector<16x16xf32>, vector<8x16xf32> -> vector<8x16xf32>
    %220 = arith.addf %213, %219 : vector<8x16xf32>
    %c8_239 = arith.constant 8 : index
    %c0_240 = arith.constant 0 : index
    %c0_241 = arith.constant 0 : index
    %221 = vector.load %arg11[%c8_239, %c0_240, %c0_241] : memref<9x8x8xf32, #tpu.memory_space<vmem>>, vector<1x8x8xf32>
    %222 = vector.shape_cast %221 : vector<1x8x8xf32> to vector<8x8xf32>
    %cst_242 = arith.constant dense<0.000000e+00> : vector<8x16xf32>
    %223 = tpu.matmul %222, %165, %cst_242 {dimension_numbers = #tpu.dot_dimension_numbers<[1], [0], [0], [1], [0, 0, 1, 1], [], []>} : vector<8x8xf32>, vector<8x16xf32>, vector<8x16xf32> -> vector<8x16xf32>
    %c8_243 = arith.constant 8 : index
    %c0_244 = arith.constant 0 : index
    %c0_245 = arith.constant 0 : index
    %224 = vector.load %arg10[%c8_243, %c0_244, %c0_245] : memref<9x16x16xf32, #tpu.memory_space<vmem>>, vector<1x16x16xf32>
    %225 = vector.shape_cast %224 : vector<1x16x16xf32> to vector<16x16xf32>
    %cst_246 = arith.constant dense<0.000000e+00> : vector<8x16xf32>
    %226 = tpu.matmul %223, %225, %cst_246 {dimension_numbers = #tpu.dot_dimension_numbers<[1], [0], [0], [1], [0, 0, 1, 1], [], []>} : vector<8x16xf32>, vector<16x16xf32>, vector<8x16xf32> -> vector<8x16xf32>
    %227 = arith.addf %220, %226 : vector<8x16xf32>
    %c0_247 = arith.constant 0 : index
    %c0_248 = arith.constant 0 : index
    %228 = vector.load %arg12[%c0_247, %c0_248] : memref<8x1xf32, #tpu.memory_space<vmem>>, vector<8x1xf32>
    %229 = vector.broadcast %228 : vector<8x1xf32> to vector<8x16xf32>
    %230 = arith.addf %227, %229 : vector<8x16xf32>
    %c0_249 = arith.constant 0 : index
    %c0_250 = arith.constant 0 : index
    %c0_251 = arith.constant 0 : index
    %231 = vector.load %arg13[%c0_249, %c0_250, %c0_251] : memref<4x16x4xf32, #tpu.memory_space<vmem>>, vector<1x16x4xf32>
    %232 = vector.shape_cast %231 : vector<1x16x4xf32> to vector<16x4xf32>
    %cst_252 = arith.constant dense<0.000000e+00> : vector<8x4xf32>
    %233 = tpu.matmul %230, %232, %cst_252 {dimension_numbers = #tpu.dot_dimension_numbers<[1], [0], [0], [1], [0, 0, 1, 1], [], []>} : vector<8x16xf32>, vector<16x4xf32>, vector<8x4xf32> -> vector<8x4xf32>
    %c1_253 = arith.constant 1 : index
    %c0_254 = arith.constant 0 : index
    %c0_255 = arith.constant 0 : index
    %234 = vector.load %arg13[%c1_253, %c0_254, %c0_255] : memref<4x16x4xf32, #tpu.memory_space<vmem>>, vector<1x16x4xf32>
    %235 = vector.shape_cast %234 : vector<1x16x4xf32> to vector<16x4xf32>
    %cst_256 = arith.constant dense<0.000000e+00> : vector<8x4xf32>
    %236 = tpu.matmul %230, %235, %cst_256 {dimension_numbers = #tpu.dot_dimension_numbers<[1], [0], [0], [1], [0, 0, 1, 1], [], []>} : vector<8x16xf32>, vector<16x4xf32>, vector<8x4xf32> -> vector<8x4xf32>
    %237 = arith.maximumf %233, %236 : vector<8x4xf32>
    %c2_257 = arith.constant 2 : index
    %c0_258 = arith.constant 0 : index
    %c0_259 = arith.constant 0 : index
    %238 = vector.load %arg13[%c2_257, %c0_258, %c0_259] : memref<4x16x4xf32, #tpu.memory_space<vmem>>, vector<1x16x4xf32>
    %239 = vector.shape_cast %238 : vector<1x16x4xf32> to vector<16x4xf32>
    %cst_260 = arith.constant dense<0.000000e+00> : vector<8x4xf32>
    %240 = tpu.matmul %230, %239, %cst_260 {dimension_numbers = #tpu.dot_dimension_numbers<[1], [0], [0], [1], [0, 0, 1, 1], [], []>} : vector<8x16xf32>, vector<16x4xf32>, vector<8x4xf32> -> vector<8x4xf32>
    %241 = arith.maximumf %237, %240 : vector<8x4xf32>
    %c3_261 = arith.constant 3 : index
    %c0_262 = arith.constant 0 : index
    %c0_263 = arith.constant 0 : index
    %242 = vector.load %arg13[%c3_261, %c0_262, %c0_263] : memref<4x16x4xf32, #tpu.memory_space<vmem>>, vector<1x16x4xf32>
    %243 = vector.shape_cast %242 : vector<1x16x4xf32> to vector<16x4xf32>
    %cst_264 = arith.constant dense<0.000000e+00> : vector<8x4xf32>
    %244 = tpu.matmul %230, %243, %cst_264 {dimension_numbers = #tpu.dot_dimension_numbers<[1], [0], [0], [1], [0, 0, 1, 1], [], []>} : vector<8x16xf32>, vector<16x4xf32>, vector<8x4xf32> -> vector<8x4xf32>
    %245 = arith.maximumf %241, %244 : vector<8x4xf32>
    %cst_265 = arith.constant 0.000000e+00 : f32
    %246 = vector.broadcast %cst_265 : f32 to vector<8x4xf32>
    %247 = arith.maximumf %245, %246 : vector<8x4xf32>
    %c0_266 = arith.constant 0 : index
    %c0_267 = arith.constant 0 : index
    %c0_268 = arith.constant 0 : index
    %248 = vector.load %arg15[%c0_266, %c0_267, %c0_268] : memref<9x3x8xf32, #tpu.memory_space<vmem>>, vector<1x3x8xf32>
    %249 = vector.shape_cast %248 : vector<1x3x8xf32> to vector<3x8xf32>
    %cst_269 = arith.constant dense<0.000000e+00> : vector<3x4xf32>
    %250 = tpu.matmul %249, %247, %cst_269 {dimension_numbers = #tpu.dot_dimension_numbers<[1], [0], [0], [1], [0, 0, 1, 1], [], []>} : vector<3x8xf32>, vector<8x4xf32>, vector<3x4xf32> -> vector<3x4xf32>
    %c0_270 = arith.constant 0 : index
    %c0_271 = arith.constant 0 : index
    %c0_272 = arith.constant 0 : index
    %251 = vector.load %arg14[%c0_270, %c0_271, %c0_272] : memref<9x4x4xf32, #tpu.memory_space<vmem>>, vector<1x4x4xf32>
    %252 = vector.shape_cast %251 : vector<1x4x4xf32> to vector<4x4xf32>
    %cst_273 = arith.constant dense<0.000000e+00> : vector<3x4xf32>
    %253 = tpu.matmul %250, %252, %cst_273 {dimension_numbers = #tpu.dot_dimension_numbers<[1], [0], [0], [1], [0, 0, 1, 1], [], []>} : vector<3x4xf32>, vector<4x4xf32>, vector<3x4xf32> -> vector<3x4xf32>
    %c1_274 = arith.constant 1 : index
    %c0_275 = arith.constant 0 : index
    %c0_276 = arith.constant 0 : index
    %254 = vector.load %arg15[%c1_274, %c0_275, %c0_276] : memref<9x3x8xf32, #tpu.memory_space<vmem>>, vector<1x3x8xf32>
    %255 = vector.shape_cast %254 : vector<1x3x8xf32> to vector<3x8xf32>
    %cst_277 = arith.constant dense<0.000000e+00> : vector<3x4xf32>
    %256 = tpu.matmul %255, %247, %cst_277 {dimension_numbers = #tpu.dot_dimension_numbers<[1], [0], [0], [1], [0, 0, 1, 1], [], []>} : vector<3x8xf32>, vector<8x4xf32>, vector<3x4xf32> -> vector<3x4xf32>
    %c1_278 = arith.constant 1 : index
    %c0_279 = arith.constant 0 : index
    %c0_280 = arith.constant 0 : index
    %257 = vector.load %arg14[%c1_278, %c0_279, %c0_280] : memref<9x4x4xf32, #tpu.memory_space<vmem>>, vector<1x4x4xf32>
    %258 = vector.shape_cast %257 : vector<1x4x4xf32> to vector<4x4xf32>
    %cst_281 = arith.constant dense<0.000000e+00> : vector<3x4xf32>
    %259 = tpu.matmul %256, %258, %cst_281 {dimension_numbers = #tpu.dot_dimension_numbers<[1], [0], [0], [1], [0, 0, 1, 1], [], []>} : vector<3x4xf32>, vector<4x4xf32>, vector<3x4xf32> -> vector<3x4xf32>
    %260 = arith.addf %253, %259 : vector<3x4xf32>
    %c2_282 = arith.constant 2 : index
    %c0_283 = arith.constant 0 : index
    %c0_284 = arith.constant 0 : index
    %261 = vector.load %arg15[%c2_282, %c0_283, %c0_284] : memref<9x3x8xf32, #tpu.memory_space<vmem>>, vector<1x3x8xf32>
    %262 = vector.shape_cast %261 : vector<1x3x8xf32> to vector<3x8xf32>
    %cst_285 = arith.constant dense<0.000000e+00> : vector<3x4xf32>
    %263 = tpu.matmul %262, %247, %cst_285 {dimension_numbers = #tpu.dot_dimension_numbers<[1], [0], [0], [1], [0, 0, 1, 1], [], []>} : vector<3x8xf32>, vector<8x4xf32>, vector<3x4xf32> -> vector<3x4xf32>
    %c2_286 = arith.constant 2 : index
    %c0_287 = arith.constant 0 : index
    %c0_288 = arith.constant 0 : index
    %264 = vector.load %arg14[%c2_286, %c0_287, %c0_288] : memref<9x4x4xf32, #tpu.memory_space<vmem>>, vector<1x4x4xf32>
    %265 = vector.shape_cast %264 : vector<1x4x4xf32> to vector<4x4xf32>
    %cst_289 = arith.constant dense<0.000000e+00> : vector<3x4xf32>
    %266 = tpu.matmul %263, %265, %cst_289 {dimension_numbers = #tpu.dot_dimension_numbers<[1], [0], [0], [1], [0, 0, 1, 1], [], []>} : vector<3x4xf32>, vector<4x4xf32>, vector<3x4xf32> -> vector<3x4xf32>
    %267 = arith.addf %260, %266 : vector<3x4xf32>
    %c3_290 = arith.constant 3 : index
    %c0_291 = arith.constant 0 : index
    %c0_292 = arith.constant 0 : index
    %268 = vector.load %arg15[%c3_290, %c0_291, %c0_292] : memref<9x3x8xf32, #tpu.memory_space<vmem>>, vector<1x3x8xf32>
    %269 = vector.shape_cast %268 : vector<1x3x8xf32> to vector<3x8xf32>
    %cst_293 = arith.constant dense<0.000000e+00> : vector<3x4xf32>
    %270 = tpu.matmul %269, %247, %cst_293 {dimension_numbers = #tpu.dot_dimension_numbers<[1], [0], [0], [1], [0, 0, 1, 1], [], []>} : vector<3x8xf32>, vector<8x4xf32>, vector<3x4xf32> -> vector<3x4xf32>
    %c3_294 = arith.constant 3 : index
    %c0_295 = arith.constant 0 : index
    %c0_296 = arith.constant 0 : index
    %271 = vector.load %arg14[%c3_294, %c0_295, %c0_296] : memref<9x4x4xf32, #tpu.memory_space<vmem>>, vector<1x4x4xf32>
    %272 = vector.shape_cast %271 : vector<1x4x4xf32> to vector<4x4xf32>
    %cst_297 = arith.constant dense<0.000000e+00> : vector<3x4xf32>
    %273 = tpu.matmul %270, %272, %cst_297 {dimension_numbers = #tpu.dot_dimension_numbers<[1], [0], [0], [1], [0, 0, 1, 1], [], []>} : vector<3x4xf32>, vector<4x4xf32>, vector<3x4xf32> -> vector<3x4xf32>
    %274 = arith.addf %267, %273 : vector<3x4xf32>
    %c4_298 = arith.constant 4 : index
    %c0_299 = arith.constant 0 : index
    %c0_300 = arith.constant 0 : index
    %275 = vector.load %arg15[%c4_298, %c0_299, %c0_300] : memref<9x3x8xf32, #tpu.memory_space<vmem>>, vector<1x3x8xf32>
    %276 = vector.shape_cast %275 : vector<1x3x8xf32> to vector<3x8xf32>
    %cst_301 = arith.constant dense<0.000000e+00> : vector<3x4xf32>
    %277 = tpu.matmul %276, %247, %cst_301 {dimension_numbers = #tpu.dot_dimension_numbers<[1], [0], [0], [1], [0, 0, 1, 1], [], []>} : vector<3x8xf32>, vector<8x4xf32>, vector<3x4xf32> -> vector<3x4xf32>
    %c4_302 = arith.constant 4 : index
    %c0_303 = arith.constant 0 : index
    %c0_304 = arith.constant 0 : index
    %278 = vector.load %arg14[%c4_302, %c0_303, %c0_304] : memref<9x4x4xf32, #tpu.memory_space<vmem>>, vector<1x4x4xf32>
    %279 = vector.shape_cast %278 : vector<1x4x4xf32> to vector<4x4xf32>
    %cst_305 = arith.constant dense<0.000000e+00> : vector<3x4xf32>
    %280 = tpu.matmul %277, %279, %cst_305 {dimension_numbers = #tpu.dot_dimension_numbers<[1], [0], [0], [1], [0, 0, 1, 1], [], []>} : vector<3x4xf32>, vector<4x4xf32>, vector<3x4xf32> -> vector<3x4xf32>
    %281 = arith.addf %274, %280 : vector<3x4xf32>
    %c5_306 = arith.constant 5 : index
    %c0_307 = arith.constant 0 : index
    %c0_308 = arith.constant 0 : index
    %282 = vector.load %arg15[%c5_306, %c0_307, %c0_308] : memref<9x3x8xf32, #tpu.memory_space<vmem>>, vector<1x3x8xf32>
    %283 = vector.shape_cast %282 : vector<1x3x8xf32> to vector<3x8xf32>
    %cst_309 = arith.constant dense<0.000000e+00> : vector<3x4xf32>
    %284 = tpu.matmul %283, %247, %cst_309 {dimension_numbers = #tpu.dot_dimension_numbers<[1], [0], [0], [1], [0, 0, 1, 1], [], []>} : vector<3x8xf32>, vector<8x4xf32>, vector<3x4xf32> -> vector<3x4xf32>
    %c5_310 = arith.constant 5 : index
    %c0_311 = arith.constant 0 : index
    %c0_312 = arith.constant 0 : index
    %285 = vector.load %arg14[%c5_310, %c0_311, %c0_312] : memref<9x4x4xf32, #tpu.memory_space<vmem>>, vector<1x4x4xf32>
    %286 = vector.shape_cast %285 : vector<1x4x4xf32> to vector<4x4xf32>
    %cst_313 = arith.constant dense<0.000000e+00> : vector<3x4xf32>
    %287 = tpu.matmul %284, %286, %cst_313 {dimension_numbers = #tpu.dot_dimension_numbers<[1], [0], [0], [1], [0, 0, 1, 1], [], []>} : vector<3x4xf32>, vector<4x4xf32>, vector<3x4xf32> -> vector<3x4xf32>
    %288 = arith.addf %281, %287 : vector<3x4xf32>
    %c6_314 = arith.constant 6 : index
    %c0_315 = arith.constant 0 : index
    %c0_316 = arith.constant 0 : index
    %289 = vector.load %arg15[%c6_314, %c0_315, %c0_316] : memref<9x3x8xf32, #tpu.memory_space<vmem>>, vector<1x3x8xf32>
    %290 = vector.shape_cast %289 : vector<1x3x8xf32> to vector<3x8xf32>
    %cst_317 = arith.constant dense<0.000000e+00> : vector<3x4xf32>
    %291 = tpu.matmul %290, %247, %cst_317 {dimension_numbers = #tpu.dot_dimension_numbers<[1], [0], [0], [1], [0, 0, 1, 1], [], []>} : vector<3x8xf32>, vector<8x4xf32>, vector<3x4xf32> -> vector<3x4xf32>
    %c6_318 = arith.constant 6 : index
    %c0_319 = arith.constant 0 : index
    %c0_320 = arith.constant 0 : index
    %292 = vector.load %arg14[%c6_318, %c0_319, %c0_320] : memref<9x4x4xf32, #tpu.memory_space<vmem>>, vector<1x4x4xf32>
    %293 = vector.shape_cast %292 : vector<1x4x4xf32> to vector<4x4xf32>
    %cst_321 = arith.constant dense<0.000000e+00> : vector<3x4xf32>
    %294 = tpu.matmul %291, %293, %cst_321 {dimension_numbers = #tpu.dot_dimension_numbers<[1], [0], [0], [1], [0, 0, 1, 1], [], []>} : vector<3x4xf32>, vector<4x4xf32>, vector<3x4xf32> -> vector<3x4xf32>
    %295 = arith.addf %288, %294 : vector<3x4xf32>
    %c7_322 = arith.constant 7 : index
    %c0_323 = arith.constant 0 : index
    %c0_324 = arith.constant 0 : index
    %296 = vector.load %arg15[%c7_322, %c0_323, %c0_324] : memref<9x3x8xf32, #tpu.memory_space<vmem>>, vector<1x3x8xf32>
    %297 = vector.shape_cast %296 : vector<1x3x8xf32> to vector<3x8xf32>
    %cst_325 = arith.constant dense<0.000000e+00> : vector<3x4xf32>
    %298 = tpu.matmul %297, %247, %cst_325 {dimension_numbers = #tpu.dot_dimension_numbers<[1], [0], [0], [1], [0, 0, 1, 1], [], []>} : vector<3x8xf32>, vector<8x4xf32>, vector<3x4xf32> -> vector<3x4xf32>
    %c7_326 = arith.constant 7 : index
    %c0_327 = arith.constant 0 : index
    %c0_328 = arith.constant 0 : index
    %299 = vector.load %arg14[%c7_326, %c0_327, %c0_328] : memref<9x4x4xf32, #tpu.memory_space<vmem>>, vector<1x4x4xf32>
    %300 = vector.shape_cast %299 : vector<1x4x4xf32> to vector<4x4xf32>
    %cst_329 = arith.constant dense<0.000000e+00> : vector<3x4xf32>
    %301 = tpu.matmul %298, %300, %cst_329 {dimension_numbers = #tpu.dot_dimension_numbers<[1], [0], [0], [1], [0, 0, 1, 1], [], []>} : vector<3x4xf32>, vector<4x4xf32>, vector<3x4xf32> -> vector<3x4xf32>
    %302 = arith.addf %295, %301 : vector<3x4xf32>
    %c8_330 = arith.constant 8 : index
    %c0_331 = arith.constant 0 : index
    %c0_332 = arith.constant 0 : index
    %303 = vector.load %arg15[%c8_330, %c0_331, %c0_332] : memref<9x3x8xf32, #tpu.memory_space<vmem>>, vector<1x3x8xf32>
    %304 = vector.shape_cast %303 : vector<1x3x8xf32> to vector<3x8xf32>
    %cst_333 = arith.constant dense<0.000000e+00> : vector<3x4xf32>
    %305 = tpu.matmul %304, %247, %cst_333 {dimension_numbers = #tpu.dot_dimension_numbers<[1], [0], [0], [1], [0, 0, 1, 1], [], []>} : vector<3x8xf32>, vector<8x4xf32>, vector<3x4xf32> -> vector<3x4xf32>
    %c8_334 = arith.constant 8 : index
    %c0_335 = arith.constant 0 : index
    %c0_336 = arith.constant 0 : index
    %306 = vector.load %arg14[%c8_334, %c0_335, %c0_336] : memref<9x4x4xf32, #tpu.memory_space<vmem>>, vector<1x4x4xf32>
    %307 = vector.shape_cast %306 : vector<1x4x4xf32> to vector<4x4xf32>
    %cst_337 = arith.constant dense<0.000000e+00> : vector<3x4xf32>
    %308 = tpu.matmul %305, %307, %cst_337 {dimension_numbers = #tpu.dot_dimension_numbers<[1], [0], [0], [1], [0, 0, 1, 1], [], []>} : vector<3x4xf32>, vector<4x4xf32>, vector<3x4xf32> -> vector<3x4xf32>
    %309 = arith.addf %302, %308 : vector<3x4xf32>
    %c0_338 = arith.constant 0 : index
    %c0_339 = arith.constant 0 : index
    %310 = vector.load %arg16[%c0_338, %c0_339] : memref<3x1xf32, #tpu.memory_space<vmem>>, vector<3x1xf32>
    %311 = vector.broadcast %310 : vector<3x1xf32> to vector<3x4xf32>
    %312 = arith.addf %309, %311 : vector<3x4xf32>
    %c0_340 = arith.constant 0 : index
    %c0_341 = arith.constant 0 : index
    %c0_342 = arith.constant 0 : index
    %313 = vector.load %arg17[%c0_340, %c0_341, %c0_342] : memref<4x4x1xf32, #tpu.memory_space<vmem>>, vector<1x4x1xf32>
    %314 = vector.shape_cast %313 : vector<1x4x1xf32> to vector<4x1xf32>
    %cst_343 = arith.constant dense<0.000000e+00> : vector<3x1xf32>
    %315 = tpu.matmul %312, %314, %cst_343 {dimension_numbers = #tpu.dot_dimension_numbers<[1], [0], [0], [1], [0, 0, 1, 1], [], []>} : vector<3x4xf32>, vector<4x1xf32>, vector<3x1xf32> -> vector<3x1xf32>
    %c1_344 = arith.constant 1 : index
    %c0_345 = arith.constant 0 : index
    %c0_346 = arith.constant 0 : index
    %316 = vector.load %arg17[%c1_344, %c0_345, %c0_346] : memref<4x4x1xf32, #tpu.memory_space<vmem>>, vector<1x4x1xf32>
    %317 = vector.shape_cast %316 : vector<1x4x1xf32> to vector<4x1xf32>
    %cst_347 = arith.constant dense<0.000000e+00> : vector<3x1xf32>
    %318 = tpu.matmul %312, %317, %cst_347 {dimension_numbers = #tpu.dot_dimension_numbers<[1], [0], [0], [1], [0, 0, 1, 1], [], []>} : vector<3x4xf32>, vector<4x1xf32>, vector<3x1xf32> -> vector<3x1xf32>
    %319 = arith.maximumf %315, %318 : vector<3x1xf32>
    %c2_348 = arith.constant 2 : index
    %c0_349 = arith.constant 0 : index
    %c0_350 = arith.constant 0 : index
    %320 = vector.load %arg17[%c2_348, %c0_349, %c0_350] : memref<4x4x1xf32, #tpu.memory_space<vmem>>, vector<1x4x1xf32>
    %321 = vector.shape_cast %320 : vector<1x4x1xf32> to vector<4x1xf32>
    %cst_351 = arith.constant dense<0.000000e+00> : vector<3x1xf32>
    %322 = tpu.matmul %312, %321, %cst_351 {dimension_numbers = #tpu.dot_dimension_numbers<[1], [0], [0], [1], [0, 0, 1, 1], [], []>} : vector<3x4xf32>, vector<4x1xf32>, vector<3x1xf32> -> vector<3x1xf32>
    %323 = arith.maximumf %319, %322 : vector<3x1xf32>
    %c3_352 = arith.constant 3 : index
    %c0_353 = arith.constant 0 : index
    %c0_354 = arith.constant 0 : index
    %324 = vector.load %arg17[%c3_352, %c0_353, %c0_354] : memref<4x4x1xf32, #tpu.memory_space<vmem>>, vector<1x4x1xf32>
    %325 = vector.shape_cast %324 : vector<1x4x1xf32> to vector<4x1xf32>
    %cst_355 = arith.constant dense<0.000000e+00> : vector<3x1xf32>
    %326 = tpu.matmul %312, %325, %cst_355 {dimension_numbers = #tpu.dot_dimension_numbers<[1], [0], [0], [1], [0, 0, 1, 1], [], []>} : vector<3x4xf32>, vector<4x1xf32>, vector<3x1xf32> -> vector<3x1xf32>
    %327 = arith.maximumf %323, %326 : vector<3x1xf32>
    %c0_356 = arith.constant 0 : index
    %c0_357 = arith.constant 0 : index
    %c0_358 = arith.constant 0 : index
    %328 = vector.load %arg18[%c0_356, %c0_357, %c0_358] : memref<1x3x1xf32, #tpu.memory_space<vmem>>, vector<1x3x1xf32>
    %329 = vector.shape_cast %328 : vector<1x3x1xf32> to vector<3x1xf32>
    %330 = vector.shape_cast %327 : vector<3x1xf32> to vector<1x3x1xf32>
    tpu.vector_store %arg18[%c0_356, %c0_357, %c0_358], %330 {strides = array<i32>} : memref<1x3x1xf32, #tpu.memory_space<vmem>>, vector<1x3x1xf32>,
    return
  }
  func.func @transform_0(%arg0: i32) -> (i32, i32, i32) {
    %c0_i32 = arith.constant 0 : i32
    %c0_i32_0 = arith.constant 0 : i32
    %c0_i32_1 = arith.constant 0 : i32
    return %arg0, %c0_i32, %c0_i32_0 : i32, i32, i32
  }
  func.func @transform_1(%arg0: i32) -> (i32, i32, i32) {
    %c0_i32 = arith.constant 0 : i32
    %c0_i32_0 = arith.constant 0 : i32
    %c0_i32_1 = arith.constant 0 : i32
    %c0_i32_2 = arith.constant 0 : i32
    return %c0_i32, %c0_i32_0, %c0_i32_1 : i32, i32, i32
  }
  func.func @transform_2(%arg0: i32) -> (i32, i32, i32) {
    %c0_i32 = arith.constant 0 : i32
    %c0_i32_0 = arith.constant 0 : i32
    %c0_i32_1 = arith.constant 0 : i32
    %c0_i32_2 = arith.constant 0 : i32
    return %c0_i32, %c0_i32_0, %c0_i32_1 : i32, i32, i32
  }
  func.func @transform_3(%arg0: i32) -> (i32, i32) {
    %c0_i32 = arith.constant 0 : i32
    %c0_i32_0 = arith.constant 0 : i32
    %c0_i32_1 = arith.constant 0 : i32
    return %c0_i32, %c0_i32_0 : i32, i32
  }
  func.func @transform_4(%arg0: i32) -> (i32, i32, i32) {
    %c0_i32 = arith.constant 0 : i32
    %c0_i32_0 = arith.constant 0 : i32
    %c0_i32_1 = arith.constant 0 : i32
    %c0_i32_2 = arith.constant 0 : i32
    return %c0_i32, %c0_i32_0, %c0_i32_1 : i32, i32, i32
  }
  func.func @transform_5(%arg0: i32) -> (i32, i32, i32) {
    %c0_i32 = arith.constant 0 : i32
    %c0_i32_0 = arith.constant 0 : i32
    %c0_i32_1 = arith.constant 0 : i32
    %c0_i32_2 = arith.constant 0 : i32
    return %c0_i32, %c0_i32_0, %c0_i32_1 : i32, i32, i32
  }
  func.func @transform_6(%arg0: i32) -> (i32, i32, i32) {
    %c0_i32 = arith.constant 0 : i32
    %c0_i32_0 = arith.constant 0 : i32
    %c0_i32_1 = arith.constant 0 : i32
    %c0_i32_2 = arith.constant 0 : i32
    return %c0_i32, %c0_i32_0, %c0_i32_1 : i32, i32, i32
  }
  func.func @transform_7(%arg0: i32) -> (i32, i32) {
    %c0_i32 = arith.constant 0 : i32
    %c0_i32_0 = arith.constant 0 : i32
    %c0_i32_1 = arith.constant 0 : i32
    return %c0_i32, %c0_i32_0 : i32, i32
  }
  func.func @transform_8(%arg0: i32) -> (i32, i32, i32) {
    %c0_i32 = arith.constant 0 : i32
    %c0_i32_0 = arith.constant 0 : i32
    %c0_i32_1 = arith.constant 0 : i32
    %c0_i32_2 = arith.constant 0 : i32
    return %c0_i32, %c0_i32_0, %c0_i32_1 : i32, i32, i32
  }
  func.func @transform_9(%arg0: i32) -> (i32, i32, i32) {
    %c0_i32 = arith.constant 0 : i32
    %c0_i32_0 = arith.constant 0 : i32
    %c0_i32_1 = arith.constant 0 : i32
    %c0_i32_2 = arith.constant 0 : i32
    return %c0_i32, %c0_i32_0, %c0_i32_1 : i32, i32, i32
  }
  func.func @transform_10(%arg0: i32) -> (i32, i32, i32) {
    %c0_i32 = arith.constant 0 : i32
    %c0_i32_0 = arith.constant 0 : i32
    %c0_i32_1 = arith.constant 0 : i32
    %c0_i32_2 = arith.constant 0 : i32
    return %c0_i32, %c0_i32_0, %c0_i32_1 : i32, i32, i32
  }
  func.func @transform_11(%arg0: i32) -> (i32, i32) {
    %c0_i32 = arith.constant 0 : i32
    %c0_i32_0 = arith.constant 0 : i32
    %c0_i32_1 = arith.constant 0 : i32
    return %c0_i32, %c0_i32_0 : i32, i32
  }
  func.func @transform_12(%arg0: i32) -> (i32, i32, i32) {
    %c0_i32 = arith.constant 0 : i32
    %c0_i32_0 = arith.constant 0 : i32
    %c0_i32_1 = arith.constant 0 : i32
    %c0_i32_2 = arith.constant 0 : i32
    return %c0_i32, %c0_i32_0, %c0_i32_1 : i32, i32, i32
  }
  func.func @transform_13(%arg0: i32) -> (i32, i32, i32) {
    %c0_i32 = arith.constant 0 : i32
    %c0_i32_0 = arith.constant 0 : i32
    %c0_i32_1 = arith.constant 0 : i32
    %c0_i32_2 = arith.constant 0 : i32
    return %c0_i32, %c0_i32_0, %c0_i32_1 : i32, i32, i32
  }
  func.func @transform_14(%arg0: i32) -> (i32, i32, i32) {
    %c0_i32 = arith.constant 0 : i32
    %c0_i32_0 = arith.constant 0 : i32
    %c0_i32_1 = arith.constant 0 : i32
    %c0_i32_2 = arith.constant 0 : i32
    return %c0_i32, %c0_i32_0, %c0_i32_1 : i32, i32, i32
  }
  func.func @transform_15(%arg0: i32) -> (i32, i32) {
    %c0_i32 = arith.constant 0 : i32
    %c0_i32_0 = arith.constant 0 : i32
    %c0_i32_1 = arith.constant 0 : i32
    return %c0_i32, %c0_i32_0 : i32, i32
  }
  func.func @transform_16(%arg0: i32) -> (i32, i32, i32) {
    %c0_i32 = arith.constant 0 : i32
    %c0_i32_0 = arith.constant 0 : i32
    %c0_i32_1 = arith.constant 0 : i32
    %c0_i32_2 = arith.constant 0 : i32
    return %c0_i32, %c0_i32_0, %c0_i32_1 : i32, i32, i32
  }
  func.func @transform_17(%arg0: i32) -> (i32, i32, i32) {
    %c0_i32 = arith.constant 0 : i32
    %c0_i32_0 = arith.constant 0 : i32
    %c0_i32_1 = arith.constant 0 : i32
    return %arg0, %c0_i32, %c0_i32_0 : i32, i32, i32
  }
}

</mosaic_0001>

<llo_original>
// kernel: _lambda_.1
$region0: #{_lambda_.1}
  #allocation0 [shape = 'u32[]', space=smem, size = 0x4, offset = 0x4, fixed_abs, tag = 'smem constant byte address 0x4 - core index']
  #allocation1 [shape = 'u32[72,128]{1,0:T(1,128)}', space=vmem, size = 0x9000, scoped, tag = 'internal scratch']
  %s0 = inlined_call_operand.vmem [shape: f32[2,4,256], index: 0, kind: input, shape index: {}]
  %s1 = inlined_call_operand.hbm [shape: f32[9,256,256], index: 1, kind: input, shape index: {}]
  %s2 = inlined_call_operand.hbm [shape: f32[9,8,4], index: 2, kind: input, shape index: {}]
  %s3 = inlined_call_operand.hbm [shape: f32[8,1], index: 3, kind: input, shape index: {}]
  %s4 = inlined_call_operand.hbm [shape: f32[4,256,64], index: 4, kind: input, shape index: {}]
  %s5 = inlined_call_operand.hbm [shape: f32[9,64,64], index: 5, kind: input, shape index: {}]
  %s6 = inlined_call_operand.hbm [shape: f32[9,8,8], index: 6, kind: input, shape index: {}]
  %s7 = inlined_call_operand.hbm [shape: f32[8,1], index: 7, kind: input, shape index: {}]
  %s8 = inlined_call_operand.hbm [shape: f32[4,64,16], index: 8, kind: input, shape index: {}]
  %s9 = inlined_call_operand.hbm [shape: f32[9,16,16], index: 9, kind: input, shape index: {}]
  %s10 = inlined_call_operand.hbm [shape: f32[9,8,8], index: 10, kind: input, shape index: {}]
  %s11 = inlined_call_operand.hbm [shape: f32[8,1], index: 11, kind: input, shape index: {}]
  %s12 = inlined_call_operand.hbm [shape: f32[4,16,4], index: 12, kind: input, shape index: {}]
  %s13 = inlined_call_operand.hbm [shape: f32[9,4,4], index: 13, kind: input, shape index: {}]
  %s14 = inlined_call_operand.hbm [shape: f32[9,3,8], index: 14, kind: input, shape index: {}]
  %s15 = inlined_call_operand.hbm [shape: f32[3,1], index: 15, kind: input, shape index: {}]
  %s16 = inlined_call_operand.hbm [shape: f32[4,4,1], index: 16, kind: input, shape index: {}]
  %s17 = inlined_call_operand.vmem [shape: f32[2,3,1], index: 17, kind: output, shape index: {}]
  %s18 = sld [smem:[#allocation0]]
  $region165: #{_lambda_.1} parent=0
    _
  %s20 = ssub.s32 1, %s18
  %s21 = scalar_select 0, %s20, %s18
  $region1: #{_lambda_.1} parent=0
    #allocation2 [shape = 'u8[2359296]{0}', space=vmem, size = 0x240000, scoped, tag = 'input window, operand 1, single buffered']
    #allocation3 [shape = 's32[2]{0}', space=sflag, size = 0x8, scoped, tag = 'scoped memory for _lambda_.1']
    #allocation4 [shape = 'u8[36864]{0}', space=vmem, size = 0x9000, scoped, tag = 'input window, operand 2, single buffered']
    #allocation5 [shape = 's32[1]{0}', space=sflag, size = 0x4, scoped, tag = 'scoped memory for _lambda_.1']
    #allocation6 [shape = 'u8[4096]{0}', space=vmem, size = 0x1000, scoped, tag = 'input window, operand 3, single buffered']
    #allocation7 [shape = 'u8[524288]{0}', space=vmem, size = 0x80000, scoped, tag = 'input window, operand 4, single buffered']
    #allocation8 [shape = 's32[1]{0}', space=sflag, size = 0x4, scoped, tag = 'scoped memory for _lambda_.1']
    #allocation9 [shape = 'u8[294912]{0}', space=vmem, size = 0x48000, scoped, tag = 'input window, operand 5, single buffered']
    #allocation10 [shape = 'u8[36864]{0}', space=vmem, size = 0x9000, scoped, tag = 'input window, operand 6, single buffered']
    #allocation11 [shape = 's32[1]{0}', space=sflag, size = 0x4, scoped, tag = 'scoped memory for _lambda_.1']
    #allocation12 [shape = 'u8[4096]{0}', space=vmem, size = 0x1000, scoped, tag = 'input window, operand 7, single buffered']
    #allocation13 [shape = 'u8[131072]{0}', space=vmem, size = 0x20000, scoped, tag = 'input window, operand 8, single buffered']
    #allocation14 [shape = 's32[1]{0}', space=sflag, size = 0x4, scoped, tag = 'scoped memory for _lambda_.1']
    #allocation15 [shape = 'u8[73728]{0}', space=vmem, size = 0x12000, scoped, tag = 'input window, operand 9, single buffered']
    #allocation16 [shape = 'u8[36864]{0}', space=vmem, size = 0x9000, scoped, tag = 'input window, operand 10, single buffered']
    #allocation17 [shape = 's32[1]{0}', space=sflag, size = 0x4, scoped, tag = 'scoped memory for _lambda_.1']
    #allocation18 [shape = 'u8[4096]{0}', space=vmem, size = 0x1000, scoped, tag = 'input window, operand 11, single buffered']
    #allocation19 [shape = 'u8[32768]{0}', space=vmem, size = 0x8000, scoped, tag = 'input window, operand 12, single buffered']
    #allocation20 [shape = 's32[1]{0}', space=sflag, size = 0x4, scoped, tag = 'scoped memory for _lambda_.1']
    #allocation21 [shape = 'u8[18432]{0}', space=vmem, size = 0x4800, scoped, tag = 'input window, operand 13, single buffered']
    #allocation22 [shape = 'u8[18432]{0}', space=vmem, size = 0x4800, scoped, tag = 'input window, operand 14, single buffered']
    #allocation23 [shape = 's32[1]{0}', space=sflag, size = 0x4, scoped, tag = 'scoped memory for _lambda_.1']
    #allocation24 [shape = 'u8[2048]{0}', space=vmem, size = 0x800, scoped, tag = 'input window, operand 15, single buffered']
    #allocation25 [shape = 'u8[8192]{0}', space=vmem, size = 0x2000, scoped, tag = 'input window, operand 16, single buffered']
    #allocation26 [shape = 's32[1]{0}', space=sflag, size = 0x4, scoped, tag = 'scoped memory for _lambda_.1']
    %22 = vsyncpa [#allocation3], 0
    %23 = vsyncpa [#allocation5], 0
    %24 = vsyncpa [#allocation8], 0
    %25 = vsyncpa [#allocation11], 0
    %26 = vsyncpa [#allocation14], 0
    %27 = vsyncpa [#allocation17], 0
    %28 = vsyncpa [#allocation20], 0
    %29 = vsyncpa [#allocation23], 0
    %30 = vsyncpa [#allocation26], 0
    loop: start=0, step=1, limit=4
    $region2: #{_lambda_.1} parent=1 // loop_pre_header
      _
    $region3: #{_lambda_.1} parent=1 // loop_header
      %s32 = sphi 0, %s36
      %p33 = scmp.ge.s32.totalorder %s32, 4
      %s42 = sphi 0, %s44
      %s45 = sphi 0, %s42
      %s46 = sphi 0, %s45
      %s62 = sphi 0, %s46
      %s66 = sphi 0, %s66
      %s68 = sphi 0, %s66
      %s69 = sphi 0, %s68
      %s83 = sphi 0, %s69
      %s87 = sphi 0, %s87
      %s89 = sphi 0, %s87
      %s90 = sphi 0, %s89
      %s104 = sphi 0, %s90
      %s108 = sphi 0, %s108
      %s110 = sphi 0, %s108
      %s111 = sphi 0, %s110
      %s125 = sphi 0, %s111
      %s129 = sphi 0, %s129
      %s131 = sphi 0, %s129
      %s132 = sphi 0, %s131
      %s146 = sphi 0, %s132
      %s150 = sphi 0, %s150
      %s152 = sphi 0, %s150
      %s153 = sphi 0, %s152
      %s167 = sphi 0, %s153
      %s171 = sphi 0, %s171
      %s173 = sphi 0, %s171
      %s174 = sphi 0, %s173
      %s188 = sphi 0, %s174
      %s192 = sphi 0, %s192
      %s194 = sphi 0, %s192
      %s195 = sphi 0, %s194
      %s209 = sphi 0, %s195
      %s213 = sphi 0, %s213
      %s215 = sphi 0, %s213
      %s216 = sphi 0, %s215
      %s230 = sphi 0, %s216
      %s234 = sphi 0, %s234
      %s236 = sphi 0, %s234
      %s237 = sphi 0, %s236
      %s251 = sphi 0, %s237
      %s255 = sphi 0, %s255
      %s257 = sphi 0, %s255
      %s258 = sphi 0, %s257
      %s272 = sphi 0, %s258
      %s276 = sphi 0, %s276
      %s278 = sphi 0, %s276
      %s279 = sphi 0, %s278
      %s293 = sphi 0, %s279
      %s297 = sphi 0, %s297
      %s299 = sphi 0, %s297
      %s300 = sphi 0, %s299
      %s314 = sphi 0, %s300
      %s318 = sphi 0, %s318
      %s320 = sphi 0, %s318
      %s321 = sphi 0, %s320
      %s335 = sphi 0, %s321
      %s339 = sphi 0, %s339
      %s341 = sphi 0, %s339
      %s342 = sphi 0, %s341
      %s356 = sphi 0, %s342
      %s360 = sphi 0, %s360
      %s362 = sphi 0, %s360
      %s363 = sphi 0, %s362
      %s377 = sphi 0, %s363
      %s381 = sphi 0, %s381
      %s383 = sphi 0, %s381
      %s384 = sphi 0, %s383
      %s398 = sphi 0, %s384
      %s404 = sphi 0, %s406
      %s407 = sphi 0, %s404
      %s408 = sphi 0, %s407
      %s424 = sphi 0, %s408
    $region4: #{_lambda_.1} parent=1 // loop_header_branch
      %35 = sbr.rel (%p33) target = $region8
    $region5: #{_lambda_.1} parent=1 // loop_body
      %s37 = ssub.s32 %s32, 1
      %s38 = ssub.s32 %s32, 2
      %s39 = sadd.s32 %s32, 1
      %s40 = ssub.s32 %s32, %s39
      %p41 = scmp.eq.s32.totalorder %s40, 0
      %s43 = sadd.s32 %s42, 1
      %s44 = scalar_select %p41, %s42, %s43
      %p47 = pneg %p41
      %p48 = scmp.eq.s32.totalorder %s32, 1
      %p49 = por %p47, %p48
      %p50 = scmp.ne.s32.totalorder %s42, %s45
      %p51 = scmp.eq.s32.totalorder %s32, 0
      %p52 = por %p50, %p51
      %p53 = scmp.ne.s32.totalorder %s42, %s45
      %p54 = scmp.eq.s32.totalorder %s37, 1
      %p55 = por %p53, %p54
      %p56 = scmp.ne.s32.totalorder %s45, %s46
      %p57 = scmp.eq.s32.totalorder %s37, 0
      %p58 = por %p56, %p57
      %p59 = scmp.ne.s32.totalorder %s45, %s46
      %p60 = scmp.eq.s32.totalorder %s38, 1
      %p61 = por %p59, %p60
      %p63 = scmp.ne.s32.totalorder %s46, %s62
      %p64 = scmp.eq.s32.totalorder %s38, 0
      %p65 = por %p63, %p64
      %s67 = sadd.s32 %s66, 1
      %p70 = scmp.eq.s32.totalorder %s32, 1
      %p71 = scmp.ne.s32.totalorder %s66, %s68
      %p72 = scmp.eq.s32.totalorder %s32, 0
      %p73 = por %p71, %p72
      %p74 = scmp.ne.s32.totalorder %s66, %s68
      %p75 = scmp.eq.s32.totalorder %s37, 1
      %p76 = por %p74, %p75
      %p77 = scmp.ne.s32.totalorder %s68, %s69
      %p78 = scmp.eq.s32.totalorder %s37, 0
      %p79 = por %p77, %p78
      %p80 = scmp.ne.s32.totalorder %s68, %s69
      %p81 = scmp.eq.s32.totalorder %s38, 1
      %p82 = por %p80, %p81
      %p84 = scmp.ne.s32.totalorder %s69, %s83
      %p85 = scmp.eq.s32.totalorder %s38, 0
      %p86 = por %p84, %p85
      %s88 = sadd.s32 %s87, 1
      %p91 = scmp.eq.s32.totalorder %s32, 1
      %p92 = scmp.ne.s32.totalorder %s87, %s89
      %p93 = scmp.eq.s32.totalorder %s32, 0
      %p94 = por %p92, %p93
      %p95 = scmp.ne.s32.totalorder %s87, %s89
      %p96 = scmp.eq.s32.totalorder %s37, 1
      %p97 = por %p95, %p96
      %p98 = scmp.ne.s32.totalorder %s89, %s90
      %p99 = scmp.eq.s32.totalorder %s37, 0
      %p100 = por %p98, %p99
      %p101 = scmp.ne.s32.totalorder %s89, %s90
      %p102 = scmp.eq.s32.totalorder %s38, 1
      %p103 = por %p101, %p102
      %p105 = scmp.ne.s32.totalorder %s90, %s104
      %p106 = scmp.eq.s32.totalorder %s38, 0
      %p107 = por %p105, %p106
      %s109 = sadd.s32 %s108, 1
      %p112 = scmp.eq.s32.totalorder %s32, 1
      %p113 = scmp.ne.s32.totalorder %s108, %s110
      %p114 = scmp.eq.s32.totalorder %s32, 0
      %p115 = por %p113, %p114
      %p116 = scmp.ne.s32.totalorder %s108, %s110
      %p117 = scmp.eq.s32.totalorder %s37, 1
      %p118 = por %p116, %p117
      %p119 = scmp.ne.s32.totalorder %s110, %s111
      %p120 = scmp.eq.s32.totalorder %s37, 0
      %p121 = por %p119, %p120
      %p122 = scmp.ne.s32.totalorder %s110, %s111
      %p123 = scmp.eq.s32.totalorder %s38, 1
      %p124 = por %p122, %p123
      %p126 = scmp.ne.s32.totalorder %s111, %s125
      %p127 = scmp.eq.s32.totalorder %s38, 0
      %p128 = por %p126, %p127
      %s130 = sadd.s32 %s129, 1
      %p133 = scmp.eq.s32.totalorder %s32, 1
      %p134 = scmp.ne.s32.totalorder %s129, %s131
      %p135 = scmp.eq.s32.totalorder %s32, 0
      %p136 = por %p134, %p135
      %p137 = scmp.ne.s32.totalorder %s129, %s131
      %p138 = scmp.eq.s32.totalorder %s37, 1
      %p139 = por %p137, %p138
      %p140 = scmp.ne.s32.totalorder %s131, %s132
      %p141 = scmp.eq.s32.totalorder %s37, 0
      %p142 = por %p140, %p141
      %p143 = scmp.ne.s32.totalorder %s131, %s132
      %p144 = scmp.eq.s32.totalorder %s38, 1
      %p145 = por %p143, %p144
      %p147 = scmp.ne.s32.totalorder %s132, %s146
      %p148 = scmp.eq.s32.totalorder %s38, 0
      %p149 = por %p147, %p148
      %s151 = sadd.s32 %s150, 1
      %p154 = scmp.eq.s32.totalorder %s32, 1
      %p155 = scmp.ne.s32.totalorder %s150, %s152
      %p156 = scmp.eq.s32.totalorder %s32, 0
      %p157 = por %p155, %p156
      %p158 = scmp.ne.s32.totalorder %s150, %s152
      %p159 = scmp.eq.s32.totalorder %s37, 1
      %p160 = por %p158, %p159
      %p161 = scmp.ne.s32.totalorder %s152, %s153
      %p162 = scmp.eq.s32.totalorder %s37, 0
      %p163 = por %p161, %p162
      %p164 = scmp.ne.s32.totalorder %s152, %s153
      %p165 = scmp.eq.s32.totalorder %s38, 1
      %p166 = por %p164, %p165
      %p168 = scmp.ne.s32.totalorder %s153, %s167
      %p169 = scmp.eq.s32.totalorder %s38, 0
      %p170 = por %p168, %p169
      %s172 = sadd.s32 %s171, 1
      %p175 = scmp.eq.s32.totalorder %s32, 1
      %p176 = scmp.ne.s32.totalorder %s171, %s173
      %p177 = scmp.eq.s32.totalorder %s32, 0
      %p178 = por %p176, %p177
      %p179 = scmp.ne.s32.totalorder %s171, %s173
      %p180 = scmp.eq.s32.totalorder %s37, 1
      %p181 = por %p179, %p180
      %p182 = scmp.ne.s32.totalorder %s173, %s174
      %p183 = scmp.eq.s32.totalorder %s37, 0
      %p184 = por %p182, %p183
      %p185 = scmp.ne.s32.totalorder %s173, %s174
      %p186 = scmp.eq.s32.totalorder %s38, 1
      %p187 = por %p185, %p186
      %p189 = scmp.ne.s32.totalorder %s174, %s188
      %p190 = scmp.eq.s32.totalorder %s38, 0
      %p191 = por %p189, %p190
      %s193 = sadd.s32 %s192, 1
      %p196 = scmp.eq.s32.totalorder %s32, 1
      %p197 = scmp.ne.s32.totalorder %s192, %s194
      %p198 = scmp.eq.s32.totalorder %s32, 0
      %p199 = por %p197, %p198
      %p200 = scmp.ne.s32.totalorder %s192, %s194
      %p201 = scmp.eq.s32.totalorder %s37, 1
      %p202 = por %p200, %p201
      %p203 = scmp.ne.s32.totalorder %s194, %s195
      %p204 = scmp.eq.s32.totalorder %s37, 0
      %p205 = por %p203, %p204
      %p206 = scmp.ne.s32.totalorder %s194, %s195
      %p207 = scmp.eq.s32.totalorder %s38, 1
      %p208 = por %p206, %p207
      %p210 = scmp.ne.s32.totalorder %s195, %s209
      %p211 = scmp.eq.s32.totalorder %s38, 0
      %p212 = por %p210, %p211
      %s214 = sadd.s32 %s213, 1
      %p217 = scmp.eq.s32.totalorder %s32, 1
      %p218 = scmp.ne.s32.totalorder %s213, %s215
      %p219 = scmp.eq.s32.totalorder %s32, 0
      %p220 = por %p218, %p219
      %p221 = scmp.ne.s32.totalorder %s213, %s215
      %p222 = scmp.eq.s32.totalorder %s37, 1
      %p223 = por %p221, %p222
      %p224 = scmp.ne.s32.totalorder %s215, %s216
      %p225 = scmp.eq.s32.totalorder %s37, 0
      %p226 = por %p224, %p225
      %p227 = scmp.ne.s32.totalorder %s215, %s216
      %p228 = scmp.eq.s32.totalorder %s38, 1
      %p229 = por %p227, %p228
      %p231 = scmp.ne.s32.totalorder %s216, %s230
      %p232 = scmp.eq.s32.totalorder %s38, 0
      %p233 = por %p231, %p232
      %s235 = sadd.s32 %s234, 1
      %p238 = scmp.eq.s32.totalorder %s32, 1
      %p239 = scmp.ne.s32.totalorder %s234, %s236
      %p240 = scmp.eq.s32.totalorder %s32, 0
      %p241 = por %p239, %p240
      %p242 = scmp.ne.s32.totalorder %s234, %s236
      %p243 = scmp.eq.s32.totalorder %s37, 1
      %p244 = por %p242, %p243
      %p245 = scmp.ne.s32.totalorder %s236, %s237
      %p246 = scmp.eq.s32.totalorder %s37, 0
      %p247 = por %p245, %p246
      %p248 = scmp.ne.s32.totalorder %s236, %s237
      %p249 = scmp.eq.s32.totalorder %s38, 1
      %p250 = por %p248, %p249
      %p252 = scmp.ne.s32.totalorder %s237, %s251
      %p253 = scmp.eq.s32.totalorder %s38, 0
      %p254 = por %p252, %p253
      %s256 = sadd.s32 %s255, 1
      %p259 = scmp.eq.s32.totalorder %s32, 1
      %p260 = scmp.ne.s32.totalorder %s255, %s257
      %p261 = scmp.eq.s32.totalorder %s32, 0
      %p262 = por %p260, %p261
      %p263 = scmp.ne.s32.totalorder %s255, %s257
      %p264 = scmp.eq.s32.totalorder %s37, 1
      %p265 = por %p263, %p264
      %p266 = scmp.ne.s32.totalorder %s257, %s258
      %p267 = scmp.eq.s32.totalorder %s37, 0
      %p268 = por %p266, %p267
      %p269 = scmp.ne.s32.totalorder %s257, %s258
      %p270 = scmp.eq.s32.totalorder %s38, 1
      %p271 = por %p269, %p270
      %p273 = scmp.ne.s32.totalorder %s258, %s272
      %p274 = scmp.eq.s32.totalorder %s38, 0
      %p275 = por %p273, %p274
      %s277 = sadd.s32 %s276, 1
      %p280 = scmp.eq.s32.totalorder %s32, 1
      %p281 = scmp.ne.s32.totalorder %s276, %s278
      %p282 = scmp.eq.s32.totalorder %s32, 0
      %p283 = por %p281, %p282
      %p284 = scmp.ne.s32.totalorder %s276, %s278
      %p285 = scmp.eq.s32.totalorder %s37, 1
      %p286 = por %p284, %p285
      %p287 = scmp.ne.s32.totalorder %s278, %s279
      %p288 = scmp.eq.s32.totalorder %s37, 0
      %p289 = por %p287, %p288
      %p290 = scmp.ne.s32.totalorder %s278, %s279
      %p291 = scmp.eq.s32.totalorder %s38, 1
      %p292 = por %p290, %p291
      %p294 = scmp.ne.s32.totalorder %s279, %s293
      %p295 = scmp.eq.s32.totalorder %s38, 0
      %p296 = por %p294, %p295
      %s298 = sadd.s32 %s297, 1
      %p301 = scmp.eq.s32.totalorder %s32, 1
      %p302 = scmp.ne.s32.totalorder %s297, %s299
      %p303 = scmp.eq.s32.totalorder %s32, 0
      %p304 = por %p302, %p303
      %p305 = scmp.ne.s32.totalorder %s297, %s299
      %p306 = scmp.eq.s32.totalorder %s37, 1
      %p307 = por %p305, %p306
      %p308 = scmp.ne.s32.totalorder %s299, %s300
      %p309 = scmp.eq.s32.totalorder %s37, 0
      %p310 = por %p308, %p309
      %p311 = scmp.ne.s32.totalorder %s299, %s300
      %p312 = scmp.eq.s32.totalorder %s38, 1
      %p313 = por %p311, %p312
      %p315 = scmp.ne.s32.totalorder %s300, %s314
      %p316 = scmp.eq.s32.totalorder %s38, 0
      %p317 = por %p315, %p316
      %s319 = sadd.s32 %s318, 1
      %p322 = scmp.eq.s32.totalorder %s32, 1
      %p323 = scmp.ne.s32.totalorder %s318, %s320
      %p324 = scmp.eq.s32.totalorder %s32, 0
      %p325 = por %p323, %p324
      %p326 = scmp.ne.s32.totalorder %s318, %s320
      %p327 = scmp.eq.s32.totalorder %s37, 1
      %p328 = por %p326, %p327
      %p329 = scmp.ne.s32.totalorder %s320, %s321
      %p330 = scmp.eq.s32.totalorder %s37, 0
      %p331 = por %p329, %p330
      %p332 = scmp.ne.s32.totalorder %s320, %s321
      %p333 = scmp.eq.s32.totalorder %s38, 1
      %p334 = por %p332, %p333
      %p336 = scmp.ne.s32.totalorder %s321, %s335
      %p337 = scmp.eq.s32.totalorder %s38, 0
      %p338 = por %p336, %p337
      %s340 = sadd.s32 %s339, 1
      %p343 = scmp.eq.s32.totalorder %s32, 1
      %p344 = scmp.ne.s32.totalorder %s339, %s341
      %p345 = scmp.eq.s32.totalorder %s32, 0
      %p346 = por %p344, %p345
      %p347 = scmp.ne.s32.totalorder %s339, %s341
      %p348 = scmp.eq.s32.totalorder %s37, 1
      %p349 = por %p347, %p348
      %p350 = scmp.ne.s32.totalorder %s341, %s342
      %p351 = scmp.eq.s32.totalorder %s37, 0
      %p352 = por %p350, %p351
      %p353 = scmp.ne.s32.totalorder %s341, %s342
      %p354 = scmp.eq.s32.totalorder %s38, 1
      %p355 = por %p353, %p354
      %p357 = scmp.ne.s32.totalorder %s342, %s356
      %p358 = scmp.eq.s32.totalorder %s38, 0
      %p359 = por %p357, %p358
      %s361 = sadd.s32 %s360, 1
      %p364 = scmp.eq.s32.totalorder %s32, 1
      %p365 = scmp.ne.s32.totalorder %s360, %s362
      %p366 = scmp.eq.s32.totalorder %s32, 0
      %p367 = por %p365, %p366
      %p368 = scmp.ne.s32.totalorder %s360, %s362
      %p369 = scmp.eq.s32.totalorder %s37, 1
      %p370 = por %p368, %p369
      %p371 = scmp.ne.s32.totalorder %s362, %s363
      %p372 = scmp.eq.s32.totalorder %s37, 0
      %p373 = por %p371, %p372
      %p374 = scmp.ne.s32.totalorder %s362, %s363
      %p375 = scmp.eq.s32.totalorder %s38, 1
      %p376 = por %p374, %p375
      %p378 = scmp.ne.s32.totalorder %s363, %s377
      %p379 = scmp.eq.s32.totalorder %s38, 0
      %p380 = por %p378, %p379
      %s382 = sadd.s32 %s381, 1
      %p385 = scmp.eq.s32.totalorder %s32, 1
      %p386 = scmp.ne.s32.totalorder %s381, %s383
      %p387 = scmp.eq.s32.totalorder %s32, 0
      %p388 = por %p386, %p387
      %p389 = scmp.ne.s32.totalorder %s381, %s383
      %p390 = scmp.eq.s32.totalorder %s37, 1
      %p391 = por %p389, %p390
      %p392 = scmp.ne.s32.totalorder %s383, %s384
      %p393 = scmp.eq.s32.totalorder %s37, 0
      %p394 = por %p392, %p393
      %p395 = scmp.ne.s32.totalorder %s383, %s384
      %p396 = scmp.eq.s32.totalorder %s38, 1
      %p397 = por %p395, %p396
      %p399 = scmp.ne.s32.totalorder %s384, %s398
      %p400 = scmp.eq.s32.totalorder %s38, 0
      %p401 = por %p399, %p400
      %s402 = ssub.s32 %s32, %s39
      %p403 = scmp.eq.s32.totalorder %s402, 0
      %s405 = sadd.s32 %s404, 1
      %s406 = scalar_select %p403, %s404, %s405
      %p409 = pneg %p403
      %p410 = scmp.eq.s32.totalorder %s32, 1
      %p411 = por %p409, %p410
      %p412 = scmp.ne.s32.totalorder %s404, %s407
      %p413 = scmp.eq.s32.totalorder %s32, 0
      %p414 = por %p412, %p413
      %p415 = scmp.ne.s32.totalorder %s404, %s407
      %p416 = scmp.eq.s32.totalorder %s37, 1
      %p417 = por %p415, %p416
      %p418 = scmp.ne.s32.totalorder %s407, %s408
      %p419 = scmp.eq.s32.totalorder %s37, 0
      %p420 = por %p418, %p419
      %p421 = scmp.ne.s32.totalorder %s407, %s408
      %p422 = scmp.eq.s32.totalorder %s38, 1
      %p423 = por %p421, %p422
      %p425 = scmp.ne.s32.totalorder %s408, %s424
      %p426 = scmp.eq.s32.totalorder %s38, 0
      %p427 = por %p425, %p426
      %p428 = scmp.le.s32.totalorder 1, %s32
      %p429 = scmp.lt.s32.totalorder %s32, 3
      %p430 = pnand %p428, %p429
      %p431 = pneg %p430
      // Predicated region
      $region9: #{_lambda_.1} parent=5 // pred_check
        _
      $region10: #{_lambda_.1} parent=5 // pred_check_branch
        %433 = sbr.rel (%p430) target = $region12
      $region11: #{_lambda_.1} parent=5 // pred_region
        %s434 = ssub.s32 %s32, 1
        // Predicated region
        $region13: #{_lambda_.1} parent=11 // pred_check
          %p435 = pneg %p79
        $region14: #{_lambda_.1} parent=11 // pred_check_branch
          %437 = sbr.rel (%p435) target = $region16
        $region15: #{_lambda_.1} parent=11 // pred_region
          %439 = vsyncadd [#allocation3], 0
          %s440 = sshll.u32 %s1, 4
          %s441 = int_to_ptr.hbm [resolvable:$true] %s440
          %s442 = sshll.u32 [#allocation2], 4
          %s443 = int_to_ptr.vmem [resolvable:$true] %s442
          %448 = dma.hbm_to_vmem [thread:$0]  %s441, 73728, %s443, [#allocation3], 256, 256, 16
        $region16: #{_lambda_.1} parent=11 // pred_fallthru
          _
        // Predicated region
        $region17: #{_lambda_.1} parent=11 // pred_check
          %p449 = pneg %p100
        $region18: #{_lambda_.1} parent=11 // pred_check_branch
          %451 = sbr.rel (%p449) target = $region20
        $region19: #{_lambda_.1} parent=11 // pred_region
          %453 = vsyncadd [#allocation5], 0
          %s454 = sshll.u32 %s2, 4
          %s455 = int_to_ptr.hbm [resolvable:$true] %s454
          %s456 = sshll.u32 [#allocation4], 4
          %s457 = int_to_ptr.vmem [resolvable:$true] %s456
          %462 = dma.hbm_to_vmem [thread:$0]  %s455, 1152, %s457, [#allocation5], 128, 128, 8
        $region20: #{_lambda_.1} parent=11 // pred_fallthru
          _
        // Predicated region
        $region21: #{_lambda_.1} parent=11 // pred_check
          %p463 = pneg %p121
        $region22: #{_lambda_.1} parent=11 // pred_check_branch
          %465 = sbr.rel (%p463) target = $region24
        $region23: #{_lambda_.1} parent=11 // pred_region
          %467 = vsyncadd [#allocation5], 0
          %s469 = sshll.u32 %s3, 4
          %s470 = int_to_ptr.hbm [resolvable:$true] %s469
          %s471 = sshll.u32 [#allocation6], 4
          %s472 = int_to_ptr.vmem [resolvable:$true] %s471
          %474 = dma.hbm_to_vmem [thread:$0]  %s470, 128, %s472, [#allocation5]
        $region24: #{_lambda_.1} parent=11 // pred_fallthru
          _
        // Predicated region
        $region25: #{_lambda_.1} parent=11 // pred_check
          %p475 = pneg %p142
        $region26: #{_lambda_.1} parent=11 // pred_check_branch
          %477 = sbr.rel (%p475) target = $region28
        $region27: #{_lambda_.1} parent=11 // pred_region
          %479 = vsyncadd [#allocation8], 0
          %s480 = sshll.u32 %s4, 4
          %s481 = int_to_ptr.hbm [resolvable:$true] %s480
          %s482 = sshll.u32 [#allocation7], 4
          %s483 = int_to_ptr.vmem [resolvable:$true] %s482
          %488 = dma.hbm_to_vmem [thread:$0]  %s481, 16384, %s483, [#allocation8], 128, 128, 8
        $region28: #{_lambda_.1} parent=11 // pred_fallthru
          _
        // Predicated region
        $region29: #{_lambda_.1} parent=11 // pred_check
          %p489 = pneg %p163
        $region30: #{_lambda_.1} parent=11 // pred_check_branch
          %491 = sbr.rel (%p489) target = $region32
        $region31: #{_lambda_.1} parent=11 // pred_region
          %493 = vsyncadd [#allocation8], 0
          %s494 = sshll.u32 %s5, 4
          %s495 = int_to_ptr.hbm [resolvable:$true] %s494
          %s496 = sshll.u32 [#allocation9], 4
          %s497 = int_to_ptr.vmem [resolvable:$true] %s496
          %502 = dma.hbm_to_vmem [thread:$0]  %s495, 9216, %s497, [#allocation8], 128, 128, 8
        $region32: #{_lambda_.1} parent=11 // pred_fallthru
          _
        // Predicated region
        $region33: #{_lambda_.1} parent=11 // pred_check
          %p503 = pneg %p184
        $region34: #{_lambda_.1} parent=11 // pred_check_branch
          %505 = sbr.rel (%p503) target = $region36
        $region35: #{_lambda_.1} parent=11 // pred_region
          %507 = vsyncadd [#allocation11], 0
          %s508 = sshll.u32 %s6, 4
          %s509 = int_to_ptr.hbm [resolvable:$true] %s508
          %s510 = sshll.u32 [#allocation10], 4
          %s511 = int_to_ptr.vmem [resolvable:$true] %s510
          %516 = dma.hbm_to_vmem [thread:$0]  %s509, 1152, %s511, [#allocation11], 128, 128, 8
        $region36: #{_lambda_.1} parent=11 // pred_fallthru
          _
        // Predicated region
        $region37: #{_lambda_.1} parent=11 // pred_check
          %p517 = pneg %p205
        $region38: #{_lambda_.1} parent=11 // pred_check_branch
          %519 = sbr.rel (%p517) target = $region40
        $region39: #{_lambda_.1} parent=11 // pred_region
          %521 = vsyncadd [#allocation11], 0
          %s523 = sshll.u32 %s7, 4
          %s524 = int_to_ptr.hbm [resolvable:$true] %s523
          %s525 = sshll.u32 [#allocation12], 4
          %s526 = int_to_ptr.vmem [resolvable:$true] %s525
          %528 = dma.hbm_to_vmem [thread:$0]  %s524, 128, %s526, [#allocation11]
        $region40: #{_lambda_.1} parent=11 // pred_fallthru
          _
        // Predicated region
        $region41: #{_lambda_.1} parent=11 // pred_check
          %p529 = pneg %p226
        $region42: #{_lambda_.1} parent=11 // pred_check_branch
          %531 = sbr.rel (%p529) target = $region44
        $region43: #{_lambda_.1} parent=11 // pred_region
          %533 = vsyncadd [#allocation14], 0
          %s534 = sshll.u32 %s8, 4
          %s535 = int_to_ptr.hbm [resolvable:$true] %s534
          %s536 = sshll.u32 [#allocation13], 4
          %s537 = int_to_ptr.vmem [resolvable:$true] %s536
          %542 = dma.hbm_to_vmem [thread:$0]  %s535, 4096, %s537, [#allocation14], 128, 128, 8
        $region44: #{_lambda_.1} parent=11 // pred_fallthru
          _
        // Predicated region
        $region45: #{_lambda_.1} parent=11 // pred_check
          %p543 = pneg %p247
        $region46: #{_lambda_.1} parent=11 // pred_check_branch
          %545 = sbr.rel (%p543) target = $region48
        $region47: #{_lambda_.1} parent=11 // pred_region
          %547 = vsyncadd [#allocation14], 0
          %s548 = sshll.u32 %s9, 4
          %s549 = int_to_ptr.hbm [resolvable:$true] %s548
          %s550 = sshll.u32 [#allocation15], 4
          %s551 = int_to_ptr.vmem [resolvable:$true] %s550
          %556 = dma.hbm_to_vmem [thread:$0]  %s549, 2304, %s551, [#allocation14], 128, 128, 8
        $region48: #{_lambda_.1} parent=11 // pred_fallthru
          _
        // Predicated region
        $region49: #{_lambda_.1} parent=11 // pred_check
          %p557 = pneg %p268
        $region50: #{_lambda_.1} parent=11 // pred_check_branch
          %559 = sbr.rel (%p557) target = $region52
        $region51: #{_lambda_.1} parent=11 // pred_region
          %561 = vsyncadd [#allocation17], 0
          %s562 = sshll.u32 %s10, 4
          %s563 = int_to_ptr.hbm [resolvable:$true] %s562
          %s564 = sshll.u32 [#allocation16], 4
          %s565 = int_to_ptr.vmem [resolvable:$true] %s564
          %570 = dma.hbm_to_vmem [thread:$0]  %s563, 1152, %s565, [#allocation17], 128, 128, 8
        $region52: #{_lambda_.1} parent=11 // pred_fallthru
          _
        // Predicated region
        $region53: #{_lambda_.1} parent=11 // pred_check
          %p571 = pneg %p289
        $region54: #{_lambda_.1} parent=11 // pred_check_branch
          %573 = sbr.rel (%p571) target = $region56
        $region55: #{_lambda_.1} parent=11 // pred_region
          %575 = vsyncadd [#allocation17], 0
          %s577 = sshll.u32 %s11, 4
          %s578 = int_to_ptr.hbm [resolvable:$true] %s577
          %s579 = sshll.u32 [#allocation18], 4
          %s580 = int_to_ptr.vmem [resolvable:$true] %s579
          %582 = dma.hbm_to_vmem [thread:$0]  %s578, 128, %s580, [#allocation17]
        $region56: #{_lambda_.1} parent=11 // pred_fallthru
          _
        // Predicated region
        $region57: #{_lambda_.1} parent=11 // pred_check
          %p583 = pneg %p310
        $region58: #{_lambda_.1} parent=11 // pred_check_branch
          %585 = sbr.rel (%p583) target = $region60
        $region59: #{_lambda_.1} parent=11 // pred_region
          %587 = vsyncadd [#allocation20], 0
          %s588 = sshll.u32 %s12, 4
          %s589 = int_to_ptr.hbm [resolvable:$true] %s588
          %s590 = sshll.u32 [#allocation19], 4
          %s591 = int_to_ptr.vmem [resolvable:$true] %s590
          %596 = dma.hbm_to_vmem [thread:$0]  %s589, 1024, %s591, [#allocation20], 128, 128, 8
        $region60: #{_lambda_.1} parent=11 // pred_fallthru
          _
        // Predicated region
        $region61: #{_lambda_.1} parent=11 // pred_check
          %p597 = pneg %p331
        $region62: #{_lambda_.1} parent=11 // pred_check_branch
          %599 = sbr.rel (%p597) target = $region64
        $region63: #{_lambda_.1} parent=11 // pred_region
          %601 = vsyncadd [#allocation20], 0
          %s602 = sshll.u32 %s13, 4
          %s603 = int_to_ptr.hbm [resolvable:$true] %s602
          %s604 = sshll.u32 [#allocation21], 4
          %s605 = int_to_ptr.vmem [resolvable:$true] %s604
          %610 = dma.hbm_to_vmem [thread:$0]  %s603, 576, %s605, [#allocation20], 64, 64, 4
        $region64: #{_lambda_.1} parent=11 // pred_fallthru
          _
        // Predicated region
        $region65: #{_lambda_.1} parent=11 // pred_check
          %p611 = pneg %p352
        $region66: #{_lambda_.1} parent=11 // pred_check_branch
          %613 = sbr.rel (%p611) target = $region68
        $region67: #{_lambda_.1} parent=11 // pred_region
          %615 = vsyncadd [#allocation23], 0
          %s616 = sshll.u32 %s14, 4
          %s617 = int_to_ptr.hbm [resolvable:$true] %s616
          %s618 = sshll.u32 [#allocation22], 4
          %s619 = int_to_ptr.vmem [resolvable:$true] %s618
          %624 = dma.hbm_to_vmem [thread:$0]  %s617, 576, %s619, [#allocation23], 64, 64, 4
        $region68: #{_lambda_.1} parent=11 // pred_fallthru
          _
        // Predicated region
        $region69: #{_lambda_.1} parent=11 // pred_check
          %p625 = pneg %p373
        $region70: #{_lambda_.1} parent=11 // pred_check_branch
          %627 = sbr.rel (%p625) target = $region72
        $region71: #{_lambda_.1} parent=11 // pred_region
          %629 = vsyncadd [#allocation23], 0
          %s631 = sshll.u32 %s15, 4
          %s632 = int_to_ptr.hbm [resolvable:$true] %s631
          %s633 = sshll.u32 [#allocation24], 4
          %s634 = int_to_ptr.vmem [resolvable:$true] %s633
          %636 = dma.hbm_to_vmem [thread:$0]  %s632, 64, %s634, [#allocation23]
        $region72: #{_lambda_.1} parent=11 // pred_fallthru
          _
        // Predicated region
        $region73: #{_lambda_.1} parent=11 // pred_check
          %p637 = pneg %p394
        $region74: #{_lambda_.1} parent=11 // pred_check_branch
          %639 = sbr.rel (%p637) target = $region76
        $region75: #{_lambda_.1} parent=11 // pred_region
          %641 = vsyncadd [#allocation26], 0
          %s642 = sshll.u32 %s16, 4
          %s643 = int_to_ptr.hbm [resolvable:$true] %s642
          %s644 = sshll.u32 [#allocation25], 4
          %s645 = int_to_ptr.vmem [resolvable:$true] %s644
          %650 = dma.hbm_to_vmem [thread:$0]  %s643, 256, %s645, [#allocation26], 64, 64, 4
        $region76: #{_lambda_.1} parent=11 // pred_fallthru
          _
      $region12: #{_lambda_.1} parent=5 // pred_fallthru
        _
      %p651 = scmp.lt.s32.totalorder %s32, 2
      // Predicated region
      $region77: #{_lambda_.1} parent=5 // pred_check
        %p652 = pneg %p651
      $region78: #{_lambda_.1} parent=5 // pred_check_branch
        %654 = sbr.rel (%p652) target = $region80
      $region79: #{_lambda_.1} parent=5 // pred_region
        // Predicated region
        $region81: #{_lambda_.1} parent=79 // pred_check
          %p655 = pneg %p52
        $region82: #{_lambda_.1} parent=79 // pred_check_branch
          %657 = sbr.rel (%p655) target = $region84
        $region83: #{_lambda_.1} parent=79 // pred_region
          %p658 = scmp.lt.s32.totalorder %s32, 1
          %s659 = scalar_select %p658, %s32, 1
          %s660 = smul.addr %s659, 2
          %s661 = smul.addr %s660, 4
          %s662 = scalar_lea.vmem %s0, %s661
        $region84: #{_lambda_.1} parent=79 // pred_fallthru
          _
      $region80: #{_lambda_.1} parent=5 // pred_fallthru
        _
      %p663 = scmp.le.s32.totalorder 1, %s32
      %p664 = scmp.lt.s32.totalorder %s32, 3
      %p665 = pnand %p663, %p664
      %p666 = pneg %p665
      // Predicated region
      $region85: #{_lambda_.1} parent=5 // pred_check
        _
      $region86: #{_lambda_.1} parent=5 // pred_check_branch
        %668 = sbr.rel (%p665) target = $region88
      $region87: #{_lambda_.1} parent=5 // pred_region
        %s669 = ssub.s32 %s32, 1
        // Predicated region
        $region89: #{_lambda_.1} parent=87 // pred_check
          %p670 = pneg %p79
        $region90: #{_lambda_.1} parent=87 // pred_check_branch
          %672 = sbr.rel (%p670) target = $region92
        $region91: #{_lambda_.1} parent=87 // pred_region
          %674 = dma.done [#allocation3], 73728
        $region92: #{_lambda_.1} parent=87 // pred_fallthru
          _
        // Predicated region
        $region93: #{_lambda_.1} parent=87 // pred_check
          %p675 = pneg %p100
        $region94: #{_lambda_.1} parent=87 // pred_check_branch
          %677 = sbr.rel (%p675) target = $region96
        $region95: #{_lambda_.1} parent=87 // pred_region
          %679 = dma.done [#allocation5], 1152
        $region96: #{_lambda_.1} parent=87 // pred_fallthru
          _
        // Predicated region
        $region97: #{_lambda_.1} parent=87 // pred_check
          %p680 = pneg %p121
        $region98: #{_lambda_.1} parent=87 // pred_check_branch
          %682 = sbr.rel (%p680) target = $region100
        $region99: #{_lambda_.1} parent=87 // pred_region
          %684 = dma.done [#allocation5], 128
        $region100: #{_lambda_.1} parent=87 // pred_fallthru
          _
        // Predicated region
        $region101: #{_lambda_.1} parent=87 // pred_check
          %p685 = pneg %p142
        $region102: #{_lambda_.1} parent=87 // pred_check_branch
          %687 = sbr.rel (%p685) target = $region104
        $region103: #{_lambda_.1} parent=87 // pred_region
          %689 = dma.done [#allocation8], 16384
        $region104: #{_lambda_.1} parent=87 // pred_fallthru
          _
        // Predicated region
        $region105: #{_lambda_.1} parent=87 // pred_check
          %p690 = pneg %p163
        $region106: #{_lambda_.1} parent=87 // pred_check_branch
          %692 = sbr.rel (%p690) target = $region108
        $region107: #{_lambda_.1} parent=87 // pred_region
          %694 = dma.done [#allocation8], 9216
        $region108: #{_lambda_.1} parent=87 // pred_fallthru
          _
        // Predicated region
        $region109: #{_lambda_.1} parent=87 // pred_check
          %p695 = pneg %p184
        $region110: #{_lambda_.1} parent=87 // pred_check_branch
          %697 = sbr.rel (%p695) target = $region112
        $region111: #{_lambda_.1} parent=87 // pred_region
          %699 = dma.done [#allocation11], 1152
        $region112: #{_lambda_.1} parent=87 // pred_fallthru
          _
        // Predicated region
        $region113: #{_lambda_.1} parent=87 // pred_check
          %p700 = pneg %p205
        $region114: #{_lambda_.1} parent=87 // pred_check_branch
          %702 = sbr.rel (%p700) target = $region116
        $region115: #{_lambda_.1} parent=87 // pred_region
          %704 = dma.done [#allocation11], 128
        $region116: #{_lambda_.1} parent=87 // pred_fallthru
          _
        // Predicated region
        $region117: #{_lambda_.1} parent=87 // pred_check
          %p705 = pneg %p226
        $region118: #{_lambda_.1} parent=87 // pred_check_branch
          %707 = sbr.rel (%p705) target = $region120
        $region119: #{_lambda_.1} parent=87 // pred_region
          %709 = dma.done [#allocation14], 4096
        $region120: #{_lambda_.1} parent=87 // pred_fallthru
          _
        // Predicated region
        $region121: #{_lambda_.1} parent=87 // pred_check
          %p710 = pneg %p247
        $region122: #{_lambda_.1} parent=87 // pred_check_branch
          %712 = sbr.rel (%p710) target = $region124
        $region123: #{_lambda_.1} parent=87 // pred_region
          %714 = dma.done [#allocation14], 2304
        $region124: #{_lambda_.1} parent=87 // pred_fallthru
          _
        // Predicated region
        $region125: #{_lambda_.1} parent=87 // pred_check
          %p715 = pneg %p268
        $region126: #{_lambda_.1} parent=87 // pred_check_branch
          %717 = sbr.rel (%p715) target = $region128
        $region127: #{_lambda_.1} parent=87 // pred_region
          %719 = dma.done [#allocation17], 1152
        $region128: #{_lambda_.1} parent=87 // pred_fallthru
          _
        // Predicated region
        $region129: #{_lambda_.1} parent=87 // pred_check
          %p720 = pneg %p289
        $region130: #{_lambda_.1} parent=87 // pred_check_branch
          %722 = sbr.rel (%p720) target = $region132
        $region131: #{_lambda_.1} parent=87 // pred_region
          %724 = dma.done [#allocation17], 128
        $region132: #{_lambda_.1} parent=87 // pred_fallthru
          _
        // Predicated region
        $region133: #{_lambda_.1} parent=87 // pred_check
          %p725 = pneg %p310
        $region134: #{_lambda_.1} parent=87 // pred_check_branch
          %727 = sbr.rel (%p725) target = $region136
        $region135: #{_lambda_.1} parent=87 // pred_region
          %729 = dma.done [#allocation20], 1024
        $region136: #{_lambda_.1} parent=87 // pred_fallthru
          _
        // Predicated region
        $region137: #{_lambda_.1} parent=87 // pred_check
          %p730 = pneg %p331
        $region138: #{_lambda_.1} parent=87 // pred_check_branch
          %732 = sbr.rel (%p730) target = $region140
        $region139: #{_lambda_.1} parent=87 // pred_region
          %734 = dma.done [#allocation20], 576
        $region140: #{_lambda_.1} parent=87 // pred_fallthru
          _
        // Predicated region
        $region141: #{_lambda_.1} parent=87 // pred_check
          %p735 = pneg %p352
        $region142: #{_lambda_.1} parent=87 // pred_check_branch
          %737 = sbr.rel (%p735) target = $region144
        $region143: #{_lambda_.1} parent=87 // pred_region
          %739 = dma.done [#allocation23], 576
        $region144: #{_lambda_.1} parent=87 // pred_fallthru
          _
        // Predicated region
        $region145: #{_lambda_.1} parent=87 // pred_check
          %p740 = pneg %p373
        $region146: #{_lambda_.1} parent=87 // pred_check_branch
          %742 = sbr.rel (%p740) target = $region148
        $region147: #{_lambda_.1} parent=87 // pred_region
          %744 = dma.done [#allocation23], 64
        $region148: #{_lambda_.1} parent=87 // pred_fallthru
          _
        // Predicated region
        $region149: #{_lambda_.1} parent=87 // pred_check
          %p745 = pneg %p394
        $region150: #{_lambda_.1} parent=87 // pred_check_branch
          %747 = sbr.rel (%p745) target = $region152
        $region151: #{_lambda_.1} parent=87 // pred_region
          %749 = dma.done [#allocation26], 256
        $region152: #{_lambda_.1} parent=87 // pred_fallthru
          _
        %p750 = scmp.lt.s32.totalorder %s37, 1
        %s751 = scalar_select %p750, %s37, 1
        %s752 = smul.addr %s751, 2
        %s753 = smul.addr %s752, 4
        %s754 = scalar_lea.vmem %s0, %s753
        %p755 = pneg %p58
        %p756 = pneg %p55
        %p757 = pneg %p79
        %p758 = pneg %p76
        %p759 = pneg %p100
        %p760 = pneg %p97
        %p761 = pneg %p121
        %p762 = pneg %p118
        %p763 = pneg %p142
        %p764 = pneg %p139
        %p765 = pneg %p163
        %p766 = pneg %p160
        %p767 = pneg %p184
        %p768 = pneg %p181
        %p769 = pneg %p205
        %p770 = pneg %p202
        %p771 = pneg %p226
        %p772 = pneg %p223
        %p773 = pneg %p247
        %p774 = pneg %p244
        %p775 = pneg %p268
        %p776 = pneg %p265
        %p777 = pneg %p289
        %p778 = pneg %p286
        %p779 = pneg %p310
        %p780 = pneg %p307
        %p781 = pneg %p331
        %p782 = pneg %p328
        %p783 = pneg %p352
        %p784 = pneg %p349
        %p785 = pneg %p373
        %p786 = pneg %p370
        %p787 = pneg %p394
        %p788 = pneg %p391
        %p789 = pneg %p420
        %p790 = pneg %p417
        %p791 = scmp.lt.s32.totalorder %s37, 1
        %s792 = scalar_select %p791, %s37, 1
        %s793 = smul.addr %s792, 4
        %s794 = scalar_lea.vmem %s17, %s793
        %p795 = scmp.lt.s32.totalorder %s37, 1
        %s796 = scalar_select %p795, %s37, 1
        %s797 = smul.addr %s796, 2
        %s798 = smul.addr %s797, 4
        %s799 = scalar_lea.vmem %s0, %s798
        %p800 = scmp.lt.s32.totalorder %s37, 1
        %s801 = scalar_select %p800, %s37, 1
        %s802 = smul.addr %s801, 4
        %s803 = scalar_lea.vmem %s17, %s802
        %v804 = vld [vmem:[%s799] sm:$0xff]
        %v805 = vld [vmem:[#allocation4] sm:$0xff]
        %807 = vst [vmem:[#allocation1] ss:$2 sm:$0xff] %v804
        %v808 = vld.sshfl [vmem:[#allocation1] sm:$0xff pattern:$0x75316420]
        %v809 = vld.sshfl [vmem:[#allocation1 + $0x8] sm:$0xff pattern:$0x75316420]
        %vm810 = vcmask 31744
        %v812 = vsel %vm810, %v805, 0
        %vm814 = vcmask 1043456
        %v815 = vsel %vm814, %v808, 0
        %v817 = vsel %vm814, %v809, 0
        %819 = vmatpush.msra.mxu0 0.0
        %820 = vmatpush.msra.mxu0 0.0
        %821 = vmatpush.msra.mxu0 0.0
        %822 = vmatpush.msra.mxu0 0.0
        %823 = vmatpush.msra.mxu0 0.0
        %824 = vmatpush.msra.mxu0 0.0
        %825 = vmatpush.msra.mxu0 0.0
        %826 = vmatpush.msra.mxu0 0.0
        %827 = vmatpush.msra.mxu0 0.0
        %828 = vmatpush.msra.mxu0 0.0
        %829 = vmatpush.msra.mxu0 0.0
        %830 = vmatpush.msra.mxu0 0.0
        %831 = vmatpush.msra.mxu0 0.0
        %832 = vmatpush.msra.mxu0 0.0
        %833 = vmatpush.msra.mxu0 0.0
        %834 = vmatpush.msra.mxu0 %v815
        %835 = vmatmul.f32.gmra.mxu0 %v812
        %v836 = vpop.f32.mrf.mxu0
        %v837 = vadd.f32 0.0, %v836
        %838 = vdwg.mxu0
        %839 = vmatpush.msra.mxu0 0.0
        %840 = vmatpush.msra.mxu0 0.0
        %841 = vmatpush.msra.mxu0 0.0
        %842 = vmatpush.msra.mxu0 0.0
        %843 = vmatpush.msra.mxu0 0.0
        %844 = vmatpush.msra.mxu0 0.0
        %845 = vmatpush.msra.mxu0 0.0
        %846 = vmatpush.msra.mxu0 0.0
        %847 = vmatpush.msra.mxu0 0.0
        %848 = vmatpush.msra.mxu0 0.0
        %849 = vmatpush.msra.mxu0 0.0
        %850 = vmatpush.msra.mxu0 0.0
        %851 = vmatpush.msra.mxu0 0.0
        %852 = vmatpush.msra.mxu0 0.0
        %853 = vmatpush.msra.mxu0 0.0
        %854 = vmatpush.msra.mxu0 %v817
        %855 = vmatmul.f32.gmra.mxu0 %v812
        %v856 = vpop.f32.mrf.mxu0
        %v857 = vadd.f32 0.0, %v856
        %858 = vdwg.mxu0
        %v859 = vld [vmem:[#allocation2] sm:$0xff]
        %v860 = vld [vmem:[#allocation2 + $0x8] sm:$0xff]
        %v861 = vld [vmem:[#allocation2 + $0x10] sm:$0xff]
        %v862 = vld [vmem:[#allocation2 + $0x18] sm:$0xff]
        %v863 = vld [vmem:[#allocation2 + $0x20] sm:$0xff]
        %v864 = vld [vmem:[#allocation2 + $0x28] sm:$0xff]
        %v865 = vld [vmem:[#allocation2 + $0x30] sm:$0xff]
        %v866 = vld [vmem:[#allocation2 + $0x38] sm:$0xff]
        %v867 = vld [vmem:[#allocation2 + $0x40] sm:$0xff]
        %v868 = vld [vmem:[#allocation2 + $0x48] sm:$0xff]
        %v869 = vld [vmem:[#allocation2 + $0x50] sm:$0xff]
        %v870 = vld [vmem:[#allocation2 + $0x58] sm:$0xff]
        %v871 = vld [vmem:[#allocation2 + $0x60] sm:$0xff]
        %v872 = vld [vmem:[#allocation2 + $0x68] sm:$0xff]
        %v873 = vld [vmem:[#allocation2 + $0x70] sm:$0xff]
        %v874 = vld [vmem:[#allocation2 + $0x78] sm:$0xff]
        %v875 = vld [vmem:[#allocation2 + $0x80] sm:$0xff]
        %v876 = vld [vmem:[#allocation2 + $0x88] sm:$0xff]
        %v877 = vld [vmem:[#allocation2 + $0x90] sm:$0xff]
        %v878 = vld [vmem:[#allocation2 + $0x98] sm:$0xff]
        %v879 = vld [vmem:[#allocation2 + $0xa0] sm:$0xff]
        %v880 = vld [vmem:[#allocation2 + $0xa8] sm:$0xff]
        %v881 = vld [vmem:[#allocation2 + $0xb0] sm:$0xff]
        %v882 = vld [vmem:[#allocation2 + $0xb8] sm:$0xff]
        %v883 = vld [vmem:[#allocation2 + $0xc0] sm:$0xff]
        %v884 = vld [vmem:[#allocation2 + $0xc8] sm:$0xff]
        %v885 = vld [vmem:[#allocation2 + $0xd0] sm:$0xff]
        %v886 = vld [vmem:[#allocation2 + $0xd8] sm:$0xff]
        %v887 = vld [vmem:[#allocation2 + $0xe0] sm:$0xff]
        %v888 = vld [vmem:[#allocation2 + $0xe8] sm:$0xff]
        %v889 = vld [vmem:[#allocation2 + $0xf0] sm:$0xff]
        %v890 = vld [vmem:[#allocation2 + $0xf8] sm:$0xff]
        %v891 = vld [vmem:[#allocation2 + $0x100] sm:$0xff]
        %v892 = vld [vmem:[#allocation2 + $0x108] sm:$0xff]
        %v893 = vld [vmem:[#allocation2 + $0x110] sm:$0xff]
        %v894 = vld [vmem:[#allocation2 + $0x118] sm:$0xff]
        %v895 = vld [vmem:[#allocation2 + $0x120] sm:$0xff]
        %v896 = vld [vmem:[#allocation2 + $0x128] sm:$0xff]
        %v897 = vld [vmem:[#allocation2 + $0x130] sm:$0xff]
        %v898 = vld [vmem:[#allocation2 + $0x138] sm:$0xff]
        %v899 = vld [vmem:[#allocation2 + $0x140] sm:$0xff]
        %v900 = vld [vmem:[#allocation2 + $0x148] sm:$0xff]
        %v901 = vld [vmem:[#allocation2 + $0x150] sm:$0xff]
        %v902 = vld [vmem:[#allocation2 + $0x158] sm:$0xff]
        %v903 = vld [vmem:[#allocation2 + $0x160] sm:$0xff]
        %v904 = vld [vmem:[#allocation2 + $0x168] sm:$0xff]
        %v905 = vld [vmem:[#allocation2 + $0x170] sm:$0xff]
        %v906 = vld [vmem:[#allocation2 + $0x178] sm:$0xff]
        %v907 = vld [vmem:[#allocation2 + $0x180] sm:$0xff]
        %v908 = vld [vmem:[#allocation2 + $0x188] sm:$0xff]
        %v909 = vld [vmem:[#allocation2 + $0x190] sm:$0xff]
        %v910 = vld [vmem:[#allocation2 + $0x198] sm:$0xff]
        %v911 = vld [vmem:[#allocation2 + $0x1a0] sm:$0xff]
        %v912 = vld [vmem:[#allocation2 + $0x1a8] sm:$0xff]
        %v913 = vld [vmem:[#allocation2 + $0x1b0] sm:$0xff]
        %v914 = vld [vmem:[#allocation2 + $0x1b8] sm:$0xff]
        %v915 = vld [vmem:[#allocation2 + $0x1c0] sm:$0xff]
        %v916 = vld [vmem:[#allocation2 + $0x1c8] sm:$0xff]
        %v917 = vld [vmem:[#allocation2 + $0x1d0] sm:$0xff]
        %v918 = vld [vmem:[#allocation2 + $0x1d8] sm:$0xff]
        %v919 = vld [vmem:[#allocation2 + $0x1e0] sm:$0xff]
        %v920 = vld [vmem:[#allocation2 + $0x1e8] sm:$0xff]
        %v921 = vld [vmem:[#allocation2 + $0x1f0] sm:$0xff]
        %v922 = vld [vmem:[#allocation2 + $0x1f8] sm:$0xff]
        %s923 = scalar_lea.vmem [#allocation4], 8
        %v924 = vld [vmem:[%s923] sm:$0xff]
        %925 = vst [vmem:[#allocation1] ss:$2 sm:$0xff] %v804
        %v926 = vld.sshfl [vmem:[#allocation1] sm:$0xff pattern:$0x75316420]
        %v927 = vld.sshfl [vmem:[#allocation1 + $0x8] sm:$0xff pattern:$0x75316420]
        %v929 = vsel %vm810, %v924, 0
        %v931 = vsel %vm814, %v926, 0
        %v933 = vsel %vm814, %v927, 0
        %935 = vmatpush.msra.mxu0 0.0
        %936 = vmatpush.msra.mxu0 0.0
        %937 = vmatpush.msra.mxu0 0.0
        %938 = vmatpush.msra.mxu0 0.0
        %939 = vmatpush.msra.mxu0 0.0
        %940 = vmatpush.msra.mxu0 0.0
        %941 = vmatpush.msra.mxu0 0.0
        %942 = vmatpush.msra.mxu0 0.0
        %943 = vmatpush.msra.mxu0 0.0
        %944 = vmatpush.msra.mxu0 0.0
        %945 = vmatpush.msra.mxu0 0.0
        %946 = vmatpush.msra.mxu0 0.0
        %947 = vmatpush.msra.mxu0 0.0
        %948 = vmatpush.msra.mxu0 0.0
        %949 = vmatpush.msra.mxu0 0.0
        %950 = vmatpush.msra.mxu0 %v931
        %951 = vmatmul.f32.gmra.mxu0 %v929
        %v952 = vpop.f32.mrf.mxu0
        %v953 = vadd.f32 0.0, %v952
        %954 = vdwg.mxu0
        %955 = vmatpush.msra.mxu0 0.0
        %956 = vmatpush.msra.mxu0 0.0
        %957 = vmatpush.msra.mxu0 0.0
        %958 = vmatpush.msra.mxu0 0.0
        %959 = vmatpush.msra.mxu0 0.0
        %960 = vmatpush.msra.mxu0 0.0
        %961 = vmatpush.msra.mxu0 0.0
        %962 = vmatpush.msra.mxu0 0.0
        %963 = vmatpush.msra.mxu0 0.0
        %964 = vmatpush.msra.mxu0 0.0
        %965 = vmatpush.msra.mxu0 0.0
        %966 = vmatpush.msra.mxu0 0.0
        %967 = vmatpush.msra.mxu0 0.0
        %968 = vmatpush.msra.mxu0 0.0
        %969 = vmatpush.msra.mxu0 0.0
        %970 = vmatpush.msra.mxu0 %v933
        %971 = vmatmul.f32.gmra.mxu0 %v929
        %v972 = vpop.f32.mrf.mxu0
        %v973 = vadd.f32 0.0, %v972
        %974 = vdwg.mxu0
        %s975 = scalar_lea.vmem [#allocation2], 512
        %v976 = vld [vmem:[%s975] sm:$0xff]
        %v977 = vld [vmem:[%s975 + $0x8] sm:$0xff]
        %v978 = vld [vmem:[%s975 + $0x10] sm:$0xff]
        %v979 = vld [vmem:[%s975 + $0x18] sm:$0xff]
        %v980 = vld [vmem:[%s975 + $0x20] sm:$0xff]
        %v981 = vld [vmem:[%s975 + $0x28] sm:$0xff]
        %v982 = vld [vmem:[%s975 + $0x30] sm:$0xff]
        %v983 = vld [vmem:[%s975 + $0x38] sm:$0xff]
        %v984 = vld [vmem:[%s975 + $0x40] sm:$0xff]
        %v985 = vld [vmem:[%s975 + $0x48] sm:$0xff]
        %v986 = vld [vmem:[%s975 + $0x50] sm:$0xff]
        %v987 = vld [vmem:[%s975 + $0x58] sm:$0xff]
        %v988 = vld [vmem:[%s975 + $0x60] sm:$0xff]
        %v989 = vld [vmem:[%s975 + $0x68] sm:$0xff]
        %v990 = vld [vmem:[%s975 + $0x70] sm:$0xff]
        %v991 = vld [vmem:[%s975 + $0x78] sm:$0xff]
        %v992 = vld [vmem:[%s975 + $0x80] sm:$0xff]
        %v993 = vld [vmem:[%s975 + $0x88] sm:$0xff]
        %v994 = vld [vmem:[%s975 + $0x90] sm:$0xff]
        %v995 = vld [vmem:[%s975 + $0x98] sm:$0xff]
        %v996 = vld [vmem:[%s975 + $0xa0] sm:$0xff]
        %v997 = vld [vmem:[%s975 + $0xa8] sm:$0xff]
        %v998 = vld [vmem:[%s975 + $0xb0] sm:$0xff]
        %v999 = vld [vmem:[%s975 + $0xb8] sm:$0xff]
        %v1000 = vld [vmem:[%s975 + $0xc0] sm:$0xff]
        %v1001 = vld [vmem:[%s975 + $0xc8] sm:$0xff]
        %v1002 = vld [vmem:[%s975 + $0xd0] sm:$0xff]
        %v1003 = vld [vmem:[%s975 + $0xd8] sm:$0xff]
        %v1004 = vld [vmem:[%s975 + $0xe0] sm:$0xff]
        %v1005 = vld [vmem:[%s975 + $0xe8] sm:$0xff]
        %v1006 = vld [vmem:[%s975 + $0xf0] sm:$0xff]
        %v1007 = vld [vmem:[%s975 + $0xf8] sm:$0xff]
        %v1008 = vld [vmem:[%s975 + $0x100] sm:$0xff]
        %v1009 = vld [vmem:[%s975 + $0x108] sm:$0xff]
        %v1010 = vld [vmem:[%s975 + $0x110] sm:$0xff]
        %v1011 = vld [vmem:[%s975 + $0x118] sm:$0xff]
        %v1012 = vld [vmem:[%s975 + $0x120] sm:$0xff]
        %v1013 = vld [vmem:[%s975 + $0x128] sm:$0xff]
        %v1014 = vld [vmem:[%s975 + $0x130] sm:$0xff]
        %v1015 = vld [vmem:[%s975 + $0x138] sm:$0xff]
        %v1016 = vld [vmem:[%s975 + $0x140] sm:$0xff]
        %v1017 = vld [vmem:[%s975 + $0x148] sm:$0xff]
        %v1018 = vld [vmem:[%s975 + $0x150] sm:$0xff]
        %v1019 = vld [vmem:[%s975 + $0x158] sm:$0xff]
        %v1020 = vld [vmem:[%s975 + $0x160] sm:$0xff]
        %v1021 = vld [vmem:[%s975 + $0x168] sm:$0xff]
        %v1022 = vld [vmem:[%s975 + $0x170] sm:$0xff]
        %v1023 = vld [vmem:[%s975 + $0x178] sm:$0xff]
        %v1024 = vld [vmem:[%s975 + $0x180] sm:$0xff]
        %v1025 = vld [vmem:[%s975 + $0x188] sm:$0xff]
        %v1026 = vld [vmem:[%s975 + $0x190] sm:$0xff]
        %v1027 = vld [vmem:[%s975 + $0x198] sm:$0xff]
        %v1028 = vld [vmem:[%s975 + $0x1a0] sm:$0xff]
        %v1029 = vld [vmem:[%s975 + $0x1a8] sm:$0xff]
        %v1030 = vld [vmem:[%s975 + $0x1b0] sm:$0xff]
        %v1031 = vld [vmem:[%s975 + $0x1b8] sm:$0xff]
        %v1032 = vld [vmem:[%s975 + $0x1c0] sm:$0xff]
        %v1033 = vld [vmem:[%s975 + $0x1c8] sm:$0xff]
        %v1034 = vld [vmem:[%s975 + $0x1d0] sm:$0xff]
        %v1035 = vld [vmem:[%s975 + $0x1d8] sm:$0xff]
        %v1036 = vld [vmem:[%s975 + $0x1e0] sm:$0xff]
        %v1037 = vld [vmem:[%s975 + $0x1e8] sm:$0xff]
        %v1038 = vld [vmem:[%s975 + $0x1f0] sm:$0xff]
        %v1039 = vld [vmem:[%s975 + $0x1f8] sm:$0xff]
        %1040 = vmatpush.msra.mxu0 %v1006
        %1041 = vmatpush.msra.mxu0 %v1004
        %1042 = vmatpush.msra.mxu0 %v1002
        %1043 = vmatpush.msra.mxu0 %v1000
        %1044 = vmatpush.msra.mxu0 %v998
        %1045 = vmatpush.msra.mxu0 %v996
        %1046 = vmatpush.msra.mxu0 %v994
        %1047 = vmatpush.msra.mxu0 %v992
        %1048 = vmatpush.msra.mxu0 %v990
        %1049 = vmatpush.msra.mxu0 %v988
        %1050 = vmatpush.msra.mxu0 %v986
        %1051 = vmatpush.msra.mxu0 %v984
        %1052 = vmatpush.msra.mxu0 %v982
        %1053 = vmatpush.msra.mxu0 %v980
        %1054 = vmatpush.msra.mxu0 %v978
        %1055 = vmatpush.msra.mxu0 %v976
        %1056 = vmatmul.f32.gmra.mxu0 %v953
        %v1057 = vpop.f32.mrf.mxu0
        %v1058 = vadd.f32 0.0, %v1057
        %1059 = vdwg.mxu0
        %1060 = vmatpush.msra.mxu0 %v1038
        %1061 = vmatpush.msra.mxu0 %v1036
        %1062 = vmatpush.msra.mxu0 %v1034
        %1063 = vmatpush.msra.mxu0 %v1032
        %1064 = vmatpush.msra.mxu0 %v1030
        %1065 = vmatpush.msra.mxu0 %v1028
        %1066 = vmatpush.msra.mxu0 %v1026
        %1067 = vmatpush.msra.mxu0 %v1024
        %1068 = vmatpush.msra.mxu0 %v1022
        %1069 = vmatpush.msra.mxu0 %v1020
        %1070 = vmatpush.msra.mxu0 %v1018
        %1071 = vmatpush.msra.mxu0 %v1016
        %1072 = vmatpush.msra.mxu0 %v1014
        %1073 = vmatpush.msra.mxu0 %v1012
        %1074 = vmatpush.msra.mxu0 %v1010
        %1075 = vmatpush.msra.mxu0 %v1008
        %1076 = vmatmul.f32.gmra.mxu0 %v973
        %v1077 = vpop.f32.mrf.mxu0
        %v1078 = vadd.f32 %v1058, %v1077
        %1079 = vdwg.mxu0
        %1080 = vmatpush.msra.mxu0 %v1007
        %1081 = vmatpush.msra.mxu0 %v1005
        %1082 = vmatpush.msra.mxu0 %v1003
        %1083 = vmatpush.msra.mxu0 %v1001
        %1084 = vmatpush.msra.mxu0 %v999
        %1085 = vmatpush.msra.mxu0 %v997
        %1086 = vmatpush.msra.mxu0 %v995
        %1087 = vmatpush.msra.mxu0 %v993
        %1088 = vmatpush.msra.mxu0 %v991
        %1089 = vmatpush.msra.mxu0 %v989
        %1090 = vmatpush.msra.mxu0 %v987
        %1091 = vmatpush.msra.mxu0 %v985
        %1092 = vmatpush.msra.mxu0 %v983
        %1093 = vmatpush.msra.mxu0 %v981
        %1094 = vmatpush.msra.mxu0 %v979
        %1095 = vmatpush.msra.mxu0 %v977
        %1096 = vmatmul.f32.gmra.mxu0 %v953
        %v1097 = vpop.f32.mrf.mxu0
        %v1098 = vadd.f32 0.0, %v1097
        %1099 = vdwg.mxu0
        %1100 = vmatpush.msra.mxu0 %v1039
        %1101 = vmatpush.msra.mxu0 %v1037
        %1102 = vmatpush.msra.mxu0 %v1035
        %1103 = vmatpush.msra.mxu0 %v1033
        %1104 = vmatpush.msra.mxu0 %v1031
        %1105 = vmatpush.msra.mxu0 %v1029
        %1106 = vmatpush.msra.mxu0 %v1027
        %1107 = vmatpush.msra.mxu0 %v1025
        %1108 = vmatpush.msra.mxu0 %v1023
        %1109 = vmatpush.msra.mxu0 %v1021
        %1110 = vmatpush.msra.mxu0 %v1019
        %1111 = vmatpush.msra.mxu0 %v1017
        %1112 = vmatpush.msra.mxu0 %v1015
        %1113 = vmatpush.msra.mxu0 %v1013
        %1114 = vmatpush.msra.mxu0 %v1011
        %1115 = vmatpush.msra.mxu0 %v1009
        %1116 = vmatmul.f32.gmra.mxu0 %v973
        %v1117 = vpop.f32.mrf.mxu0
        %v1118 = vadd.f32 %v1098, %v1117
        %1119 = vdwg.mxu0
        %1120 = vmatpush.msra.mxu0 %v889
        %1121 = vmatpush.msra.mxu0 %v887
        %1122 = vmatpush.msra.mxu0 %v885
        %1123 = vmatpush.msra.mxu0 %v883
        %1124 = vmatpush.msra.mxu0 %v881
        %1125 = vmatpush.msra.mxu0 %v879
        %1126 = vmatpush.msra.mxu0 %v877
        %1127 = vmatpush.msra.mxu0 %v875
        %1128 = vmatpush.msra.mxu0 %v873
        %1129 = vmatpush.msra.mxu0 %v871
        %1130 = vmatpush.msra.mxu0 %v869
        %1131 = vmatpush.msra.mxu0 %v867
        %1132 = vmatpush.msra.mxu0 %v865
        %1133 = vmatpush.msra.mxu0 %v863
        %1134 = vmatpush.msra.mxu0 %v861
        %1135 = vmatpush.msra.mxu0 %v859
        %1136 = vmatmul.f32.gmra.mxu0 %v837
        %v1137 = vpop.f32.mrf.mxu0
        %v1138 = vadd.f32 %v1078, %v1137
        %1139 = vdwg.mxu0
        %1140 = vmatpush.msra.mxu0 %v921
        %1141 = vmatpush.msra.mxu0 %v919
        %1142 = vmatpush.msra.mxu0 %v917
        %1143 = vmatpush.msra.mxu0 %v915
        %1144 = vmatpush.msra.mxu0 %v913
        %1145 = vmatpush.msra.mxu0 %v911
        %1146 = vmatpush.msra.mxu0 %v909
        %1147 = vmatpush.msra.mxu0 %v907
        %1148 = vmatpush.msra.mxu0 %v905
        %1149 = vmatpush.msra.mxu0 %v903
        %1150 = vmatpush.msra.mxu0 %v901
        %1151 = vmatpush.msra.mxu0 %v899
        %1152 = vmatpush.msra.mxu0 %v897
        %1153 = vmatpush.msra.mxu0 %v895
        %1154 = vmatpush.msra.mxu0 %v893
        %1155 = vmatpush.msra.mxu0 %v891
        %1156 = vmatmul.f32.gmra.mxu0 %v857
        %v1157 = vpop.f32.mrf.mxu0
        %v1158 = vadd.f32 %v1138, %v1157
        %1159 = vdwg.mxu0
        %1160 = vmatpush.msra.mxu0 %v890
        %1161 = vmatpush.msra.mxu0 %v888
        %1162 = vmatpush.msra.mxu0 %v886
        %1163 = vmatpush.msra.mxu0 %v884
        %1164 = vmatpush.msra.mxu0 %v882
        %1165 = vmatpush.msra.mxu0 %v880
        %1166 = vmatpush.msra.mxu0 %v878
        %1167 = vmatpush.msra.mxu0 %v876
        %1168 = vmatpush.msra.mxu0 %v874
        %1169 = vmatpush.msra.mxu0 %v872
        %1170 = vmatpush.msra.mxu0 %v870
        %1171 = vmatpush.msra.mxu0 %v868
        %1172 = vmatpush.msra.mxu0 %v866
        %1173 = vmatpush.msra.mxu0 %v864
        %1174 = vmatpush.msra.mxu0 %v862
        %1175 = vmatpush.msra.mxu0 %v860
        %1176 = vmatmul.f32.gmra.mxu0 %v837
        %v1177 = vpop.f32.mrf.mxu0
        %v1178 = vadd.f32 %v1118, %v1177
        %1179 = vdwg.mxu0
        %1180 = vmatpush.msra.mxu0 %v922
        %1181 = vmatpush.msra.mxu0 %v920
        %1182 = vmatpush.msra.mxu0 %v918
        %1183 = vmatpush.msra.mxu0 %v916
        %1184 = vmatpush.msra.mxu0 %v914
        %1185 = vmatpush.msra.mxu0 %v912
        %1186 = vmatpush.msra.mxu0 %v910
        %1187 = vmatpush.msra.mxu0 %v908
        %1188 = vmatpush.msra.mxu0 %v906
        %1189 = vmatpush.msra.mxu0 %v904
        %1190 = vmatpush.msra.mxu0 %v902
        %1191 = vmatpush.msra.mxu0 %v900
        %1192 = vmatpush.msra.mxu0 %v898
        %1193 = vmatpush.msra.mxu0 %v896
        %1194 = vmatpush.msra.mxu0 %v894
        %1195 = vmatpush.msra.mxu0 %v892
        %1196 = vmatmul.f32.gmra.mxu0 %v857
        %v1197 = vpop.f32.mrf.mxu0
        %v1198 = vadd.f32 %v1178, %v1197
        %1199 = vdwg.mxu0
        %s1200 = scalar_lea.vmem [#allocation4], 16
        %v1201 = vld [vmem:[%s1200] sm:$0xff]
        %1202 = vst [vmem:[#allocation1] ss:$2 sm:$0xff] %v804
        %v1203 = vld.sshfl [vmem:[#allocation1] sm:$0xff pattern:$0x75316420]
        %v1204 = vld.sshfl [vmem:[#allocation1 + $0x8] sm:$0xff pattern:$0x75316420]
        %v1206 = vsel %vm810, %v1201, 0
        %v1208 = vsel %vm814, %v1203, 0
        %v1210 = vsel %vm814, %v1204, 0
        %1212 = vmatpush.msra.mxu0 0.0
        %1213 = vmatpush.msra.mxu0 0.0
        %1214 = vmatpush.msra.mxu0 0.0
        %1215 = vmatpush.msra.mxu0 0.0
        %1216 = vmatpush.msra.mxu0 0.0
        %1217 = vmatpush.msra.mxu0 0.0
        %1218 = vmatpush.msra.mxu0 0.0
        %1219 = vmatpush.msra.mxu0 0.0
        %1220 = vmatpush.msra.mxu0 0.0
        %1221 = vmatpush.msra.mxu0 0.0
        %1222 = vmatpush.msra.mxu0 0.0
        %1223 = vmatpush.msra.mxu0 0.0
        %1224 = vmatpush.msra.mxu0 0.0
        %1225 = vmatpush.msra.mxu0 0.0
        %1226 = vmatpush.msra.mxu0 0.0
        %1227 = vmatpush.msra.mxu0 %v1208
        %1228 = vmatmul.f32.gmra.mxu0 %v1206
        %v1229 = vpop.f32.mrf.mxu0
        %v1230 = vadd.f32 0.0, %v1229
        %1231 = vdwg.mxu0
        %1232 = vmatpush.msra.mxu0 0.0
        %1233 = vmatpush.msra.mxu0 0.0
        %1234 = vmatpush.msra.mxu0 0.0
        %1235 = vmatpush.msra.mxu0 0.0
        %1236 = vmatpush.msra.mxu0 0.0
        %1237 = vmatpush.msra.mxu0 0.0
        %1238 = vmatpush.msra.mxu0 0.0
        %1239 = vmatpush.msra.mxu0 0.0
        %1240 = vmatpush.msra.mxu0 0.0
        %1241 = vmatpush.msra.mxu0 0.0
        %1242 = vmatpush.msra.mxu0 0.0
        %1243 = vmatpush.msra.mxu0 0.0
        %1244 = vmatpush.msra.mxu0 0.0
        %1245 = vmatpush.msra.mxu0 0.0
        %1246 = vmatpush.msra.mxu0 0.0
        %1247 = vmatpush.msra.mxu0 %v1210
        %1248 = vmatmul.f32.gmra.mxu0 %v1206
        %v1249 = vpop.f32.mrf.mxu0
        %v1250 = vadd.f32 0.0, %v1249
        %1251 = vdwg.mxu0
        %s1252 = scalar_lea.vmem [#allocation2], 1024
        %v1253 = vld [vmem:[%s1252] sm:$0xff]
        %v1254 = vld [vmem:[%s1252 + $0x8] sm:$0xff]
        %v1255 = vld [vmem:[%s1252 + $0x10] sm:$0xff]
        %v1256 = vld [vmem:[%s1252 + $0x18] sm:$0xff]
        %v1257 = vld [vmem:[%s1252 + $0x20] sm:$0xff]
        %v1258 = vld [vmem:[%s1252 + $0x28] sm:$0xff]
        %v1259 = vld [vmem:[%s1252 + $0x30] sm:$0xff]
        %v1260 = vld [vmem:[%s1252 + $0x38] sm:$0xff]
        %v1261 = vld [vmem:[%s1252 + $0x40] sm:$0xff]
        %v1262 = vld [vmem:[%s1252 + $0x48] sm:$0xff]
        %v1263 = vld [vmem:[%s1252 + $0x50] sm:$0xff]
        %v1264 = vld [vmem:[%s1252 + $0x58] sm:$0xff]
        %v1265 = vld [vmem:[%s1252 + $0x60] sm:$0xff]
        %v1266 = vld [vmem:[%s1252 + $0x68] sm:$0xff]
        %v1267 = vld [vmem:[%s1252 + $0x70] sm:$0xff]
        %v1268 = vld [vmem:[%s1252 + $0x78] sm:$0xff]
        %v1269 = vld [vmem:[%s1252 + $0x80] sm:$0xff]
        %v1270 = vld [vmem:[%s1252 + $0x88] sm:$0xff]
        %v1271 = vld [vmem:[%s1252 + $0x90] sm:$0xff]
        %v1272 = vld [vmem:[%s1252 + $0x98] sm:$0xff]
        %v1273 = vld [vmem:[%s1252 + $0xa0] sm:$0xff]
        %v1274 = vld [vmem:[%s1252 + $0xa8] sm:$0xff]
        %v1275 = vld [vmem:[%s1252 + $0xb0] sm:$0xff]
        %v1276 = vld [vmem:[%s1252 + $0xb8] sm:$0xff]
        %v1277 = vld [vmem:[%s1252 + $0xc0] sm:$0xff]
        %v1278 = vld [vmem:[%s1252 + $0xc8] sm:$0xff]
        %v1279 = vld [vmem:[%s1252 + $0xd0] sm:$0xff]
        %v1280 = vld [vmem:[%s1252 + $0xd8] sm:$0xff]
        %v1281 = vld [vmem:[%s1252 + $0xe0] sm:$0xff]
        %v1282 = vld [vmem:[%s1252 + $0xe8] sm:$0xff]
        %v1283 = vld [vmem:[%s1252 + $0xf0] sm:$0xff]
        %v1284 = vld [vmem:[%s1252 + $0xf8] sm:$0xff]
        %v1285 = vld [vmem:[%s1252 + $0x100] sm:$0xff]
        %v1286 = vld [vmem:[%s1252 + $0x108] sm:$0xff]
        %v1287 = vld [vmem:[%s1252 + $0x110] sm:$0xff]
        %v1288 = vld [vmem:[%s1252 + $0x118] sm:$0xff]
        %v1289 = vld [vmem:[%s1252 + $0x120] sm:$0xff]
        %v1290 = vld [vmem:[%s1252 + $0x128] sm:$0xff]
        %v1291 = vld [vmem:[%s1252 + $0x130] sm:$0xff]
        %v1292 = vld [vmem:[%s1252 + $0x138] sm:$0xff]
        %v1293 = vld [vmem:[%s1252 + $0x140] sm:$0xff]
        %v1294 = vld [vmem:[%s1252 + $0x148] sm:$0xff]
        %v1295 = vld [vmem:[%s1252 + $0x150] sm:$0xff]
        %v1296 = vld [vmem:[%s1252 + $0x158] sm:$0xff]
        %v1297 = vld [vmem:[%s1252 + $0x160] sm:$0xff]
        %v1298 = vld [vmem:[%s1252 + $0x168] sm:$0xff]
        %v1299 = vld [vmem:[%s1252 + $0x170] sm:$0xff]
        %v1300 = vld [vmem:[%s1252 + $0x178] sm:$0xff]
        %v1301 = vld [vmem:[%s1252 + $0x180] sm:$0xff]
        %v1302 = vld [vmem:[%s1252 + $0x188] sm:$0xff]
        %v1303 = vld [vmem:[%s1252 + $0x190] sm:$0xff]
        %v1304 = vld [vmem:[%s1252 + $0x198] sm:$0xff]
        %v1305 = vld [vmem:[%s1252 + $0x1a0] sm:$0xff]
        %v1306 = vld [vmem:[%s1252 + $0x1a8] sm:$0xff]
        %v1307 = vld [vmem:[%s1252 + $0x1b0] sm:$0xff]
        %v1308 = vld [vmem:[%s1252 + $0x1b8] sm:$0xff]
        %v1309 = vld [vmem:[%s1252 + $0x1c0] sm:$0xff]
        %v1310 = vld [vmem:[%s1252 + $0x1c8] sm:$0xff]
        %v1311 = vld [vmem:[%s1252 + $0x1d0] sm:$0xff]
        %v1312 = vld [vmem:[%s1252 + $0x1d8] sm:$0xff]
        %v1313 = vld [vmem:[%s1252 + $0x1e0] sm:$0xff]
        %v1314 = vld [vmem:[%s1252 + $0x1e8] sm:$0xff]
        %v1315 = vld [vmem:[%s1252 + $0x1f0] sm:$0xff]
        %v1316 = vld [vmem:[%s1252 + $0x1f8] sm:$0xff]
        %1317 = vmatpush.msra.mxu0 %v1283
        %1318 = vmatpush.msra.mxu0 %v1281
        %1319 = vmatpush.msra.mxu0 %v1279
        %1320 = vmatpush.msra.mxu0 %v1277
        %1321 = vmatpush.msra.mxu0 %v1275
        %1322 = vmatpush.msra.mxu0 %v1273
        %1323 = vmatpush.msra.mxu0 %v1271
        %1324 = vmatpush.msra.mxu0 %v1269
        %1325 = vmatpush.msra.mxu0 %v1267
        %1326 = vmatpush.msra.mxu0 %v1265
        %1327 = vmatpush.msra.mxu0 %v1263
        %1328 = vmatpush.msra.mxu0 %v1261
        %1329 = vmatpush.msra.mxu0 %v1259
        %1330 = vmatpush.msra.mxu0 %v1257
        %1331 = vmatpush.msra.mxu0 %v1255
        %1332 = vmatpush.msra.mxu0 %v1253
        %1333 = vmatmul.f32.gmra.mxu0 %v1230
        %v1334 = vpop.f32.mrf.mxu0
        %v1335 = vadd.f32 0.0, %v1334
        %1336 = vdwg.mxu0
        %1337 = vmatpush.msra.mxu0 %v1315
        %1338 = vmatpush.msra.mxu0 %v1313
        %1339 = vmatpush.msra.mxu0 %v1311
        %1340 = vmatpush.msra.mxu0 %v1309
        %1341 = vmatpush.msra.mxu0 %v1307
        %1342 = vmatpush.msra.mxu0 %v1305
        %1343 = vmatpush.msra.mxu0 %v1303
        %1344 = vmatpush.msra.mxu0 %v1301
        %1345 = vmatpush.msra.mxu0 %v1299
        %1346 = vmatpush.msra.mxu0 %v1297
        %1347 = vmatpush.msra.mxu0 %v1295
        %1348 = vmatpush.msra.mxu0 %v1293
        %1349 = vmatpush.msra.mxu0 %v1291
        %1350 = vmatpush.msra.mxu0 %v1289
        %1351 = vmatpush.msra.mxu0 %v1287
        %1352 = vmatpush.msra.mxu0 %v1285
        %1353 = vmatmul.f32.gmra.mxu0 %v1250
        %v1354 = vpop.f32.mrf.mxu0
        %v1355 = vadd.f32 %v1335, %v1354
        %1356 = vdwg.mxu0
        %1357 = vmatpush.msra.mxu0 %v1284
        %1358 = vmatpush.msra.mxu0 %v1282
        %1359 = vmatpush.msra.mxu0 %v1280
        %1360 = vmatpush.msra.mxu0 %v1278
        %1361 = vmatpush.msra.mxu0 %v1276
        %1362 = vmatpush.msra.mxu0 %v1274
        %1363 = vmatpush.msra.mxu0 %v1272
        %1364 = vmatpush.msra.mxu0 %v1270
        %1365 = vmatpush.msra.mxu0 %v1268
        %1366 = vmatpush.msra.mxu0 %v1266
        %1367 = vmatpush.msra.mxu0 %v1264
        %1368 = vmatpush.msra.mxu0 %v1262
        %1369 = vmatpush.msra.mxu0 %v1260
        %1370 = vmatpush.msra.mxu0 %v1258
        %1371 = vmatpush.msra.mxu0 %v1256
        %1372 = vmatpush.msra.mxu0 %v1254
        %1373 = vmatmul.f32.gmra.mxu0 %v1230
        %v1374 = vpop.f32.mrf.mxu0
        %v1375 = vadd.f32 0.0, %v1374
        %1376 = vdwg.mxu0
        %1377 = vmatpush.msra.mxu0 %v1316
        %1378 = vmatpush.msra.mxu0 %v1314
        %1379 = vmatpush.msra.mxu0 %v1312
        %1380 = vmatpush.msra.mxu0 %v1310
        %1381 = vmatpush.msra.mxu0 %v1308
        %1382 = vmatpush.msra.mxu0 %v1306
        %1383 = vmatpush.msra.mxu0 %v1304
        %1384 = vmatpush.msra.mxu0 %v1302
        %1385 = vmatpush.msra.mxu0 %v1300
        %1386 = vmatpush.msra.mxu0 %v1298
        %1387 = vmatpush.msra.mxu0 %v1296
        %1388 = vmatpush.msra.mxu0 %v1294
        %1389 = vmatpush.msra.mxu0 %v1292
        %1390 = vmatpush.msra.mxu0 %v1290
        %1391 = vmatpush.msra.mxu0 %v1288
        %1392 = vmatpush.msra.mxu0 %v1286
        %1393 = vmatmul.f32.gmra.mxu0 %v1250
        %v1394 = vpop.f32.mrf.mxu0
        %v1395 = vadd.f32 %v1375, %v1394
        %1396 = vdwg.mxu0
        %v1397 = vadd.f32 %v1158, %v1355
        %v1398 = vadd.f32 %v1198, %v1395
        %s1399 = scalar_lea.vmem [#allocation4], 24
        %v1400 = vld [vmem:[%s1399] sm:$0xff]
        %1401 = vst [vmem:[#allocation1] ss:$2 sm:$0xff] %v804
        %v1402 = vld.sshfl [vmem:[#allocation1] sm:$0xff pattern:$0x75316420]
        %v1403 = vld.sshfl [vmem:[#allocation1 + $0x8] sm:$0xff pattern:$0x75316420]
        %v1405 = vsel %vm810, %v1400, 0
        %v1407 = vsel %vm814, %v1402, 0
        %v1409 = vsel %vm814, %v1403, 0
        %1411 = vmatpush.msra.mxu0 0.0
        %1412 = vmatpush.msra.mxu0 0.0
        %1413 = vmatpush.msra.mxu0 0.0
        %1414 = vmatpush.msra.mxu0 0.0
        %1415 = vmatpush.msra.mxu0 0.0
        %1416 = vmatpush.msra.mxu0 0.0
        %1417 = vmatpush.msra.mxu0 0.0
        %1418 = vmatpush.msra.mxu0 0.0
        %1419 = vmatpush.msra.mxu0 0.0
        %1420 = vmatpush.msra.mxu0 0.0
        %1421 = vmatpush.msra.mxu0 0.0
        %1422 = vmatpush.msra.mxu0 0.0
        %1423 = vmatpush.msra.mxu0 0.0
        %1424 = vmatpush.msra.mxu0 0.0
        %1425 = vmatpush.msra.mxu0 0.0
        %1426 = vmatpush.msra.mxu0 %v1407
        %1427 = vmatmul.f32.gmra.mxu0 %v1405
        %v1428 = vpop.f32.mrf.mxu0
        %v1429 = vadd.f32 0.0, %v1428
        %1430 = vdwg.mxu0
        %1431 = vmatpush.msra.mxu0 0.0
        %1432 = vmatpush.msra.mxu0 0.0
        %1433 = vmatpush.msra.mxu0 0.0
        %1434 = vmatpush.msra.mxu0 0.0
        %1435 = vmatpush.msra.mxu0 0.0
        %1436 = vmatpush.msra.mxu0 0.0
        %1437 = vmatpush.msra.mxu0 0.0
        %1438 = vmatpush.msra.mxu0 0.0
        %1439 = vmatpush.msra.mxu0 0.0
        %1440 = vmatpush.msra.mxu0 0.0
        %1441 = vmatpush.msra.mxu0 0.0
        %1442 = vmatpush.msra.mxu0 0.0
        %1443 = vmatpush.msra.mxu0 0.0
        %1444 = vmatpush.msra.mxu0 0.0
        %1445 = vmatpush.msra.mxu0 0.0
        %1446 = vmatpush.msra.mxu0 %v1409
        %1447 = vmatmul.f32.gmra.mxu0 %v1405
        %v1448 = vpop.f32.mrf.mxu0
        %v1449 = vadd.f32 0.0, %v1448
        %1450 = vdwg.mxu0
        %s1451 = scalar_lea.vmem [#allocation2], 1536
        %v1452 = vld [vmem:[%s1451] sm:$0xff]
        %v1453 = vld [vmem:[%s1451 + $0x8] sm:$0xff]
        %v1454 = vld [vmem:[%s1451 + $0x10] sm:$0xff]
        %v1455 = vld [vmem:[%s1451 + $0x18] sm:$0xff]
        %v1456 = vld [vmem:[%s1451 + $0x20] sm:$0xff]
        %v1457 = vld [vmem:[%s1451 + $0x28] sm:$0xff]
        %v1458 = vld [vmem:[%s1451 + $0x30] sm:$0xff]
        %v1459 = vld [vmem:[%s1451 + $0x38] sm:$0xff]
        %v1460 = vld [vmem:[%s1451 + $0x40] sm:$0xff]
        %v1461 = vld [vmem:[%s1451 + $0x48] sm:$0xff]
        %v1462 = vld [vmem:[%s1451 + $0x50] sm:$0xff]
        %v1463 = vld [vmem:[%s1451 + $0x58] sm:$0xff]
        %v1464 = vld [vmem:[%s1451 + $0x60] sm:$0xff]
        %v1465 = vld [vmem:[%s1451 + $0x68] sm:$0xff]
        %v1466 = vld [vmem:[%s1451 + $0x70] sm:$0xff]
        %v1467 = vld [vmem:[%s1451 + $0x78] sm:$0xff]
        %v1468 = vld [vmem:[%s1451 + $0x80] sm:$0xff]
        %v1469 = vld [vmem:[%s1451 + $0x88] sm:$0xff]
        %v1470 = vld [vmem:[%s1451 + $0x90] sm:$0xff]
        %v1471 = vld [vmem:[%s1451 + $0x98] sm:$0xff]
        %v1472 = vld [vmem:[%s1451 + $0xa0] sm:$0xff]
        %v1473 = vld [vmem:[%s1451 + $0xa8] sm:$0xff]
        %v1474 = vld [vmem:[%s1451 + $0xb0] sm:$0xff]
        %v1475 = vld [vmem:[%s1451 + $0xb8] sm:$0xff]
        %v1476 = vld [vmem:[%s1451 + $0xc0] sm:$0xff]
        %v1477 = vld [vmem:[%s1451 + $0xc8] sm:$0xff]
        %v1478 = vld [vmem:[%s1451 + $0xd0] sm:$0xff]
        %v1479 = vld [vmem:[%s1451 + $0xd8] sm:$0xff]
        %v1480 = vld [vmem:[%s1451 + $0xe0] sm:$0xff]
        %v1481 = vld [vmem:[%s1451 + $0xe8] sm:$0xff]
        %v1482 = vld [vmem:[%s1451 + $0xf0] sm:$0xff]
        %v1483 = vld [vmem:[%s1451 + $0xf8] sm:$0xff]
        %v1484 = vld [vmem:[%s1451 + $0x100] sm:$0xff]
        %v1485 = vld [vmem:[%s1451 + $0x108] sm:$0xff]
        %v1486 = vld [vmem:[%s1451 + $0x110] sm:$0xff]
        %v1487 = vld [vmem:[%s1451 + $0x118] sm:$0xff]
        %v1488 = vld [vmem:[%s1451 + $0x120] sm:$0xff]
        %v1489 = vld [vmem:[%s1451 + $0x128] sm:$0xff]
        %v1490 = vld [vmem:[%s1451 + $0x130] sm:$0xff]
        %v1491 = vld [vmem:[%s1451 + $0x138] sm:$0xff]
        %v1492 = vld [vmem:[%s1451 + $0x140] sm:$0xff]
        %v1493 = vld [vmem:[%s1451 + $0x148] sm:$0xff]
        %v1494 = vld [vmem:[%s1451 + $0x150] sm:$0xff]
        %v1495 = vld [vmem:[%s1451 + $0x158] sm:$0xff]
        %v1496 = vld [vmem:[%s1451 + $0x160] sm:$0xff]
        %v1497 = vld [vmem:[%s1451 + $0x168] sm:$0xff]
        %v1498 = vld [vmem:[%s1451 + $0x170] sm:$0xff]
        %v1499 = vld [vmem:[%s1451 + $0x178] sm:$0xff]
        %v1500 = vld [vmem:[%s1451 + $0x180] sm:$0xff]
        %v1501 = vld [vmem:[%s1451 + $0x188] sm:$0xff]
        %v1502 = vld [vmem:[%s1451 + $0x190] sm:$0xff]
        %v1503 = vld [vmem:[%s1451 + $0x198] sm:$0xff]
        %v1504 = vld [vmem:[%s1451 + $0x1a0] sm:$0xff]
        %v1505 = vld [vmem:[%s1451 + $0x1a8] sm:$0xff]
        %v1506 = vld [vmem:[%s1451 + $0x1b0] sm:$0xff]
        %v1507 = vld [vmem:[%s1451 + $0x1b8] sm:$0xff]
        %v1508 = vld [vmem:[%s1451 + $0x1c0] sm:$0xff]
        %v1509 = vld [vmem:[%s1451 + $0x1c8] sm:$0xff]
        %v1510 = vld [vmem:[%s1451 + $0x1d0] sm:$0xff]
        %v1511 = vld [vmem:[%s1451 + $0x1d8] sm:$0xff]
        %v1512 = vld [vmem:[%s1451 + $0x1e0] sm:$0xff]
        %v1513 = vld [vmem:[%s1451 + $0x1e8] sm:$0xff]
        %v1514 = vld [vmem:[%s1451 + $0x1f0] sm:$0xff]
        %v1515 = vld [vmem:[%s1451 + $0x1f8] sm:$0xff]
        %1516 = vmatpush.msra.mxu0 %v1482
        %1517 = vmatpush.msra.mxu0 %v1480
        %1518 = vmatpush.msra.mxu0 %v1478
        %1519 = vmatpush.msra.mxu0 %v1476
        %1520 = vmatpush.msra.mxu0 %v1474
        %1521 = vmatpush.msra.mxu0 %v1472
        %1522 = vmatpush.msra.mxu0 %v1470
        %1523 = vmatpush.msra.mxu0 %v1468
        %1524 = vmatpush.msra.mxu0 %v1466
        %1525 = vmatpush.msra.mxu0 %v1464
        %1526 = vmatpush.msra.mxu0 %v1462
        %1527 = vmatpush.msra.mxu0 %v1460
        %1528 = vmatpush.msra.mxu0 %v1458
        %1529 = vmatpush.msra.mxu0 %v1456
        %1530 = vmatpush.msra.mxu0 %v1454
        %1531 = vmatpush.msra.mxu0 %v1452
        %1532 = vmatmul.f32.gmra.mxu0 %v1429
        %v1533 = vpop.f32.mrf.mxu0
        %v1534 = vadd.f32 0.0, %v1533
        %1535 = vdwg.mxu0
        %1536 = vmatpush.msra.mxu0 %v1514
        %1537 = vmatpush.msra.mxu0 %v1512
        %1538 = vmatpush.msra.mxu0 %v1510
        %1539 = vmatpush.msra.mxu0 %v1508
        %1540 = vmatpush.msra.mxu0 %v1506
        %1541 = vmatpush.msra.mxu0 %v1504
        %1542 = vmatpush.msra.mxu0 %v1502
        %1543 = vmatpush.msra.mxu0 %v1500
        %1544 = vmatpush.msra.mxu0 %v1498
        %1545 = vmatpush.msra.mxu0 %v1496
        %1546 = vmatpush.msra.mxu0 %v1494
        %1547 = vmatpush.msra.mxu0 %v1492
        %1548 = vmatpush.msra.mxu0 %v1490
        %1549 = vmatpush.msra.mxu0 %v1488
        %1550 = vmatpush.msra.mxu0 %v1486
        %1551 = vmatpush.msra.mxu0 %v1484
        %1552 = vmatmul.f32.gmra.mxu0 %v1449
        %v1553 = vpop.f32.mrf.mxu0
        %v1554 = vadd.f32 %v1534, %v1553
        %1555 = vdwg.mxu0
        %1556 = vmatpush.msra.mxu0 %v1483
        %1557 = vmatpush.msra.mxu0 %v1481
        %1558 = vmatpush.msra.mxu0 %v1479
        %1559 = vmatpush.msra.mxu0 %v1477
        %1560 = vmatpush.msra.mxu0 %v1475
        %1561 = vmatpush.msra.mxu0 %v1473
        %1562 = vmatpush.msra.mxu0 %v1471
        %1563 = vmatpush.msra.mxu0 %v1469
        %1564 = vmatpush.msra.mxu0 %v1467
        %1565 = vmatpush.msra.mxu0 %v1465
        %1566 = vmatpush.msra.mxu0 %v1463
        %1567 = vmatpush.msra.mxu0 %v1461
        %1568 = vmatpush.msra.mxu0 %v1459
        %1569 = vmatpush.msra.mxu0 %v1457
        %1570 = vmatpush.msra.mxu0 %v1455
        %1571 = vmatpush.msra.mxu0 %v1453
        %1572 = vmatmul.f32.gmra.mxu0 %v1429
        %v1573 = vpop.f32.mrf.mxu0
        %v1574 = vadd.f32 0.0, %v1573
        %1575 = vdwg.mxu0
        %1576 = vmatpush.msra.mxu0 %v1515
        %1577 = vmatpush.msra.mxu0 %v1513
        %1578 = vmatpush.msra.mxu0 %v1511
        %1579 = vmatpush.msra.mxu0 %v1509
        %1580 = vmatpush.msra.mxu0 %v1507
        %1581 = vmatpush.msra.mxu0 %v1505
        %1582 = vmatpush.msra.mxu0 %v1503
        %1583 = vmatpush.msra.mxu0 %v1501
        %1584 = vmatpush.msra.mxu0 %v1499
        %1585 = vmatpush.msra.mxu0 %v1497
        %1586 = vmatpush.msra.mxu0 %v1495
        %1587 = vmatpush.msra.mxu0 %v1493
        %1588 = vmatpush.msra.mxu0 %v1491
        %1589 = vmatpush.msra.mxu0 %v1489
        %1590 = vmatpush.msra.mxu0 %v1487
        %1591 = vmatpush.msra.mxu0 %v1485
        %1592 = vmatmul.f32.gmra.mxu0 %v1449
        %v1593 = vpop.f32.mrf.mxu0
        %v1594 = vadd.f32 %v1574, %v1593
        %1595 = vdwg.mxu0
        %v1596 = vadd.f32 %v1397, %v1554
        %v1597 = vadd.f32 %v1398, %v1594
        %s1598 = scalar_lea.vmem [#allocation4], 32
        %v1599 = vld [vmem:[%s1598] sm:$0xff]
        %1600 = vst [vmem:[#allocation1] ss:$2 sm:$0xff] %v804
        %v1601 = vld.sshfl [vmem:[#allocation1] sm:$0xff pattern:$0x75316420]
        %v1602 = vld.sshfl [vmem:[#allocation1 + $0x8] sm:$0xff pattern:$0x75316420]
        %v1604 = vsel %vm810, %v1599, 0
        %v1606 = vsel %vm814, %v1601, 0
        %v1608 = vsel %vm814, %v1602, 0
        %1610 = vmatpush.msra.mxu0 0.0
        %1611 = vmatpush.msra.mxu0 0.0
        %1612 = vmatpush.msra.mxu0 0.0
        %1613 = vmatpush.msra.mxu0 0.0
        %1614 = vmatpush.msra.mxu0 0.0
        %1615 = vmatpush.msra.mxu0 0.0
        %1616 = vmatpush.msra.mxu0 0.0
        %1617 = vmatpush.msra.mxu0 0.0
        %1618 = vmatpush.msra.mxu0 0.0
        %1619 = vmatpush.msra.mxu0 0.0
        %1620 = vmatpush.msra.mxu0 0.0
        %1621 = vmatpush.msra.mxu0 0.0
        %1622 = vmatpush.msra.mxu0 0.0
        %1623 = vmatpush.msra.mxu0 0.0
        %1624 = vmatpush.msra.mxu0 0.0
        %1625 = vmatpush.msra.mxu0 %v1606
        %1626 = vmatmul.f32.gmra.mxu0 %v1604
        %v1627 = vpop.f32.mrf.mxu0
        %v1628 = vadd.f32 0.0, %v1627
        %1629 = vdwg.mxu0
        %1630 = vmatpush.msra.mxu0 0.0
        %1631 = vmatpush.msra.mxu0 0.0
        %1632 = vmatpush.msra.mxu0 0.0
        %1633 = vmatpush.msra.mxu0 0.0
        %1634 = vmatpush.msra.mxu0 0.0
        %1635 = vmatpush.msra.mxu0 0.0
        %1636 = vmatpush.msra.mxu0 0.0
        %1637 = vmatpush.msra.mxu0 0.0
        %1638 = vmatpush.msra.mxu0 0.0
        %1639 = vmatpush.msra.mxu0 0.0
        %1640 = vmatpush.msra.mxu0 0.0
        %1641 = vmatpush.msra.mxu0 0.0
        %1642 = vmatpush.msra.mxu0 0.0
        %1643 = vmatpush.msra.mxu0 0.0
        %1644 = vmatpush.msra.mxu0 0.0
        %1645 = vmatpush.msra.mxu0 %v1608
        %1646 = vmatmul.f32.gmra.mxu0 %v1604
        %v1647 = vpop.f32.mrf.mxu0
        %v1648 = vadd.f32 0.0, %v1647
        %1649 = vdwg.mxu0
        %s1650 = scalar_lea.vmem [#allocation2], 2048
        %v1651 = vld [vmem:[%s1650] sm:$0xff]
        %v1652 = vld [vmem:[%s1650 + $0x8] sm:$0xff]
        %v1653 = vld [vmem:[%s1650 + $0x10] sm:$0xff]
        %v1654 = vld [vmem:[%s1650 + $0x18] sm:$0xff]
        %v1655 = vld [vmem:[%s1650 + $0x20] sm:$0xff]
        %v1656 = vld [vmem:[%s1650 + $0x28] sm:$0xff]
        %v1657 = vld [vmem:[%s1650 + $0x30] sm:$0xff]
        %v1658 = vld [vmem:[%s1650 + $0x38] sm:$0xff]
        %v1659 = vld [vmem:[%s1650 + $0x40] sm:$0xff]
        %v1660 = vld [vmem:[%s1650 + $0x48] sm:$0xff]
        %v1661 = vld [vmem:[%s1650 + $0x50] sm:$0xff]
        %v1662 = vld [vmem:[%s1650 + $0x58] sm:$0xff]
        %v1663 = vld [vmem:[%s1650 + $0x60] sm:$0xff]
        %v1664 = vld [vmem:[%s1650 + $0x68] sm:$0xff]
        %v1665 = vld [vmem:[%s1650 + $0x70] sm:$0xff]
        %v1666 = vld [vmem:[%s1650 + $0x78] sm:$0xff]
        %v1667 = vld [vmem:[%s1650 + $0x80] sm:$0xff]
        %v1668 = vld [vmem:[%s1650 + $0x88] sm:$0xff]
        %v1669 = vld [vmem:[%s1650 + $0x90] sm:$0xff]
        %v1670 = vld [vmem:[%s1650 + $0x98] sm:$0xff]
        %v1671 = vld [vmem:[%s1650 + $0xa0] sm:$0xff]
        %v1672 = vld [vmem:[%s1650 + $0xa8] sm:$0xff]
        %v1673 = vld [vmem:[%s1650 + $0xb0] sm:$0xff]
        %v1674 = vld [vmem:[%s1650 + $0xb8] sm:$0xff]
        %v1675 = vld [vmem:[%s1650 + $0xc0] sm:$0xff]
        %v1676 = vld [vmem:[%s1650 + $0xc8] sm:$0xff]
        %v1677 = vld [vmem:[%s1650 + $0xd0] sm:$0xff]
        %v1678 = vld [vmem:[%s1650 + $0xd8] sm:$0xff]
        %v1679 = vld [vmem:[%s1650 + $0xe0] sm:$0xff]
        %v1680 = vld [vmem:[%s1650 + $0xe8] sm:$0xff]
        %v1681 = vld [vmem:[%s1650 + $0xf0] sm:$0xff]
        %v1682 = vld [vmem:[%s1650 + $0xf8] sm:$0xff]
        %v1683 = vld [vmem:[%s1650 + $0x100] sm:$0xff]
        %v1684 = vld [vmem:[%s1650 + $0x108] sm:$0xff]
        %v1685 = vld [vmem:[%s1650 + $0x110] sm:$0xff]
        %v1686 = vld [vmem:[%s1650 + $0x118] sm:$0xff]
        %v1687 = vld [vmem:[%s1650 + $0x120] sm:$0xff]
        %v1688 = vld [vmem:[%s1650 + $0x128] sm:$0xff]
        %v1689 = vld [vmem:[%s1650 + $0x130] sm:$0xff]
        %v1690 = vld [vmem:[%s1650 + $0x138] sm:$0xff]
        %v1691 = vld [vmem:[%s1650 + $0x140] sm:$0xff]
        %v1692 = vld [vmem:[%s1650 + $0x148] sm:$0xff]
        %v1693 = vld [vmem:[%s1650 + $0x150] sm:$0xff]
        %v1694 = vld [vmem:[%s1650 + $0x158] sm:$0xff]
        %v1695 = vld [vmem:[%s1650 + $0x160] sm:$0xff]
        %v1696 = vld [vmem:[%s1650 + $0x168] sm:$0xff]
        %v1697 = vld [vmem:[%s1650 + $0x170] sm:$0xff]
        %v1698 = vld [vmem:[%s1650 + $0x178] sm:$0xff]
        %v1699 = vld [vmem:[%s1650 + $0x180] sm:$0xff]
        %v1700 = vld [vmem:[%s1650 + $0x188] sm:$0xff]
        %v1701 = vld [vmem:[%s1650 + $0x190] sm:$0xff]
        %v1702 = vld [vmem:[%s1650 + $0x198] sm:$0xff]
        %v1703 = vld [vmem:[%s1650 + $0x1a0] sm:$0xff]
        %v1704 = vld [vmem:[%s1650 + $0x1a8] sm:$0xff]
        %v1705 = vld [vmem:[%s1650 + $0x1b0] sm:$0xff]
        %v1706 = vld [vmem:[%s1650 + $0x1b8] sm:$0xff]
        %v1707 = vld [vmem:[%s1650 + $0x1c0] sm:$0xff]
        %v1708 = vld [vmem:[%s1650 + $0x1c8] sm:$0xff]
        %v1709 = vld [vmem:[%s1650 + $0x1d0] sm:$0xff]
        %v1710 = vld [vmem:[%s1650 + $0x1d8] sm:$0xff]
        %v1711 = vld [vmem:[%s1650 + $0x1e0] sm:$0xff]
        %v1712 = vld [vmem:[%s1650 + $0x1e8] sm:$0xff]
        %v1713 = vld [vmem:[%s1650 + $0x1f0] sm:$0xff]
        %v1714 = vld [vmem:[%s1650 + $0x1f8] sm:$0xff]
        %1715 = vmatpush.msra.mxu0 %v1681
        %1716 = vmatpush.msra.mxu0 %v1679
        %1717 = vmatpush.msra.mxu0 %v1677
        %1718 = vmatpush.msra.mxu0 %v1675
        %1719 = vmatpush.msra.mxu0 %v1673
        %1720 = vmatpush.msra.mxu0 %v1671
        %1721 = vmatpush.msra.mxu0 %v1669
        %1722 = vmatpush.msra.mxu0 %v1667
        %1723 = vmatpush.msra.mxu0 %v1665
        %1724 = vmatpush.msra.mxu0 %v1663
        %1725 = vmatpush.msra.mxu0 %v1661
        %1726 = vmatpush.msra.mxu0 %v1659
        %1727 = vmatpush.msra.mxu0 %v1657
        %1728 = vmatpush.msra.mxu0 %v1655
        %1729 = vmatpush.msra.mxu0 %v1653
        %1730 = vmatpush.msra.mxu0 %v1651
        %1731 = vmatmul.f32.gmra.mxu0 %v1628
        %v1732 = vpop.f32.mrf.mxu0
        %v1733 = vadd.f32 0.0, %v1732
        %1734 = vdwg.mxu0
        %1735 = vmatpush.msra.mxu0 %v1713
        %1736 = vmatpush.msra.mxu0 %v1711
        %1737 = vmatpush.msra.mxu0 %v1709
        %1738 = vmatpush.msra.mxu0 %v1707
        %1739 = vmatpush.msra.mxu0 %v1705
        %1740 = vmatpush.msra.mxu0 %v1703
        %1741 = vmatpush.msra.mxu0 %v1701
        %1742 = vmatpush.msra.mxu0 %v1699
        %1743 = vmatpush.msra.mxu0 %v1697
        %1744 = vmatpush.msra.mxu0 %v1695
        %1745 = vmatpush.msra.mxu0 %v1693
        %1746 = vmatpush.msra.mxu0 %v1691
        %1747 = vmatpush.msra.mxu0 %v1689
        %1748 = vmatpush.msra.mxu0 %v1687
        %1749 = vmatpush.msra.mxu0 %v1685
        %1750 = vmatpush.msra.mxu0 %v1683
        %1751 = vmatmul.f32.gmra.mxu0 %v1648
        %v1752 = vpop.f32.mrf.mxu0
        %v1753 = vadd.f32 %v1733, %v1752
        %1754 = vdwg.mxu0
        %1755 = vmatpush.msra.mxu0 %v1682
        %1756 = vmatpush.msra.mxu0 %v1680
        %1757 = vmatpush.msra.mxu0 %v1678
        %1758 = vmatpush.msra.mxu0 %v1676
        %1759 = vmatpush.msra.mxu0 %v1674
        %1760 = vmatpush.msra.mxu0 %v1672
        %1761 = vmatpush.msra.mxu0 %v1670
        %1762 = vmatpush.msra.mxu0 %v1668
        %1763 = vmatpush.msra.mxu0 %v1666
        %1764 = vmatpush.msra.mxu0 %v1664
        %1765 = vmatpush.msra.mxu0 %v1662
        %1766 = vmatpush.msra.mxu0 %v1660
        %1767 = vmatpush.msra.mxu0 %v1658
        %1768 = vmatpush.msra.mxu0 %v1656
        %1769 = vmatpush.msra.mxu0 %v1654
        %1770 = vmatpush.msra.mxu0 %v1652
        %1771 = vmatmul.f32.gmra.mxu0 %v1628
        %v1772 = vpop.f32.mrf.mxu0
        %v1773 = vadd.f32 0.0, %v1772
        %1774 = vdwg.mxu0
        %1775 = vmatpush.msra.mxu0 %v1714
        %1776 = vmatpush.msra.mxu0 %v1712
        %1777 = vmatpush.msra.mxu0 %v1710
        %1778 = vmatpush.msra.mxu0 %v1708
        %1779 = vmatpush.msra.mxu0 %v1706
        %1780 = vmatpush.msra.mxu0 %v1704
        %1781 = vmatpush.msra.mxu0 %v1702
        %1782 = vmatpush.msra.mxu0 %v1700
        %1783 = vmatpush.msra.mxu0 %v1698
        %1784 = vmatpush.msra.mxu0 %v1696
        %1785 = vmatpush.msra.mxu0 %v1694
        %1786 = vmatpush.msra.mxu0 %v1692
        %1787 = vmatpush.msra.mxu0 %v1690
        %1788 = vmatpush.msra.mxu0 %v1688
        %1789 = vmatpush.msra.mxu0 %v1686
        %1790 = vmatpush.msra.mxu0 %v1684
        %1791 = vmatmul.f32.gmra.mxu0 %v1648
        %v1792 = vpop.f32.mrf.mxu0
        %v1793 = vadd.f32 %v1773, %v1792
        %1794 = vdwg.mxu0
        %v1795 = vadd.f32 %v1596, %v1753
        %v1796 = vadd.f32 %v1597, %v1793
        %s1797 = scalar_lea.vmem [#allocation4], 40
        %v1798 = vld [vmem:[%s1797] sm:$0xff]
        %1799 = vst [vmem:[#allocation1] ss:$2 sm:$0xff] %v804
        %v1800 = vld.sshfl [vmem:[#allocation1] sm:$0xff pattern:$0x75316420]
        %v1801 = vld.sshfl [vmem:[#allocation1 + $0x8] sm:$0xff pattern:$0x75316420]
        %v1803 = vsel %vm810, %v1798, 0
        %v1805 = vsel %vm814, %v1800, 0
        %v1807 = vsel %vm814, %v1801, 0
        %1809 = vmatpush.msra.mxu0 0.0
        %1810 = vmatpush.msra.mxu0 0.0
        %1811 = vmatpush.msra.mxu0 0.0
        %1812 = vmatpush.msra.mxu0 0.0
        %1813 = vmatpush.msra.mxu0 0.0
        %1814 = vmatpush.msra.mxu0 0.0
        %1815 = vmatpush.msra.mxu0 0.0
        %1816 = vmatpush.msra.mxu0 0.0
        %1817 = vmatpush.msra.mxu0 0.0
        %1818 = vmatpush.msra.mxu0 0.0
        %1819 = vmatpush.msra.mxu0 0.0
        %1820 = vmatpush.msra.mxu0 0.0
        %1821 = vmatpush.msra.mxu0 0.0
        %1822 = vmatpush.msra.mxu0 0.0
        %1823 = vmatpush.msra.mxu0 0.0
        %1824 = vmatpush.msra.mxu0 %v1805
        %1825 = vmatmul.f32.gmra.mxu0 %v1803
        %v1826 = vpop.f32.mrf.mxu0
        %v1827 = vadd.f32 0.0, %v1826
        %1828 = vdwg.mxu0
        %1829 = vmatpush.msra.mxu0 0.0
        %1830 = vmatpush.msra.mxu0 0.0
        %1831 = vmatpush.msra.mxu0 0.0
        %1832 = vmatpush.msra.mxu0 0.0
        %1833 = vmatpush.msra.mxu0 0.0
        %1834 = vmatpush.msra.mxu0 0.0
        %1835 = vmatpush.msra.mxu0 0.0
        %1836 = vmatpush.msra.mxu0 0.0
        %1837 = vmatpush.msra.mxu0 0.0
        %1838 = vmatpush.msra.mxu0 0.0
        %1839 = vmatpush.msra.mxu0 0.0
        %1840 = vmatpush.msra.mxu0 0.0
        %1841 = vmatpush.msra.mxu0 0.0
        %1842 = vmatpush.msra.mxu0 0.0
        %1843 = vmatpush.msra.mxu0 0.0
        %1844 = vmatpush.msra.mxu0 %v1807
        %1845 = vmatmul.f32.gmra.mxu0 %v1803
        %v1846 = vpop.f32.mrf.mxu0
        %v1847 = vadd.f32 0.0, %v1846
        %1848 = vdwg.mxu0
        %s1849 = scalar_lea.vmem [#allocation2], 2560
        %v1850 = vld [vmem:[%s1849] sm:$0xff]
        %v1851 = vld [vmem:[%s1849 + $0x8] sm:$0xff]
        %v1852 = vld [vmem:[%s1849 + $0x10] sm:$0xff]
        %v1853 = vld [vmem:[%s1849 + $0x18] sm:$0xff]
        %v1854 = vld [vmem:[%s1849 + $0x20] sm:$0xff]
        %v1855 = vld [vmem:[%s1849 + $0x28] sm:$0xff]
        %v1856 = vld [vmem:[%s1849 + $0x30] sm:$0xff]
        %v1857 = vld [vmem:[%s1849 + $0x38] sm:$0xff]
        %v1858 = vld [vmem:[%s1849 + $0x40] sm:$0xff]
        %v1859 = vld [vmem:[%s1849 + $0x48] sm:$0xff]
        %v1860 = vld [vmem:[%s1849 + $0x50] sm:$0xff]
        %v1861 = vld [vmem:[%s1849 + $0x58] sm:$0xff]
        %v1862 = vld [vmem:[%s1849 + $0x60] sm:$0xff]
        %v1863 = vld [vmem:[%s1849 + $0x68] sm:$0xff]
        %v1864 = vld [vmem:[%s1849 + $0x70] sm:$0xff]
        %v1865 = vld [vmem:[%s1849 + $0x78] sm:$0xff]
        %v1866 = vld [vmem:[%s1849 + $0x80] sm:$0xff]
        %v1867 = vld [vmem:[%s1849 + $0x88] sm:$0xff]
        %v1868 = vld [vmem:[%s1849 + $0x90] sm:$0xff]
        %v1869 = vld [vmem:[%s1849 + $0x98] sm:$0xff]
        %v1870 = vld [vmem:[%s1849 + $0xa0] sm:$0xff]
        %v1871 = vld [vmem:[%s1849 + $0xa8] sm:$0xff]
        %v1872 = vld [vmem:[%s1849 + $0xb0] sm:$0xff]
        %v1873 = vld [vmem:[%s1849 + $0xb8] sm:$0xff]
        %v1874 = vld [vmem:[%s1849 + $0xc0] sm:$0xff]
        %v1875 = vld [vmem:[%s1849 + $0xc8] sm:$0xff]
        %v1876 = vld [vmem:[%s1849 + $0xd0] sm:$0xff]
        %v1877 = vld [vmem:[%s1849 + $0xd8] sm:$0xff]
        %v1878 = vld [vmem:[%s1849 + $0xe0] sm:$0xff]
        %v1879 = vld [vmem:[%s1849 + $0xe8] sm:$0xff]
        %v1880 = vld [vmem:[%s1849 + $0xf0] sm:$0xff]
        %v1881 = vld [vmem:[%s1849 + $0xf8] sm:$0xff]
        %v1882 = vld [vmem:[%s1849 + $0x100] sm:$0xff]
        %v1883 = vld [vmem:[%s1849 + $0x108] sm:$0xff]
        %v1884 = vld [vmem:[%s1849 + $0x110] sm:$0xff]
        %v1885 = vld [vmem:[%s1849 + $0x118] sm:$0xff]
        %v1886 = vld [vmem:[%s1849 + $0x120] sm:$0xff]
        %v1887 = vld [vmem:[%s1849 + $0x128] sm:$0xff]
        %v1888 = vld [vmem:[%s1849 + $0x130] sm:$0xff]
        %v1889 = vld [vmem:[%s1849 + $0x138] sm:$0xff]
        %v1890 = vld [vmem:[%s1849 + $0x140] sm:$0xff]
        %v1891 = vld [vmem:[%s1849 + $0x148] sm:$0xff]
        %v1892 = vld [vmem:[%s1849 + $0x150] sm:$0xff]
        %v1893 = vld [vmem:[%s1849 + $0x158] sm:$0xff]
        %v1894 = vld [vmem:[%s1849 + $0x160] sm:$0xff]
        %v1895 = vld [vmem:[%s1849 + $0x168] sm:$0xff]
        %v1896 = vld [vmem:[%s1849 + $0x170] sm:$0xff]
        %v1897 = vld [vmem:[%s1849 + $0x178] sm:$0xff]
        %v1898 = vld [vmem:[%s1849 + $0x180] sm:$0xff]
        %v1899 = vld [vmem:[%s1849 + $0x188] sm:$0xff]
        %v1900 = vld [vmem:[%s1849 + $0x190] sm:$0xff]
        %v1901 = vld [vmem:[%s1849 + $0x198] sm:$0xff]
        %v1902 = vld [vmem:[%s1849 + $0x1a0] sm:$0xff]
        %v1903 = vld [vmem:[%s1849 + $0x1a8] sm:$0xff]
        %v1904 = vld [vmem:[%s1849 + $0x1b0] sm:$0xff]
        %v1905 = vld [vmem:[%s1849 + $0x1b8] sm:$0xff]
        %v1906 = vld [vmem:[%s1849 + $0x1c0] sm:$0xff]
        %v1907 = vld [vmem:[%s1849 + $0x1c8] sm:$0xff]
        %v1908 = vld [vmem:[%s1849 + $0x1d0] sm:$0xff]
        %v1909 = vld [vmem:[%s1849 + $0x1d8] sm:$0xff]
        %v1910 = vld [vmem:[%s1849 + $0x1e0] sm:$0xff]
        %v1911 = vld [vmem:[%s1849 + $0x1e8] sm:$0xff]
        %v1912 = vld [vmem:[%s1849 + $0x1f0] sm:$0xff]
        %v1913 = vld [vmem:[%s1849 + $0x1f8] sm:$0xff]
        %1914 = vmatpush.msra.mxu0 %v1880
        %1915 = vmatpush.msra.mxu0 %v1878
        %1916 = vmatpush.msra.mxu0 %v1876
        %1917 = vmatpush.msra.mxu0 %v1874
        %1918 = vmatpush.msra.mxu0 %v1872
        %1919 = vmatpush.msra.mxu0 %v1870
        %1920 = vmatpush.msra.mxu0 %v1868
        %1921 = vmatpush.msra.mxu0 %v1866
        %1922 = vmatpush.msra.mxu0 %v1864
        %1923 = vmatpush.msra.mxu0 %v1862
        %1924 = vmatpush.msra.mxu0 %v1860
        %1925 = vmatpush.msra.mxu0 %v1858
        %1926 = vmatpush.msra.mxu0 %v1856
        %1927 = vmatpush.msra.mxu0 %v1854
        %1928 = vmatpush.msra.mxu0 %v1852
        %1929 = vmatpush.msra.mxu0 %v1850
        %1930 = vmatmul.f32.gmra.mxu0 %v1827
        %v1931 = vpop.f32.mrf.mxu0
        %v1932 = vadd.f32 0.0, %v1931
        %1933 = vdwg.mxu0
        %1934 = vmatpush.msra.mxu0 %v1912
        %1935 = vmatpush.msra.mxu0 %v1910
        %1936 = vmatpush.msra.mxu0 %v1908
        %1937 = vmatpush.msra.mxu0 %v1906
        %1938 = vmatpush.msra.mxu0 %v1904
        %1939 = vmatpush.msra.mxu0 %v1902
        %1940 = vmatpush.msra.mxu0 %v1900
        %1941 = vmatpush.msra.mxu0 %v1898
        %1942 = vmatpush.msra.mxu0 %v1896
        %1943 = vmatpush.msra.mxu0 %v1894
        %1944 = vmatpush.msra.mxu0 %v1892
        %1945 = vmatpush.msra.mxu0 %v1890
        %1946 = vmatpush.msra.mxu0 %v1888
        %1947 = vmatpush.msra.mxu0 %v1886
        %1948 = vmatpush.msra.mxu0 %v1884
        %1949 = vmatpush.msra.mxu0 %v1882
        %1950 = vmatmul.f32.gmra.mxu0 %v1847
        %v1951 = vpop.f32.mrf.mxu0
        %v1952 = vadd.f32 %v1932, %v1951
        %1953 = vdwg.mxu0
        %1954 = vmatpush.msra.mxu0 %v1881
        %1955 = vmatpush.msra.mxu0 %v1879
        %1956 = vmatpush.msra.mxu0 %v1877
        %1957 = vmatpush.msra.mxu0 %v1875
        %1958 = vmatpush.msra.mxu0 %v1873
        %1959 = vmatpush.msra.mxu0 %v1871
        %1960 = vmatpush.msra.mxu0 %v1869
        %1961 = vmatpush.msra.mxu0 %v1867
        %1962 = vmatpush.msra.mxu0 %v1865
        %1963 = vmatpush.msra.mxu0 %v1863
        %1964 = vmatpush.msra.mxu0 %v1861
        %1965 = vmatpush.msra.mxu0 %v1859
        %1966 = vmatpush.msra.mxu0 %v1857
        %1967 = vmatpush.msra.mxu0 %v1855
        %1968 = vmatpush.msra.mxu0 %v1853
        %1969 = vmatpush.msra.mxu0 %v1851
        %1970 = vmatmul.f32.gmra.mxu0 %v1827
        %v1971 = vpop.f32.mrf.mxu0
        %v1972 = vadd.f32 0.0, %v1971
        %1973 = vdwg.mxu0
        %1974 = vmatpush.msra.mxu0 %v1913
        %1975 = vmatpush.msra.mxu0 %v1911
        %1976 = vmatpush.msra.mxu0 %v1909
        %1977 = vmatpush.msra.mxu0 %v1907
        %1978 = vmatpush.msra.mxu0 %v1905
        %1979 = vmatpush.msra.mxu0 %v1903
        %1980 = vmatpush.msra.mxu0 %v1901
        %1981 = vmatpush.msra.mxu0 %v1899
        %1982 = vmatpush.msra.mxu0 %v1897
        %1983 = vmatpush.msra.mxu0 %v1895
        %1984 = vmatpush.msra.mxu0 %v1893
        %1985 = vmatpush.msra.mxu0 %v1891
        %1986 = vmatpush.msra.mxu0 %v1889
        %1987 = vmatpush.msra.mxu0 %v1887
        %1988 = vmatpush.msra.mxu0 %v1885
        %1989 = vmatpush.msra.mxu0 %v1883
        %1990 = vmatmul.f32.gmra.mxu0 %v1847
        %v1991 = vpop.f32.mrf.mxu0
        %v1992 = vadd.f32 %v1972, %v1991
        %1993 = vdwg.mxu0
        %v1994 = vadd.f32 %v1795, %v1952
        %v1995 = vadd.f32 %v1796, %v1992
        %s1996 = scalar_lea.vmem [#allocation4], 48
        %v1997 = vld [vmem:[%s1996] sm:$0xff]
        %1998 = vst [vmem:[#allocation1] ss:$2 sm:$0xff] %v804
        %v1999 = vld.sshfl [vmem:[#allocation1] sm:$0xff pattern:$0x75316420]
        %v2000 = vld.sshfl [vmem:[#allocation1 + $0x8] sm:$0xff pattern:$0x75316420]
        %v2002 = vsel %vm810, %v1997, 0
        %v2004 = vsel %vm814, %v1999, 0
        %v2006 = vsel %vm814, %v2000, 0
        %2008 = vmatpush.msra.mxu0 0.0
        %2009 = vmatpush.msra.mxu0 0.0
        %2010 = vmatpush.msra.mxu0 0.0
        %2011 = vmatpush.msra.mxu0 0.0
        %2012 = vmatpush.msra.mxu0 0.0
        %2013 = vmatpush.msra.mxu0 0.0
        %2014 = vmatpush.msra.mxu0 0.0
        %2015 = vmatpush.msra.mxu0 0.0
        %2016 = vmatpush.msra.mxu0 0.0
        %2017 = vmatpush.msra.mxu0 0.0
        %2018 = vmatpush.msra.mxu0 0.0
        %2019 = vmatpush.msra.mxu0 0.0
        %2020 = vmatpush.msra.mxu0 0.0
        %2021 = vmatpush.msra.mxu0 0.0
        %2022 = vmatpush.msra.mxu0 0.0
        %2023 = vmatpush.msra.mxu0 %v2004
        %2024 = vmatmul.f32.gmra.mxu0 %v2002
        %v2025 = vpop.f32.mrf.mxu0
        %v2026 = vadd.f32 0.0, %v2025
        %2027 = vdwg.mxu0
        %2028 = vmatpush.msra.mxu0 0.0
        %2029 = vmatpush.msra.mxu0 0.0
        %2030 = vmatpush.msra.mxu0 0.0
        %2031 = vmatpush.msra.mxu0 0.0
        %2032 = vmatpush.msra.mxu0 0.0
        %2033 = vmatpush.msra.mxu0 0.0
        %2034 = vmatpush.msra.mxu0 0.0
        %2035 = vmatpush.msra.mxu0 0.0
        %2036 = vmatpush.msra.mxu0 0.0
        %2037 = vmatpush.msra.mxu0 0.0
        %2038 = vmatpush.msra.mxu0 0.0
        %2039 = vmatpush.msra.mxu0 0.0
        %2040 = vmatpush.msra.mxu0 0.0
        %2041 = vmatpush.msra.mxu0 0.0
        %2042 = vmatpush.msra.mxu0 0.0
        %2043 = vmatpush.msra.mxu0 %v2006
        %2044 = vmatmul.f32.gmra.mxu0 %v2002
        %v2045 = vpop.f32.mrf.mxu0
        %v2046 = vadd.f32 0.0, %v2045
        %2047 = vdwg.mxu0
        %s2048 = scalar_lea.vmem [#allocation2], 3072
        %v2049 = vld [vmem:[%s2048] sm:$0xff]
        %v2050 = vld [vmem:[%s2048 + $0x8] sm:$0xff]
        %v2051 = vld [vmem:[%s2048 + $0x10] sm:$0xff]
        %v2052 = vld [vmem:[%s2048 + $0x18] sm:$0xff]
        %v2053 = vld [vmem:[%s2048 + $0x20] sm:$0xff]
        %v2054 = vld [vmem:[%s2048 + $0x28] sm:$0xff]
        %v2055 = vld [vmem:[%s2048 + $0x30] sm:$0xff]
        %v2056 = vld [vmem:[%s2048 + $0x38] sm:$0xff]
        %v2057 = vld [vmem:[%s2048 + $0x40] sm:$0xff]
        %v2058 = vld [vmem:[%s2048 + $0x48] sm:$0xff]
        %v2059 = vld [vmem:[%s2048 + $0x50] sm:$0xff]
        %v2060 = vld [vmem:[%s2048 + $0x58] sm:$0xff]
        %v2061 = vld [vmem:[%s2048 + $0x60] sm:$0xff]
        %v2062 = vld [vmem:[%s2048 + $0x68] sm:$0xff]
        %v2063 = vld [vmem:[%s2048 + $0x70] sm:$0xff]
        %v2064 = vld [vmem:[%s2048 + $0x78] sm:$0xff]
        %v2065 = vld [vmem:[%s2048 + $0x80] sm:$0xff]
        %v2066 = vld [vmem:[%s2048 + $0x88] sm:$0xff]
        %v2067 = vld [vmem:[%s2048 + $0x90] sm:$0xff]
        %v2068 = vld [vmem:[%s2048 + $0x98] sm:$0xff]
        %v2069 = vld [vmem:[%s2048 + $0xa0] sm:$0xff]
        %v2070 = vld [vmem:[%s2048 + $0xa8] sm:$0xff]
        %v2071 = vld [vmem:[%s2048 + $0xb0] sm:$0xff]
        %v2072 = vld [vmem:[%s2048 + $0xb8] sm:$0xff]
        %v2073 = vld [vmem:[%s2048 + $0xc0] sm:$0xff]
        %v2074 = vld [vmem:[%s2048 + $0xc8] sm:$0xff]
        %v2075 = vld [vmem:[%s2048 + $0xd0] sm:$0xff]
        %v2076 = vld [vmem:[%s2048 + $0xd8] sm:$0xff]
        %v2077 = vld [vmem:[%s2048 + $0xe0] sm:$0xff]
        %v2078 = vld [vmem:[%s2048 + $0xe8] sm:$0xff]
        %v2079 = vld [vmem:[%s2048 + $0xf0] sm:$0xff]
        %v2080 = vld [vmem:[%s2048 + $0xf8] sm:$0xff]
        %v2081 = vld [vmem:[%s2048 + $0x100] sm:$0xff]
        %v2082 = vld [vmem:[%s2048 + $0x108] sm:$0xff]
        %v2083 = vld [vmem:[%s2048 + $0x110] sm:$0xff]
        %v2084 = vld [vmem:[%s2048 + $0x118] sm:$0xff]
        %v2085 = vld [vmem:[%s2048 + $0x120] sm:$0xff]
        %v2086 = vld [vmem:[%s2048 + $0x128] sm:$0xff]
        %v2087 = vld [vmem:[%s2048 + $0x130] sm:$0xff]
        %v2088 = vld [vmem:[%s2048 + $0x138] sm:$0xff]
        %v2089 = vld [vmem:[%s2048 + $0x140] sm:$0xff]
        %v2090 = vld [vmem:[%s2048 + $0x148] sm:$0xff]
        %v2091 = vld [vmem:[%s2048 + $0x150] sm:$0xff]
        %v2092 = vld [vmem:[%s2048 + $0x158] sm:$0xff]
        %v2093 = vld [vmem:[%s2048 + $0x160] sm:$0xff]
        %v2094 = vld [vmem:[%s2048 + $0x168] sm:$0xff]
        %v2095 = vld [vmem:[%s2048 + $0x170] sm:$0xff]
        %v2096 = vld [vmem:[%s2048 + $0x178] sm:$0xff]
        %v2097 = vld [vmem:[%s2048 + $0x180] sm:$0xff]
        %v2098 = vld [vmem:[%s2048 + $0x188] sm:$0xff]
        %v2099 = vld [vmem:[%s2048 + $0x190] sm:$0xff]
        %v2100 = vld [vmem:[%s2048 + $0x198] sm:$0xff]
        %v2101 = vld [vmem:[%s2048 + $0x1a0] sm:$0xff]
        %v2102 = vld [vmem:[%s2048 + $0x1a8] sm:$0xff]
        %v2103 = vld [vmem:[%s2048 + $0x1b0] sm:$0xff]
        %v2104 = vld [vmem:[%s2048 + $0x1b8] sm:$0xff]
        %v2105 = vld [vmem:[%s2048 + $0x1c0] sm:$0xff]
        %v2106 = vld [vmem:[%s2048 + $0x1c8] sm:$0xff]
        %v2107 = vld [vmem:[%s2048 + $0x1d0] sm:$0xff]
        %v2108 = vld [vmem:[%s2048 + $0x1d8] sm:$0xff]
        %v2109 = vld [vmem:[%s2048 + $0x1e0] sm:$0xff]
        %v2110 = vld [vmem:[%s2048 + $0x1e8] sm:$0xff]
        %v2111 = vld [vmem:[%s2048 + $0x1f0] sm:$0xff]
        %v2112 = vld [vmem:[%s2048 + $0x1f8] sm:$0xff]
        %2113 = vmatpush.msra.mxu0 %v2079
        %2114 = vmatpush.msra.mxu0 %v2077
        %2115 = vmatpush.msra.mxu0 %v2075
        %2116 = vmatpush.msra.mxu0 %v2073
        %2117 = vmatpush.msra.mxu0 %v2071
        %2118 = vmatpush.msra.mxu0 %v2069
        %2119 = vmatpush.msra.mxu0 %v2067
        %2120 = vmatpush.msra.mxu0 %v2065
        %2121 = vmatpush.msra.mxu0 %v2063
        %2122 = vmatpush.msra.mxu0 %v2061
        %2123 = vmatpush.msra.mxu0 %v2059
        %2124 = vmatpush.msra.mxu0 %v2057
        %2125 = vmatpush.msra.mxu0 %v2055
        %2126 = vmatpush.msra.mxu0 %v2053
        %2127 = vmatpush.msra.mxu0 %v2051
        %2128 = vmatpush.msra.mxu0 %v2049
        %2129 = vmatmul.f32.gmra.mxu0 %v2026
        %v2130 = vpop.f32.mrf.mxu0
        %v2131 = vadd.f32 0.0, %v2130
        %2132 = vdwg.mxu0
        %2133 = vmatpush.msra.mxu0 %v2111
        %2134 = vmatpush.msra.mxu0 %v2109
        %2135 = vmatpush.msra.mxu0 %v2107
        %2136 = vmatpush.msra.mxu0 %v2105
        %2137 = vmatpush.msra.mxu0 %v2103
        %2138 = vmatpush.msra.mxu0 %v2101
        %2139 = vmatpush.msra.mxu0 %v2099
        %2140 = vmatpush.msra.mxu0 %v2097
        %2141 = vmatpush.msra.mxu0 %v2095
        %2142 = vmatpush.msra.mxu0 %v2093
        %2143 = vmatpush.msra.mxu0 %v2091
        %2144 = vmatpush.msra.mxu0 %v2089
        %2145 = vmatpush.msra.mxu0 %v2087
        %2146 = vmatpush.msra.mxu0 %v2085
        %2147 = vmatpush.msra.mxu0 %v2083
        %2148 = vmatpush.msra.mxu0 %v2081
        %2149 = vmatmul.f32.gmra.mxu0 %v2046
        %v2150 = vpop.f32.mrf.mxu0
        %v2151 = vadd.f32 %v2131, %v2150
        %2152 = vdwg.mxu0
        %2153 = vmatpush.msra.mxu0 %v2080
        %2154 = vmatpush.msra.mxu0 %v2078
        %2155 = vmatpush.msra.mxu0 %v2076
        %2156 = vmatpush.msra.mxu0 %v2074
        %2157 = vmatpush.msra.mxu0 %v2072
        %2158 = vmatpush.msra.mxu0 %v2070
        %2159 = vmatpush.msra.mxu0 %v2068
        %2160 = vmatpush.msra.mxu0 %v2066
        %2161 = vmatpush.msra.mxu0 %v2064
        %2162 = vmatpush.msra.mxu0 %v2062
        %2163 = vmatpush.msra.mxu0 %v2060
        %2164 = vmatpush.msra.mxu0 %v2058
        %2165 = vmatpush.msra.mxu0 %v2056
        %2166 = vmatpush.msra.mxu0 %v2054
        %2167 = vmatpush.msra.mxu0 %v2052
        %2168 = vmatpush.msra.mxu0 %v2050
        %2169 = vmatmul.f32.gmra.mxu0 %v2026
        %v2170 = vpop.f32.mrf.mxu0
        %v2171 = vadd.f32 0.0, %v2170
        %2172 = vdwg.mxu0
        %2173 = vmatpush.msra.mxu0 %v2112
        %2174 = vmatpush.msra.mxu0 %v2110
        %2175 = vmatpush.msra.mxu0 %v2108
        %2176 = vmatpush.msra.mxu0 %v2106
        %2177 = vmatpush.msra.mxu0 %v2104
        %2178 = vmatpush.msra.mxu0 %v2102
        %2179 = vmatpush.msra.mxu0 %v2100
        %2180 = vmatpush.msra.mxu0 %v2098
        %2181 = vmatpush.msra.mxu0 %v2096
        %2182 = vmatpush.msra.mxu0 %v2094
        %2183 = vmatpush.msra.mxu0 %v2092
        %2184 = vmatpush.msra.mxu0 %v2090
        %2185 = vmatpush.msra.mxu0 %v2088
        %2186 = vmatpush.msra.mxu0 %v2086
        %2187 = vmatpush.msra.mxu0 %v2084
        %2188 = vmatpush.msra.mxu0 %v2082
        %2189 = vmatmul.f32.gmra.mxu0 %v2046
        %v2190 = vpop.f32.mrf.mxu0
        %v2191 = vadd.f32 %v2171, %v2190
        %2192 = vdwg.mxu0
        %v2193 = vadd.f32 %v1994, %v2151
        %v2194 = vadd.f32 %v1995, %v2191
        %s2195 = scalar_lea.vmem [#allocation4], 56
        %v2196 = vld [vmem:[%s2195] sm:$0xff]
        %2197 = vst [vmem:[#allocation1] ss:$2 sm:$0xff] %v804
        %v2198 = vld.sshfl [vmem:[#allocation1] sm:$0xff pattern:$0x75316420]
        %v2199 = vld.sshfl [vmem:[#allocation1 + $0x8] sm:$0xff pattern:$0x75316420]
        %v2201 = vsel %vm810, %v2196, 0
        %v2203 = vsel %vm814, %v2198, 0
        %v2205 = vsel %vm814, %v2199, 0
        %2207 = vmatpush.msra.mxu0 0.0
        %2208 = vmatpush.msra.mxu0 0.0
        %2209 = vmatpush.msra.mxu0 0.0
        %2210 = vmatpush.msra.mxu0 0.0
        %2211 = vmatpush.msra.mxu0 0.0
        %2212 = vmatpush.msra.mxu0 0.0
        %2213 = vmatpush.msra.mxu0 0.0
        %2214 = vmatpush.msra.mxu0 0.0
        %2215 = vmatpush.msra.mxu0 0.0
        %2216 = vmatpush.msra.mxu0 0.0
        %2217 = vmatpush.msra.mxu0 0.0
        %2218 = vmatpush.msra.mxu0 0.0
        %2219 = vmatpush.msra.mxu0 0.0
        %2220 = vmatpush.msra.mxu0 0.0
        %2221 = vmatpush.msra.mxu0 0.0
        %2222 = vmatpush.msra.mxu0 %v2203
        %2223 = vmatmul.f32.gmra.mxu0 %v2201
        %v2224 = vpop.f32.mrf.mxu0
        %v2225 = vadd.f32 0.0, %v2224
        %2226 = vdwg.mxu0
        %2227 = vmatpush.msra.mxu0 0.0
        %2228 = vmatpush.msra.mxu0 0.0
        %2229 = vmatpush.msra.mxu0 0.0
        %2230 = vmatpush.msra.mxu0 0.0
        %2231 = vmatpush.msra.mxu0 0.0
        %2232 = vmatpush.msra.mxu0 0.0
        %2233 = vmatpush.msra.mxu0 0.0
        %2234 = vmatpush.msra.mxu0 0.0
        %2235 = vmatpush.msra.mxu0 0.0
        %2236 = vmatpush.msra.mxu0 0.0
        %2237 = vmatpush.msra.mxu0 0.0
        %2238 = vmatpush.msra.mxu0 0.0
        %2239 = vmatpush.msra.mxu0 0.0
        %2240 = vmatpush.msra.mxu0 0.0
        %2241 = vmatpush.msra.mxu0 0.0
        %2242 = vmatpush.msra.mxu0 %v2205
        %2243 = vmatmul.f32.gmra.mxu0 %v2201
        %v2244 = vpop.f32.mrf.mxu0
        %v2245 = vadd.f32 0.0, %v2244
        %2246 = vdwg.mxu0
        %s2247 = scalar_lea.vmem [#allocation2], 3584
        %v2248 = vld [vmem:[%s2247] sm:$0xff]
        %v2249 = vld [vmem:[%s2247 + $0x8] sm:$0xff]
        %v2250 = vld [vmem:[%s2247 + $0x10] sm:$0xff]
        %v2251 = vld [vmem:[%s2247 + $0x18] sm:$0xff]
        %v2252 = vld [vmem:[%s2247 + $0x20] sm:$0xff]
        %v2253 = vld [vmem:[%s2247 + $0x28] sm:$0xff]
        %v2254 = vld [vmem:[%s2247 + $0x30] sm:$0xff]
        %v2255 = vld [vmem:[%s2247 + $0x38] sm:$0xff]
        %v2256 = vld [vmem:[%s2247 + $0x40] sm:$0xff]
        %v2257 = vld [vmem:[%s2247 + $0x48] sm:$0xff]
        %v2258 = vld [vmem:[%s2247 + $0x50] sm:$0xff]
        %v2259 = vld [vmem:[%s2247 + $0x58] sm:$0xff]
        %v2260 = vld [vmem:[%s2247 + $0x60] sm:$0xff]
        %v2261 = vld [vmem:[%s2247 + $0x68] sm:$0xff]
        %v2262 = vld [vmem:[%s2247 + $0x70] sm:$0xff]
        %v2263 = vld [vmem:[%s2247 + $0x78] sm:$0xff]
        %v2264 = vld [vmem:[%s2247 + $0x80] sm:$0xff]
        %v2265 = vld [vmem:[%s2247 + $0x88] sm:$0xff]
        %v2266 = vld [vmem:[%s2247 + $0x90] sm:$0xff]
        %v2267 = vld [vmem:[%s2247 + $0x98] sm:$0xff]
        %v2268 = vld [vmem:[%s2247 + $0xa0] sm:$0xff]
        %v2269 = vld [vmem:[%s2247 + $0xa8] sm:$0xff]
        %v2270 = vld [vmem:[%s2247 + $0xb0] sm:$0xff]
        %v2271 = vld [vmem:[%s2247 + $0xb8] sm:$0xff]
        %v2272 = vld [vmem:[%s2247 + $0xc0] sm:$0xff]
        %v2273 = vld [vmem:[%s2247 + $0xc8] sm:$0xff]
        %v2274 = vld [vmem:[%s2247 + $0xd0] sm:$0xff]
        %v2275 = vld [vmem:[%s2247 + $0xd8] sm:$0xff]
        %v2276 = vld [vmem:[%s2247 + $0xe0] sm:$0xff]
        %v2277 = vld [vmem:[%s2247 + $0xe8] sm:$0xff]
        %v2278 = vld [vmem:[%s2247 + $0xf0] sm:$0xff]
        %v2279 = vld [vmem:[%s2247 + $0xf8] sm:$0xff]
        %v2280 = vld [vmem:[%s2247 + $0x100] sm:$0xff]
        %v2281 = vld [vmem:[%s2247 + $0x108] sm:$0xff]
        %v2282 = vld [vmem:[%s2247 + $0x110] sm:$0xff]
        %v2283 = vld [vmem:[%s2247 + $0x118] sm:$0xff]
        %v2284 = vld [vmem:[%s2247 + $0x120] sm:$0xff]
        %v2285 = vld [vmem:[%s2247 + $0x128] sm:$0xff]
        %v2286 = vld [vmem:[%s2247 + $0x130] sm:$0xff]
        %v2287 = vld [vmem:[%s2247 + $0x138] sm:$0xff]
        %v2288 = vld [vmem:[%s2247 + $0x140] sm:$0xff]
        %v2289 = vld [vmem:[%s2247 + $0x148] sm:$0xff]
        %v2290 = vld [vmem:[%s2247 + $0x150] sm:$0xff]
        %v2291 = vld [vmem:[%s2247 + $0x158] sm:$0xff]
        %v2292 = vld [vmem:[%s2247 + $0x160] sm:$0xff]
        %v2293 = vld [vmem:[%s2247 + $0x168] sm:$0xff]
        %v2294 = vld [vmem:[%s2247 + $0x170] sm:$0xff]
        %v2295 = vld [vmem:[%s2247 + $0x178] sm:$0xff]
        %v2296 = vld [vmem:[%s2247 + $0x180] sm:$0xff]
        %v2297 = vld [vmem:[%s2247 + $0x188] sm:$0xff]
        %v2298 = vld [vmem:[%s2247 + $0x190] sm:$0xff]
        %v2299 = vld [vmem:[%s2247 + $0x198] sm:$0xff]
        %v2300 = vld [vmem:[%s2247 + $0x1a0] sm:$0xff]
        %v2301 = vld [vmem:[%s2247 + $0x1a8] sm:$0xff]
        %v2302 = vld [vmem:[%s2247 + $0x1b0] sm:$0xff]
        %v2303 = vld [vmem:[%s2247 + $0x1b8] sm:$0xff]
        %v2304 = vld [vmem:[%s2247 + $0x1c0] sm:$0xff]
        %v2305 = vld [vmem:[%s2247 + $0x1c8] sm:$0xff]
        %v2306 = vld [vmem:[%s2247 + $0x1d0] sm:$0xff]
        %v2307 = vld [vmem:[%s2247 + $0x1d8] sm:$0xff]
        %v2308 = vld [vmem:[%s2247 + $0x1e0] sm:$0xff]
        %v2309 = vld [vmem:[%s2247 + $0x1e8] sm:$0xff]
        %v2310 = vld [vmem:[%s2247 + $0x1f0] sm:$0xff]
        %v2311 = vld [vmem:[%s2247 + $0x1f8] sm:$0xff]
        %2312 = vmatpush.msra.mxu0 %v2278
        %2313 = vmatpush.msra.mxu0 %v2276
        %2314 = vmatpush.msra.mxu0 %v2274
        %2315 = vmatpush.msra.mxu0 %v2272
        %2316 = vmatpush.msra.mxu0 %v2270
        %2317 = vmatpush.msra.mxu0 %v2268
        %2318 = vmatpush.msra.mxu0 %v2266
        %2319 = vmatpush.msra.mxu0 %v2264
        %2320 = vmatpush.msra.mxu0 %v2262
        %2321 = vmatpush.msra.mxu0 %v2260
        %2322 = vmatpush.msra.mxu0 %v2258
        %2323 = vmatpush.msra.mxu0 %v2256
        %2324 = vmatpush.msra.mxu0 %v2254
        %2325 = vmatpush.msra.mxu0 %v2252
        %2326 = vmatpush.msra.mxu0 %v2250
        %2327 = vmatpush.msra.mxu0 %v2248
        %2328 = vmatmul.f32.gmra.mxu0 %v2225
        %v2329 = vpop.f32.mrf.mxu0
        %v2330 = vadd.f32 0.0, %v2329
        %2331 = vdwg.mxu0
        %2332 = vmatpush.msra.mxu0 %v2310
        %2333 = vmatpush.msra.mxu0 %v2308
        %2334 = vmatpush.msra.mxu0 %v2306
        %2335 = vmatpush.msra.mxu0 %v2304
        %2336 = vmatpush.msra.mxu0 %v2302
        %2337 = vmatpush.msra.mxu0 %v2300
        %2338 = vmatpush.msra.mxu0 %v2298
        %2339 = vmatpush.msra.mxu0 %v2296
        %2340 = vmatpush.msra.mxu0 %v2294
        %2341 = vmatpush.msra.mxu0 %v2292
        %2342 = vmatpush.msra.mxu0 %v2290
        %2343 = vmatpush.msra.mxu0 %v2288
        %2344 = vmatpush.msra.mxu0 %v2286
        %2345 = vmatpush.msra.mxu0 %v2284
        %2346 = vmatpush.msra.mxu0 %v2282
        %2347 = vmatpush.msra.mxu0 %v2280
        %2348 = vmatmul.f32.gmra.mxu0 %v2245
        %v2349 = vpop.f32.mrf.mxu0
        %v2350 = vadd.f32 %v2330, %v2349
        %2351 = vdwg.mxu0
        %2352 = vmatpush.msra.mxu0 %v2279
        %2353 = vmatpush.msra.mxu0 %v2277
        %2354 = vmatpush.msra.mxu0 %v2275
        %2355 = vmatpush.msra.mxu0 %v2273
        %2356 = vmatpush.msra.mxu0 %v2271
        %2357 = vmatpush.msra.mxu0 %v2269
        %2358 = vmatpush.msra.mxu0 %v2267
        %2359 = vmatpush.msra.mxu0 %v2265
        %2360 = vmatpush.msra.mxu0 %v2263
        %2361 = vmatpush.msra.mxu0 %v2261
        %2362 = vmatpush.msra.mxu0 %v2259
        %2363 = vmatpush.msra.mxu0 %v2257
        %2364 = vmatpush.msra.mxu0 %v2255
        %2365 = vmatpush.msra.mxu0 %v2253
        %2366 = vmatpush.msra.mxu0 %v2251
        %2367 = vmatpush.msra.mxu0 %v2249
        %2368 = vmatmul.f32.gmra.mxu0 %v2225
        %v2369 = vpop.f32.mrf.mxu0
        %v2370 = vadd.f32 0.0, %v2369
        %2371 = vdwg.mxu0
        %2372 = vmatpush.msra.mxu0 %v2311
        %2373 = vmatpush.msra.mxu0 %v2309
        %2374 = vmatpush.msra.mxu0 %v2307
        %2375 = vmatpush.msra.mxu0 %v2305
        %2376 = vmatpush.msra.mxu0 %v2303
        %2377 = vmatpush.msra.mxu0 %v2301
        %2378 = vmatpush.msra.mxu0 %v2299
        %2379 = vmatpush.msra.mxu0 %v2297
        %2380 = vmatpush.msra.mxu0 %v2295
        %2381 = vmatpush.msra.mxu0 %v2293
        %2382 = vmatpush.msra.mxu0 %v2291
        %2383 = vmatpush.msra.mxu0 %v2289
        %2384 = vmatpush.msra.mxu0 %v2287
        %2385 = vmatpush.msra.mxu0 %v2285
        %2386 = vmatpush.msra.mxu0 %v2283
        %2387 = vmatpush.msra.mxu0 %v2281
        %2388 = vmatmul.f32.gmra.mxu0 %v2245
        %v2389 = vpop.f32.mrf.mxu0
        %v2390 = vadd.f32 %v2370, %v2389
        %2391 = vdwg.mxu0
        %v2392 = vadd.f32 %v2193, %v2350
        %v2393 = vadd.f32 %v2194, %v2390
        %s2394 = scalar_lea.vmem [#allocation4], 64
        %v2395 = vld [vmem:[%s2394] sm:$0xff]
        %2396 = vst [vmem:[#allocation1] ss:$2 sm:$0xff] %v804
        %v2397 = vld.sshfl [vmem:[#allocation1] sm:$0xff pattern:$0x75316420]
        %v2398 = vld.sshfl [vmem:[#allocation1 + $0x8] sm:$0xff pattern:$0x75316420]
        %v2400 = vsel %vm810, %v2395, 0
        %v2402 = vsel %vm814, %v2397, 0
        %v2404 = vsel %vm814, %v2398, 0
        %2406 = vmatpush.msra.mxu0 0.0
        %2407 = vmatpush.msra.mxu0 0.0
        %2408 = vmatpush.msra.mxu0 0.0
        %2409 = vmatpush.msra.mxu0 0.0
        %2410 = vmatpush.msra.mxu0 0.0
        %2411 = vmatpush.msra.mxu0 0.0
        %2412 = vmatpush.msra.mxu0 0.0
        %2413 = vmatpush.msra.mxu0 0.0
        %2414 = vmatpush.msra.mxu0 0.0
        %2415 = vmatpush.msra.mxu0 0.0
        %2416 = vmatpush.msra.mxu0 0.0
        %2417 = vmatpush.msra.mxu0 0.0
        %2418 = vmatpush.msra.mxu0 0.0
        %2419 = vmatpush.msra.mxu0 0.0
        %2420 = vmatpush.msra.mxu0 0.0
        %2421 = vmatpush.msra.mxu0 %v2402
        %2422 = vmatmul.f32.gmra.mxu0 %v2400
        %v2423 = vpop.f32.mrf.mxu0
        %v2424 = vadd.f32 0.0, %v2423
        %2425 = vdwg.mxu0
        %2426 = vmatpush.msra.mxu0 0.0
        %2427 = vmatpush.msra.mxu0 0.0
        %2428 = vmatpush.msra.mxu0 0.0
        %2429 = vmatpush.msra.mxu0 0.0
        %2430 = vmatpush.msra.mxu0 0.0
        %2431 = vmatpush.msra.mxu0 0.0
        %2432 = vmatpush.msra.mxu0 0.0
        %2433 = vmatpush.msra.mxu0 0.0
        %2434 = vmatpush.msra.mxu0 0.0
        %2435 = vmatpush.msra.mxu0 0.0
        %2436 = vmatpush.msra.mxu0 0.0
        %2437 = vmatpush.msra.mxu0 0.0
        %2438 = vmatpush.msra.mxu0 0.0
        %2439 = vmatpush.msra.mxu0 0.0
        %2440 = vmatpush.msra.mxu0 0.0
        %2441 = vmatpush.msra.mxu0 %v2404
        %2442 = vmatmul.f32.gmra.mxu0 %v2400
        %v2443 = vpop.f32.mrf.mxu0
        %v2444 = vadd.f32 0.0, %v2443
        %2445 = vdwg.mxu0
        %s2446 = scalar_lea.vmem [#allocation2], 4096
        %v2447 = vld [vmem:[%s2446] sm:$0xff]
        %v2448 = vld [vmem:[%s2446 + $0x8] sm:$0xff]
        %v2449 = vld [vmem:[%s2446 + $0x10] sm:$0xff]
        %v2450 = vld [vmem:[%s2446 + $0x18] sm:$0xff]
        %v2451 = vld [vmem:[%s2446 + $0x20] sm:$0xff]
        %v2452 = vld [vmem:[%s2446 + $0x28] sm:$0xff]
        %v2453 = vld [vmem:[%s2446 + $0x30] sm:$0xff]
        %v2454 = vld [vmem:[%s2446 + $0x38] sm:$0xff]
        %v2455 = vld [vmem:[%s2446 + $0x40] sm:$0xff]
        %v2456 = vld [vmem:[%s2446 + $0x48] sm:$0xff]
        %v2457 = vld [vmem:[%s2446 + $0x50] sm:$0xff]
        %v2458 = vld [vmem:[%s2446 + $0x58] sm:$0xff]
        %v2459 = vld [vmem:[%s2446 + $0x60] sm:$0xff]
        %v2460 = vld [vmem:[%s2446 + $0x68] sm:$0xff]
        %v2461 = vld [vmem:[%s2446 + $0x70] sm:$0xff]
        %v2462 = vld [vmem:[%s2446 + $0x78] sm:$0xff]
        %v2463 = vld [vmem:[%s2446 + $0x80] sm:$0xff]
        %v2464 = vld [vmem:[%s2446 + $0x88] sm:$0xff]
        %v2465 = vld [vmem:[%s2446 + $0x90] sm:$0xff]
        %v2466 = vld [vmem:[%s2446 + $0x98] sm:$0xff]
        %v2467 = vld [vmem:[%s2446 + $0xa0] sm:$0xff]
        %v2468 = vld [vmem:[%s2446 + $0xa8] sm:$0xff]
        %v2469 = vld [vmem:[%s2446 + $0xb0] sm:$0xff]
        %v2470 = vld [vmem:[%s2446 + $0xb8] sm:$0xff]
        %v2471 = vld [vmem:[%s2446 + $0xc0] sm:$0xff]
        %v2472 = vld [vmem:[%s2446 + $0xc8] sm:$0xff]
        %v2473 = vld [vmem:[%s2446 + $0xd0] sm:$0xff]
        %v2474 = vld [vmem:[%s2446 + $0xd8] sm:$0xff]
        %v2475 = vld [vmem:[%s2446 + $0xe0] sm:$0xff]
        %v2476 = vld [vmem:[%s2446 + $0xe8] sm:$0xff]
        %v2477 = vld [vmem:[%s2446 + $0xf0] sm:$0xff]
        %v2478 = vld [vmem:[%s2446 + $0xf8] sm:$0xff]
        %v2479 = vld [vmem:[%s2446 + $0x100] sm:$0xff]
        %v2480 = vld [vmem:[%s2446 + $0x108] sm:$0xff]
        %v2481 = vld [vmem:[%s2446 + $0x110] sm:$0xff]
        %v2482 = vld [vmem:[%s2446 + $0x118] sm:$0xff]
        %v2483 = vld [vmem:[%s2446 + $0x120] sm:$0xff]
        %v2484 = vld [vmem:[%s2446 + $0x128] sm:$0xff]
        %v2485 = vld [vmem:[%s2446 + $0x130] sm:$0xff]
        %v2486 = vld [vmem:[%s2446 + $0x138] sm:$0xff]
        %v2487 = vld [vmem:[%s2446 + $0x140] sm:$0xff]
        %v2488 = vld [vmem:[%s2446 + $0x148] sm:$0xff]
        %v2489 = vld [vmem:[%s2446 + $0x150] sm:$0xff]
        %v2490 = vld [vmem:[%s2446 + $0x158] sm:$0xff]
        %v2491 = vld [vmem:[%s2446 + $0x160] sm:$0xff]
        %v2492 = vld [vmem:[%s2446 + $0x168] sm:$0xff]
        %v2493 = vld [vmem:[%s2446 + $0x170] sm:$0xff]
        %v2494 = vld [vmem:[%s2446 + $0x178] sm:$0xff]
        %v2495 = vld [vmem:[%s2446 + $0x180] sm:$0xff]
        %v2496 = vld [vmem:[%s2446 + $0x188] sm:$0xff]
        %v2497 = vld [vmem:[%s2446 + $0x190] sm:$0xff]
        %v2498 = vld [vmem:[%s2446 + $0x198] sm:$0xff]
        %v2499 = vld [vmem:[%s2446 + $0x1a0] sm:$0xff]
        %v2500 = vld [vmem:[%s2446 + $0x1a8] sm:$0xff]
        %v2501 = vld [vmem:[%s2446 + $0x1b0] sm:$0xff]
        %v2502 = vld [vmem:[%s2446 + $0x1b8] sm:$0xff]
        %v2503 = vld [vmem:[%s2446 + $0x1c0] sm:$0xff]
        %v2504 = vld [vmem:[%s2446 + $0x1c8] sm:$0xff]
        %v2505 = vld [vmem:[%s2446 + $0x1d0] sm:$0xff]
        %v2506 = vld [vmem:[%s2446 + $0x1d8] sm:$0xff]
        %v2507 = vld [vmem:[%s2446 + $0x1e0] sm:$0xff]
        %v2508 = vld [vmem:[%s2446 + $0x1e8] sm:$0xff]
        %v2509 = vld [vmem:[%s2446 + $0x1f0] sm:$0xff]
        %v2510 = vld [vmem:[%s2446 + $0x1f8] sm:$0xff]
        %2511 = vmatpush.msra.mxu0 %v2477
        %2512 = vmatpush.msra.mxu0 %v2475
        %2513 = vmatpush.msra.mxu0 %v2473
        %2514 = vmatpush.msra.mxu0 %v2471
        %2515 = vmatpush.msra.mxu0 %v2469
        %2516 = vmatpush.msra.mxu0 %v2467
        %2517 = vmatpush.msra.mxu0 %v2465
        %2518 = vmatpush.msra.mxu0 %v2463
        %2519 = vmatpush.msra.mxu0 %v2461
        %2520 = vmatpush.msra.mxu0 %v2459
        %2521 = vmatpush.msra.mxu0 %v2457
        %2522 = vmatpush.msra.mxu0 %v2455
        %2523 = vmatpush.msra.mxu0 %v2453
        %2524 = vmatpush.msra.mxu0 %v2451
        %2525 = vmatpush.msra.mxu0 %v2449
        %2526 = vmatpush.msra.mxu0 %v2447
        %2527 = vmatmul.f32.gmra.mxu0 %v2424
        %v2528 = vpop.f32.mrf.mxu0
        %v2529 = vadd.f32 0.0, %v2528
        %2530 = vdwg.mxu0
        %2531 = vmatpush.msra.mxu0 %v2509
        %2532 = vmatpush.msra.mxu0 %v2507
        %2533 = vmatpush.msra.mxu0 %v2505
        %2534 = vmatpush.msra.mxu0 %v2503
        %2535 = vmatpush.msra.mxu0 %v2501
        %2536 = vmatpush.msra.mxu0 %v2499
        %2537 = vmatpush.msra.mxu0 %v2497
        %2538 = vmatpush.msra.mxu0 %v2495
        %2539 = vmatpush.msra.mxu0 %v2493
        %2540 = vmatpush.msra.mxu0 %v2491
        %2541 = vmatpush.msra.mxu0 %v2489
        %2542 = vmatpush.msra.mxu0 %v2487
        %2543 = vmatpush.msra.mxu0 %v2485
        %2544 = vmatpush.msra.mxu0 %v2483
        %2545 = vmatpush.msra.mxu0 %v2481
        %2546 = vmatpush.msra.mxu0 %v2479
        %2547 = vmatmul.f32.gmra.mxu0 %v2444
        %v2548 = vpop.f32.mrf.mxu0
        %v2549 = vadd.f32 %v2529, %v2548
        %2550 = vdwg.mxu0
        %2551 = vmatpush.msra.mxu0 %v2478
        %2552 = vmatpush.msra.mxu0 %v2476
        %2553 = vmatpush.msra.mxu0 %v2474
        %2554 = vmatpush.msra.mxu0 %v2472
        %2555 = vmatpush.msra.mxu0 %v2470
        %2556 = vmatpush.msra.mxu0 %v2468
        %2557 = vmatpush.msra.mxu0 %v2466
        %2558 = vmatpush.msra.mxu0 %v2464
        %2559 = vmatpush.msra.mxu0 %v2462
        %2560 = vmatpush.msra.mxu0 %v2460
        %2561 = vmatpush.msra.mxu0 %v2458
        %2562 = vmatpush.msra.mxu0 %v2456
        %2563 = vmatpush.msra.mxu0 %v2454
        %2564 = vmatpush.msra.mxu0 %v2452
        %2565 = vmatpush.msra.mxu0 %v2450
        %2566 = vmatpush.msra.mxu0 %v2448
        %2567 = vmatmul.f32.gmra.mxu0 %v2424
        %v2568 = vpop.f32.mrf.mxu0
        %v2569 = vadd.f32 0.0, %v2568
        %2570 = vdwg.mxu0
        %2571 = vmatpush.msra.mxu0 %v2510
        %2572 = vmatpush.msra.mxu0 %v2508
        %2573 = vmatpush.msra.mxu0 %v2506
        %2574 = vmatpush.msra.mxu0 %v2504
        %2575 = vmatpush.msra.mxu0 %v2502
        %2576 = vmatpush.msra.mxu0 %v2500
        %2577 = vmatpush.msra.mxu0 %v2498
        %2578 = vmatpush.msra.mxu0 %v2496
        %2579 = vmatpush.msra.mxu0 %v2494
        %2580 = vmatpush.msra.mxu0 %v2492
        %2581 = vmatpush.msra.mxu0 %v2490
        %2582 = vmatpush.msra.mxu0 %v2488
        %2583 = vmatpush.msra.mxu0 %v2486
        %2584 = vmatpush.msra.mxu0 %v2484
        %2585 = vmatpush.msra.mxu0 %v2482
        %2586 = vmatpush.msra.mxu0 %v2480
        %2587 = vmatmul.f32.gmra.mxu0 %v2444
        %v2588 = vpop.f32.mrf.mxu0
        %v2589 = vadd.f32 %v2569, %v2588
        %2590 = vdwg.mxu0
        %v2591 = vadd.f32 %v2392, %v2549
        %v2592 = vadd.f32 %v2393, %v2589
        %v2593 = vld [vmem:[#allocation6] sm:$0xff]
        %2595 = vset.pattern.permute.xlu0 0
        %2596 = vperm.xlu0 %2595, %v2593
        %v2597 = vpop.permute.xlu0 %2596
        %v2599 = vadd.f32 %v2591, %v2597
        %v2600 = vadd.f32 %v2592, %v2597
        %v2601 = vld [vmem:[#allocation7] sm:$0xff]
        %v2602 = vld [vmem:[#allocation7 + $0x8] sm:$0xff]
        %v2603 = vld [vmem:[#allocation7 + $0x10] sm:$0xff]
        %v2604 = vld [vmem:[#allocation7 + $0x18] sm:$0xff]
        %v2605 = vld [vmem:[#allocation7 + $0x20] sm:$0xff]
        %v2606 = vld [vmem:[#allocation7 + $0x28] sm:$0xff]
        %v2607 = vld [vmem:[#allocation7 + $0x30] sm:$0xff]
        %v2608 = vld [vmem:[#allocation7 + $0x38] sm:$0xff]
        %v2609 = vld [vmem:[#allocation7 + $0x40] sm:$0xff]
        %v2610 = vld [vmem:[#allocation7 + $0x48] sm:$0xff]
        %v2611 = vld [vmem:[#allocation7 + $0x50] sm:$0xff]
        %v2612 = vld [vmem:[#allocation7 + $0x58] sm:$0xff]
        %v2613 = vld [vmem:[#allocation7 + $0x60] sm:$0xff]
        %v2614 = vld [vmem:[#allocation7 + $0x68] sm:$0xff]
        %v2615 = vld [vmem:[#allocation7 + $0x70] sm:$0xff]
        %v2616 = vld [vmem:[#allocation7 + $0x78] sm:$0xff]
        %v2617 = vld [vmem:[#allocation7 + $0x80] sm:$0xff]
        %v2618 = vld [vmem:[#allocation7 + $0x88] sm:$0xff]
        %v2619 = vld [vmem:[#allocation7 + $0x90] sm:$0xff]
        %v2620 = vld [vmem:[#allocation7 + $0x98] sm:$0xff]
        %v2621 = vld [vmem:[#allocation7 + $0xa0] sm:$0xff]
        %v2622 = vld [vmem:[#allocation7 + $0xa8] sm:$0xff]
        %v2623 = vld [vmem:[#allocation7 + $0xb0] sm:$0xff]
        %v2624 = vld [vmem:[#allocation7 + $0xb8] sm:$0xff]
        %v2625 = vld [vmem:[#allocation7 + $0xc0] sm:$0xff]
        %v2626 = vld [vmem:[#allocation7 + $0xc8] sm:$0xff]
        %v2627 = vld [vmem:[#allocation7 + $0xd0] sm:$0xff]
        %v2628 = vld [vmem:[#allocation7 + $0xd8] sm:$0xff]
        %v2629 = vld [vmem:[#allocation7 + $0xe0] sm:$0xff]
        %v2630 = vld [vmem:[#allocation7 + $0xe8] sm:$0xff]
        %v2631 = vld [vmem:[#allocation7 + $0xf0] sm:$0xff]
        %v2632 = vld [vmem:[#allocation7 + $0xf8] sm:$0xff]
        %2633 = vmatpush.msra.mxu0 %v2616
        %2634 = vmatpush.msra.mxu0 %v2615
        %2635 = vmatpush.msra.mxu0 %v2614
        %2636 = vmatpush.msra.mxu0 %v2613
        %2637 = vmatpush.msra.mxu0 %v2612
        %2638 = vmatpush.msra.mxu0 %v2611
        %2639 = vmatpush.msra.mxu0 %v2610
        %2640 = vmatpush.msra.mxu0 %v2609
        %2641 = vmatpush.msra.mxu0 %v2608
        %2642 = vmatpush.msra.mxu0 %v2607
        %2643 = vmatpush.msra.mxu0 %v2606
        %2644 = vmatpush.msra.mxu0 %v2605
        %2645 = vmatpush.msra.mxu0 %v2604
        %2646 = vmatpush.msra.mxu0 %v2603
        %2647 = vmatpush.msra.mxu0 %v2602
        %2648 = vmatpush.msra.mxu0 %v2601
        %2649 = vmatmul.f32.gmra.mxu0 %v2599
        %v2650 = vpop.f32.mrf.mxu0
        %v2651 = vadd.f32 0.0, %v2650
        %2652 = vdwg.mxu0
        %2653 = vmatpush.msra.mxu0 %v2632
        %2654 = vmatpush.msra.mxu0 %v2631
        %2655 = vmatpush.msra.mxu0 %v2630
        %2656 = vmatpush.msra.mxu0 %v2629
        %2657 = vmatpush.msra.mxu0 %v2628
        %2658 = vmatpush.msra.mxu0 %v2627
        %2659 = vmatpush.msra.mxu0 %v2626
        %2660 = vmatpush.msra.mxu0 %v2625
        %2661 = vmatpush.msra.mxu0 %v2624
        %2662 = vmatpush.msra.mxu0 %v2623
        %2663 = vmatpush.msra.mxu0 %v2622
        %2664 = vmatpush.msra.mxu0 %v2621
        %2665 = vmatpush.msra.mxu0 %v2620
        %2666 = vmatpush.msra.mxu0 %v2619
        %2667 = vmatpush.msra.mxu0 %v2618
        %2668 = vmatpush.msra.mxu0 %v2617
        %2669 = vmatmul.f32.gmra.mxu0 %v2600
        %v2670 = vpop.f32.mrf.mxu0
        %v2671 = vadd.f32 %v2651, %v2670
        %2672 = vdwg.mxu0
        %s2673 = scalar_lea.vmem [#allocation7], 256
        %v2674 = vld [vmem:[%s2673] sm:$0xff]
        %v2675 = vld [vmem:[%s2673 + $0x8] sm:$0xff]
        %v2676 = vld [vmem:[%s2673 + $0x10] sm:$0xff]
        %v2677 = vld [vmem:[%s2673 + $0x18] sm:$0xff]
        %v2678 = vld [vmem:[%s2673 + $0x20] sm:$0xff]
        %v2679 = vld [vmem:[%s2673 + $0x28] sm:$0xff]
        %v2680 = vld [vmem:[%s2673 + $0x30] sm:$0xff]
        %v2681 = vld [vmem:[%s2673 + $0x38] sm:$0xff]
        %v2682 = vld [vmem:[%s2673 + $0x40] sm:$0xff]
        %v2683 = vld [vmem:[%s2673 + $0x48] sm:$0xff]
        %v2684 = vld [vmem:[%s2673 + $0x50] sm:$0xff]
        %v2685 = vld [vmem:[%s2673 + $0x58] sm:$0xff]
        %v2686 = vld [vmem:[%s2673 + $0x60] sm:$0xff]
        %v2687 = vld [vmem:[%s2673 + $0x68] sm:$0xff]
        %v2688 = vld [vmem:[%s2673 + $0x70] sm:$0xff]
        %v2689 = vld [vmem:[%s2673 + $0x78] sm:$0xff]
        %v2690 = vld [vmem:[%s2673 + $0x80] sm:$0xff]
        %v2691 = vld [vmem:[%s2673 + $0x88] sm:$0xff]
        %v2692 = vld [vmem:[%s2673 + $0x90] sm:$0xff]
        %v2693 = vld [vmem:[%s2673 + $0x98] sm:$0xff]
        %v2694 = vld [vmem:[%s2673 + $0xa0] sm:$0xff]
        %v2695 = vld [vmem:[%s2673 + $0xa8] sm:$0xff]
        %v2696 = vld [vmem:[%s2673 + $0xb0] sm:$0xff]
        %v2697 = vld [vmem:[%s2673 + $0xb8] sm:$0xff]
        %v2698 = vld [vmem:[%s2673 + $0xc0] sm:$0xff]
        %v2699 = vld [vmem:[%s2673 + $0xc8] sm:$0xff]
        %v2700 = vld [vmem:[%s2673 + $0xd0] sm:$0xff]
        %v2701 = vld [vmem:[%s2673 + $0xd8] sm:$0xff]
        %v2702 = vld [vmem:[%s2673 + $0xe0] sm:$0xff]
        %v2703 = vld [vmem:[%s2673 + $0xe8] sm:$0xff]
        %v2704 = vld [vmem:[%s2673 + $0xf0] sm:$0xff]
        %v2705 = vld [vmem:[%s2673 + $0xf8] sm:$0xff]
        %2706 = vmatpush.msra.mxu0 %v2689
        %2707 = vmatpush.msra.mxu0 %v2688
        %2708 = vmatpush.msra.mxu0 %v2687
        %2709 = vmatpush.msra.mxu0 %v2686
        %2710 = vmatpush.msra.mxu0 %v2685
        %2711 = vmatpush.msra.mxu0 %v2684
        %2712 = vmatpush.msra.mxu0 %v2683
        %2713 = vmatpush.msra.mxu0 %v2682
        %2714 = vmatpush.msra.mxu0 %v2681
        %2715 = vmatpush.msra.mxu0 %v2680
        %2716 = vmatpush.msra.mxu0 %v2679
        %2717 = vmatpush.msra.mxu0 %v2678
        %2718 = vmatpush.msra.mxu0 %v2677
        %2719 = vmatpush.msra.mxu0 %v2676
        %2720 = vmatpush.msra.mxu0 %v2675
        %2721 = vmatpush.msra.mxu0 %v2674
        %2722 = vmatmul.f32.gmra.mxu0 %v2599
        %v2723 = vpop.f32.mrf.mxu0
        %v2724 = vadd.f32 0.0, %v2723
        %2725 = vdwg.mxu0
        %2726 = vmatpush.msra.mxu0 %v2705
        %2727 = vmatpush.msra.mxu0 %v2704
        %2728 = vmatpush.msra.mxu0 %v2703
        %2729 = vmatpush.msra.mxu0 %v2702
        %2730 = vmatpush.msra.mxu0 %v2701
        %2731 = vmatpush.msra.mxu0 %v2700
        %2732 = vmatpush.msra.mxu0 %v2699
        %2733 = vmatpush.msra.mxu0 %v2698
        %2734 = vmatpush.msra.mxu0 %v2697
        %2735 = vmatpush.msra.mxu0 %v2696
        %2736 = vmatpush.msra.mxu0 %v2695
        %2737 = vmatpush.msra.mxu0 %v2694
        %2738 = vmatpush.msra.mxu0 %v2693
        %2739 = vmatpush.msra.mxu0 %v2692
        %2740 = vmatpush.msra.mxu0 %v2691
        %2741 = vmatpush.msra.mxu0 %v2690
        %2742 = vmatmul.f32.gmra.mxu0 %v2600
        %v2743 = vpop.f32.mrf.mxu0
        %v2744 = vadd.f32 %v2724, %v2743
        %2745 = vdwg.mxu0
        %v2746 = vmax.f32 %v2671, %v2744
        %s2747 = scalar_lea.vmem [#allocation7], 512
        %v2748 = vld [vmem:[%s2747] sm:$0xff]
        %v2749 = vld [vmem:[%s2747 + $0x8] sm:$0xff]
        %v2750 = vld [vmem:[%s2747 + $0x10] sm:$0xff]
        %v2751 = vld [vmem:[%s2747 + $0x18] sm:$0xff]
        %v2752 = vld [vmem:[%s2747 + $0x20] sm:$0xff]
        %v2753 = vld [vmem:[%s2747 + $0x28] sm:$0xff]
        %v2754 = vld [vmem:[%s2747 + $0x30] sm:$0xff]
        %v2755 = vld [vmem:[%s2747 + $0x38] sm:$0xff]
        %v2756 = vld [vmem:[%s2747 + $0x40] sm:$0xff]
        %v2757 = vld [vmem:[%s2747 + $0x48] sm:$0xff]
        %v2758 = vld [vmem:[%s2747 + $0x50] sm:$0xff]
        %v2759 = vld [vmem:[%s2747 + $0x58] sm:$0xff]
        %v2760 = vld [vmem:[%s2747 + $0x60] sm:$0xff]
        %v2761 = vld [vmem:[%s2747 + $0x68] sm:$0xff]
        %v2762 = vld [vmem:[%s2747 + $0x70] sm:$0xff]
        %v2763 = vld [vmem:[%s2747 + $0x78] sm:$0xff]
        %v2764 = vld [vmem:[%s2747 + $0x80] sm:$0xff]
        %v2765 = vld [vmem:[%s2747 + $0x88] sm:$0xff]
        %v2766 = vld [vmem:[%s2747 + $0x90] sm:$0xff]
        %v2767 = vld [vmem:[%s2747 + $0x98] sm:$0xff]
        %v2768 = vld [vmem:[%s2747 + $0xa0] sm:$0xff]
        %v2769 = vld [vmem:[%s2747 + $0xa8] sm:$0xff]
        %v2770 = vld [vmem:[%s2747 + $0xb0] sm:$0xff]
        %v2771 = vld [vmem:[%s2747 + $0xb8] sm:$0xff]
        %v2772 = vld [vmem:[%s2747 + $0xc0] sm:$0xff]
        %v2773 = vld [vmem:[%s2747 + $0xc8] sm:$0xff]
        %v2774 = vld [vmem:[%s2747 + $0xd0] sm:$0xff]
        %v2775 = vld [vmem:[%s2747 + $0xd8] sm:$0xff]
        %v2776 = vld [vmem:[%s2747 + $0xe0] sm:$0xff]
        %v2777 = vld [vmem:[%s2747 + $0xe8] sm:$0xff]
        %v2778 = vld [vmem:[%s2747 + $0xf0] sm:$0xff]
        %v2779 = vld [vmem:[%s2747 + $0xf8] sm:$0xff]
        %2780 = vmatpush.msra.mxu0 %v2763
        %2781 = vmatpush.msra.mxu0 %v2762
        %2782 = vmatpush.msra.mxu0 %v2761
        %2783 = vmatpush.msra.mxu0 %v2760
        %2784 = vmatpush.msra.mxu0 %v2759
        %2785 = vmatpush.msra.mxu0 %v2758
        %2786 = vmatpush.msra.mxu0 %v2757
        %2787 = vmatpush.msra.mxu0 %v2756
        %2788 = vmatpush.msra.mxu0 %v2755
        %2789 = vmatpush.msra.mxu0 %v2754
        %2790 = vmatpush.msra.mxu0 %v2753
        %2791 = vmatpush.msra.mxu0 %v2752
        %2792 = vmatpush.msra.mxu0 %v2751
        %2793 = vmatpush.msra.mxu0 %v2750
        %2794 = vmatpush.msra.mxu0 %v2749
        %2795 = vmatpush.msra.mxu0 %v2748
        %2796 = vmatmul.f32.gmra.mxu0 %v2599
        %v2797 = vpop.f32.mrf.mxu0
        %v2798 = vadd.f32 0.0, %v2797
        %2799 = vdwg.mxu0
        %2800 = vmatpush.msra.mxu0 %v2779
        %2801 = vmatpush.msra.mxu0 %v2778
        %2802 = vmatpush.msra.mxu0 %v2777
        %2803 = vmatpush.msra.mxu0 %v2776
        %2804 = vmatpush.msra.mxu0 %v2775
        %2805 = vmatpush.msra.mxu0 %v2774
        %2806 = vmatpush.msra.mxu0 %v2773
        %2807 = vmatpush.msra.mxu0 %v2772
        %2808 = vmatpush.msra.mxu0 %v2771
        %2809 = vmatpush.msra.mxu0 %v2770
        %2810 = vmatpush.msra.mxu0 %v2769
        %2811 = vmatpush.msra.mxu0 %v2768
        %2812 = vmatpush.msra.mxu0 %v2767
        %2813 = vmatpush.msra.mxu0 %v2766
        %2814 = vmatpush.msra.mxu0 %v2765
        %2815 = vmatpush.msra.mxu0 %v2764
        %2816 = vmatmul.f32.gmra.mxu0 %v2600
        %v2817 = vpop.f32.mrf.mxu0
        %v2818 = vadd.f32 %v2798, %v2817
        %2819 = vdwg.mxu0
        %v2820 = vmax.f32 %v2746, %v2818
        %s2821 = scalar_lea.vmem [#allocation7], 768
        %v2822 = vld [vmem:[%s2821] sm:$0xff]
        %v2823 = vld [vmem:[%s2821 + $0x8] sm:$0xff]
        %v2824 = vld [vmem:[%s2821 + $0x10] sm:$0xff]
        %v2825 = vld [vmem:[%s2821 + $0x18] sm:$0xff]
        %v2826 = vld [vmem:[%s2821 + $0x20] sm:$0xff]
        %v2827 = vld [vmem:[%s2821 + $0x28] sm:$0xff]
        %v2828 = vld [vmem:[%s2821 + $0x30] sm:$0xff]
        %v2829 = vld [vmem:[%s2821 + $0x38] sm:$0xff]
        %v2830 = vld [vmem:[%s2821 + $0x40] sm:$0xff]
        %v2831 = vld [vmem:[%s2821 + $0x48] sm:$0xff]
        %v2832 = vld [vmem:[%s2821 + $0x50] sm:$0xff]
        %v2833 = vld [vmem:[%s2821 + $0x58] sm:$0xff]
        %v2834 = vld [vmem:[%s2821 + $0x60] sm:$0xff]
        %v2835 = vld [vmem:[%s2821 + $0x68] sm:$0xff]
        %v2836 = vld [vmem:[%s2821 + $0x70] sm:$0xff]
        %v2837 = vld [vmem:[%s2821 + $0x78] sm:$0xff]
        %v2838 = vld [vmem:[%s2821 + $0x80] sm:$0xff]
        %v2839 = vld [vmem:[%s2821 + $0x88] sm:$0xff]
        %v2840 = vld [vmem:[%s2821 + $0x90] sm:$0xff]
        %v2841 = vld [vmem:[%s2821 + $0x98] sm:$0xff]
        %v2842 = vld [vmem:[%s2821 + $0xa0] sm:$0xff]
        %v2843 = vld [vmem:[%s2821 + $0xa8] sm:$0xff]
        %v2844 = vld [vmem:[%s2821 + $0xb0] sm:$0xff]
        %v2845 = vld [vmem:[%s2821 + $0xb8] sm:$0xff]
        %v2846 = vld [vmem:[%s2821 + $0xc0] sm:$0xff]
        %v2847 = vld [vmem:[%s2821 + $0xc8] sm:$0xff]
        %v2848 = vld [vmem:[%s2821 + $0xd0] sm:$0xff]
        %v2849 = vld [vmem:[%s2821 + $0xd8] sm:$0xff]
        %v2850 = vld [vmem:[%s2821 + $0xe0] sm:$0xff]
        %v2851 = vld [vmem:[%s2821 + $0xe8] sm:$0xff]
        %v2852 = vld [vmem:[%s2821 + $0xf0] sm:$0xff]
        %v2853 = vld [vmem:[%s2821 + $0xf8] sm:$0xff]
        %2854 = vmatpush.msra.mxu0 %v2837
        %2855 = vmatpush.msra.mxu0 %v2836
        %2856 = vmatpush.msra.mxu0 %v2835
        %2857 = vmatpush.msra.mxu0 %v2834
        %2858 = vmatpush.msra.mxu0 %v2833
        %2859 = vmatpush.msra.mxu0 %v2832
        %2860 = vmatpush.msra.mxu0 %v2831
        %2861 = vmatpush.msra.mxu0 %v2830
        %2862 = vmatpush.msra.mxu0 %v2829
        %2863 = vmatpush.msra.mxu0 %v2828
        %2864 = vmatpush.msra.mxu0 %v2827
        %2865 = vmatpush.msra.mxu0 %v2826
        %2866 = vmatpush.msra.mxu0 %v2825
        %2867 = vmatpush.msra.mxu0 %v2824
        %2868 = vmatpush.msra.mxu0 %v2823
        %2869 = vmatpush.msra.mxu0 %v2822
        %2870 = vmatmul.f32.gmra.mxu0 %v2599
        %v2871 = vpop.f32.mrf.mxu0
        %v2872 = vadd.f32 0.0, %v2871
        %2873 = vdwg.mxu0
        %2874 = vmatpush.msra.mxu0 %v2853
        %2875 = vmatpush.msra.mxu0 %v2852
        %2876 = vmatpush.msra.mxu0 %v2851
        %2877 = vmatpush.msra.mxu0 %v2850
        %2878 = vmatpush.msra.mxu0 %v2849
        %2879 = vmatpush.msra.mxu0 %v2848
        %2880 = vmatpush.msra.mxu0 %v2847
        %2881 = vmatpush.msra.mxu0 %v2846
        %2882 = vmatpush.msra.mxu0 %v2845
        %2883 = vmatpush.msra.mxu0 %v2844
        %2884 = vmatpush.msra.mxu0 %v2843
        %2885 = vmatpush.msra.mxu0 %v2842
        %2886 = vmatpush.msra.mxu0 %v2841
        %2887 = vmatpush.msra.mxu0 %v2840
        %2888 = vmatpush.msra.mxu0 %v2839
        %2889 = vmatpush.msra.mxu0 %v2838
        %2890 = vmatmul.f32.gmra.mxu0 %v2600
        %v2891 = vpop.f32.mrf.mxu0
        %v2892 = vadd.f32 %v2872, %v2891
        %2893 = vdwg.mxu0
        %v2894 = vmax.f32 %v2820, %v2892
        %v2895 = vmax.f32 %v2894, 0.0
        %v2896 = vld [vmem:[#allocation10] sm:$0xff]
        %vm2897 = vcmask 64512
        %v2899 = vsel %vm2897, %v2896, 0
        %2901 = vmatpush.msra.mxu0 0.0
        %2902 = vmatpush.msra.mxu0 0.0
        %2903 = vmatpush.msra.mxu0 0.0
        %2904 = vmatpush.msra.mxu0 0.0
        %2905 = vmatpush.msra.mxu0 0.0
        %2906 = vmatpush.msra.mxu0 0.0
        %2907 = vmatpush.msra.mxu0 0.0
        %2908 = vmatpush.msra.mxu0 0.0
        %2909 = vmatpush.msra.mxu0 0.0
        %2910 = vmatpush.msra.mxu0 0.0
        %2911 = vmatpush.msra.mxu0 0.0
        %2912 = vmatpush.msra.mxu0 0.0
        %2913 = vmatpush.msra.mxu0 0.0
        %2914 = vmatpush.msra.mxu0 0.0
        %2915 = vmatpush.msra.mxu0 0.0
        %2916 = vmatpush.msra.mxu0 %v2895
        %2917 = vmatmul.f32.gmra.mxu0 %v2899
        %v2918 = vpop.f32.mrf.mxu0
        %v2919 = vadd.f32 0.0, %v2918
        %2920 = vdwg.mxu0
        %v2921 = vld [vmem:[#allocation9] sm:$0xff]
        %v2922 = vld [vmem:[#allocation9 + $0x8] sm:$0xff]
        %v2923 = vld [vmem:[#allocation9 + $0x10] sm:$0xff]
        %v2924 = vld [vmem:[#allocation9 + $0x18] sm:$0xff]
        %v2925 = vld [vmem:[#allocation9 + $0x20] sm:$0xff]
        %v2926 = vld [vmem:[#allocation9 + $0x28] sm:$0xff]
        %v2927 = vld [vmem:[#allocation9 + $0x30] sm:$0xff]
        %v2928 = vld [vmem:[#allocation9 + $0x38] sm:$0xff]
        %s2929 = scalar_lea.vmem [#allocation10], 8
        %v2930 = vld [vmem:[%s2929] sm:$0xff]
        %v2932 = vsel %vm2897, %v2930, 0
        %2934 = vmatpush.msra.mxu0 0.0
        %2935 = vmatpush.msra.mxu0 0.0
        %2936 = vmatpush.msra.mxu0 0.0
        %2937 = vmatpush.msra.mxu0 0.0
        %2938 = vmatpush.msra.mxu0 0.0
        %2939 = vmatpush.msra.mxu0 0.0
        %2940 = vmatpush.msra.mxu0 0.0
        %2941 = vmatpush.msra.mxu0 0.0
        %2942 = vmatpush.msra.mxu0 0.0
        %2943 = vmatpush.msra.mxu0 0.0
        %2944 = vmatpush.msra.mxu0 0.0
        %2945 = vmatpush.msra.mxu0 0.0
        %2946 = vmatpush.msra.mxu0 0.0
        %2947 = vmatpush.msra.mxu0 0.0
        %2948 = vmatpush.msra.mxu0 0.0
        %2949 = vmatpush.msra.mxu0 %v2895
        %2950 = vmatmul.f32.gmra.mxu0 %v2932
        %v2951 = vpop.f32.mrf.mxu0
        %v2952 = vadd.f32 0.0, %v2951
        %2953 = vdwg.mxu0
        %s2954 = scalar_lea.vmem [#allocation9], 64
        %v2955 = vld [vmem:[%s2954] sm:$0xff]
        %v2956 = vld [vmem:[%s2954 + $0x8] sm:$0xff]
        %v2957 = vld [vmem:[%s2954 + $0x10] sm:$0xff]
        %v2958 = vld [vmem:[%s2954 + $0x18] sm:$0xff]
        %v2959 = vld [vmem:[%s2954 + $0x20] sm:$0xff]
        %v2960 = vld [vmem:[%s2954 + $0x28] sm:$0xff]
        %v2961 = vld [vmem:[%s2954 + $0x30] sm:$0xff]
        %v2962 = vld [vmem:[%s2954 + $0x38] sm:$0xff]
        %vm2963 = vcmask 523264
        %v2965 = vsel %vm2963, %v2952, 0
        %2967 = vmatpush.msra.mxu0 0.0
        %2968 = vmatpush.msra.mxu0 0.0
        %2969 = vmatpush.msra.mxu0 0.0
        %2970 = vmatpush.msra.mxu0 0.0
        %2971 = vmatpush.msra.mxu0 0.0
        %2972 = vmatpush.msra.mxu0 0.0
        %2973 = vmatpush.msra.mxu0 0.0
        %2974 = vmatpush.msra.mxu0 0.0
        %2975 = vmatpush.msra.mxu0 %v2962
        %2976 = vmatpush.msra.mxu0 %v2961
        %2977 = vmatpush.msra.mxu0 %v2960
        %2978 = vmatpush.msra.mxu0 %v2959
        %2979 = vmatpush.msra.mxu0 %v2958
        %2980 = vmatpush.msra.mxu0 %v2957
        %2981 = vmatpush.msra.mxu0 %v2956
        %2982 = vmatpush.msra.mxu0 %v2955
        %2983 = vmatmul.f32.gmra.mxu0 %v2965
        %v2984 = vpop.f32.mrf.mxu0
        %v2985 = vadd.f32 0.0, %v2984
        %2986 = vdwg.mxu0
        %v2988 = vsel %vm2963, %v2919, 0
        %2990 = vmatpush.msra.mxu0 0.0
        %2991 = vmatpush.msra.mxu0 0.0
        %2992 = vmatpush.msra.mxu0 0.0
        %2993 = vmatpush.msra.mxu0 0.0
        %2994 = vmatpush.msra.mxu0 0.0
        %2995 = vmatpush.msra.mxu0 0.0
        %2996 = vmatpush.msra.mxu0 0.0
        %2997 = vmatpush.msra.mxu0 0.0
        %2998 = vmatpush.msra.mxu0 %v2928
        %2999 = vmatpush.msra.mxu0 %v2927
        %3000 = vmatpush.msra.mxu0 %v2926
        %3001 = vmatpush.msra.mxu0 %v2925
        %3002 = vmatpush.msra.mxu0 %v2924
        %3003 = vmatpush.msra.mxu0 %v2923
        %3004 = vmatpush.msra.mxu0 %v2922
        %3005 = vmatpush.msra.mxu0 %v2921
        %3006 = vmatmul.f32.gmra.mxu0 %v2988
        %v3007 = vpop.f32.mrf.mxu0
        %v3008 = vadd.f32 %v2985, %v3007
        %3009 = vdwg.mxu0
        %s3010 = scalar_lea.vmem [#allocation10], 16
        %v3011 = vld [vmem:[%s3010] sm:$0xff]
        %v3013 = vsel %vm2897, %v3011, 0
        %3015 = vmatpush.msra.mxu0 0.0
        %3016 = vmatpush.msra.mxu0 0.0
        %3017 = vmatpush.msra.mxu0 0.0
        %3018 = vmatpush.msra.mxu0 0.0
        %3019 = vmatpush.msra.mxu0 0.0
        %3020 = vmatpush.msra.mxu0 0.0
        %3021 = vmatpush.msra.mxu0 0.0
        %3022 = vmatpush.msra.mxu0 0.0
        %3023 = vmatpush.msra.mxu0 0.0
        %3024 = vmatpush.msra.mxu0 0.0
        %3025 = vmatpush.msra.mxu0 0.0
        %3026 = vmatpush.msra.mxu0 0.0
        %3027 = vmatpush.msra.mxu0 0.0
        %3028 = vmatpush.msra.mxu0 0.0
        %3029 = vmatpush.msra.mxu0 0.0
        %3030 = vmatpush.msra.mxu0 %v2895
        %3031 = vmatmul.f32.gmra.mxu0 %v3013
        %v3032 = vpop.f32.mrf.mxu0
        %v3033 = vadd.f32 0.0, %v3032
        %3034 = vdwg.mxu0
        %s3035 = scalar_lea.vmem [#allocation9], 128
        %v3036 = vld [vmem:[%s3035] sm:$0xff]
        %v3037 = vld [vmem:[%s3035 + $0x8] sm:$0xff]
        %v3038 = vld [vmem:[%s3035 + $0x10] sm:$0xff]
        %v3039 = vld [vmem:[%s3035 + $0x18] sm:$0xff]
        %v3040 = vld [vmem:[%s3035 + $0x20] sm:$0xff]
        %v3041 = vld [vmem:[%s3035 + $0x28] sm:$0xff]
        %v3042 = vld [vmem:[%s3035 + $0x30] sm:$0xff]
        %v3043 = vld [vmem:[%s3035 + $0x38] sm:$0xff]
        %v3045 = vsel %vm2963, %v3033, 0
        %3047 = vmatpush.msra.mxu0 0.0
        %3048 = vmatpush.msra.mxu0 0.0
        %3049 = vmatpush.msra.mxu0 0.0
        %3050 = vmatpush.msra.mxu0 0.0
        %3051 = vmatpush.msra.mxu0 0.0
        %3052 = vmatpush.msra.mxu0 0.0
        %3053 = vmatpush.msra.mxu0 0.0
        %3054 = vmatpush.msra.mxu0 0.0
        %3055 = vmatpush.msra.mxu0 %v3043
        %3056 = vmatpush.msra.mxu0 %v3042
        %3057 = vmatpush.msra.mxu0 %v3041
        %3058 = vmatpush.msra.mxu0 %v3040
        %3059 = vmatpush.msra.mxu0 %v3039
        %3060 = vmatpush.msra.mxu0 %v3038
        %3061 = vmatpush.msra.mxu0 %v3037
        %3062 = vmatpush.msra.mxu0 %v3036
        %3063 = vmatmul.f32.gmra.mxu0 %v3045
        %v3064 = vpop.f32.mrf.mxu0
        %v3065 = vadd.f32 0.0, %v3064
        %3066 = vdwg.mxu0
        %v3067 = vadd.f32 %v3008, %v3065
        %s3068 = scalar_lea.vmem [#allocation10], 24
        %v3069 = vld [vmem:[%s3068] sm:$0xff]
        %v3071 = vsel %vm2897, %v3069, 0
        %3073 = vmatpush.msra.mxu0 0.0
        %3074 = vmatpush.msra.mxu0 0.0
        %3075 = vmatpush.msra.mxu0 0.0
        %3076 = vmatpush.msra.mxu0 0.0
        %3077 = vmatpush.msra.mxu0 0.0
        %3078 = vmatpush.msra.mxu0 0.0
        %3079 = vmatpush.msra.mxu0 0.0
        %3080 = vmatpush.msra.mxu0 0.0
        %3081 = vmatpush.msra.mxu0 0.0
        %3082 = vmatpush.msra.mxu0 0.0
        %3083 = vmatpush.msra.mxu0 0.0
        %3084 = vmatpush.msra.mxu0 0.0
        %3085 = vmatpush.msra.mxu0 0.0
        %3086 = vmatpush.msra.mxu0 0.0
        %3087 = vmatpush.msra.mxu0 0.0
        %3088 = vmatpush.msra.mxu0 %v2895
        %3089 = vmatmul.f32.gmra.mxu0 %v3071
        %v3090 = vpop.f32.mrf.mxu0
        %v3091 = vadd.f32 0.0, %v3090
        %3092 = vdwg.mxu0
        %s3093 = scalar_lea.vmem [#allocation9], 192
        %v3094 = vld [vmem:[%s3093] sm:$0xff]
        %v3095 = vld [vmem:[%s3093 + $0x8] sm:$0xff]
        %v3096 = vld [vmem:[%s3093 + $0x10] sm:$0xff]
        %v3097 = vld [vmem:[%s3093 + $0x18] sm:$0xff]
        %v3098 = vld [vmem:[%s3093 + $0x20] sm:$0xff]
        %v3099 = vld [vmem:[%s3093 + $0x28] sm:$0xff]
        %v3100 = vld [vmem:[%s3093 + $0x30] sm:$0xff]
        %v3101 = vld [vmem:[%s3093 + $0x38] sm:$0xff]
        %v3103 = vsel %vm2963, %v3091, 0
        %3105 = vmatpush.msra.mxu0 0.0
        %3106 = vmatpush.msra.mxu0 0.0
        %3107 = vmatpush.msra.mxu0 0.0
        %3108 = vmatpush.msra.mxu0 0.0
        %3109 = vmatpush.msra.mxu0 0.0
        %3110 = vmatpush.msra.mxu0 0.0
        %3111 = vmatpush.msra.mxu0 0.0
        %3112 = vmatpush.msra.mxu0 0.0
        %3113 = vmatpush.msra.mxu0 %v3101
        %3114 = vmatpush.msra.mxu0 %v3100
        %3115 = vmatpush.msra.mxu0 %v3099
        %3116 = vmatpush.msra.mxu0 %v3098
        %3117 = vmatpush.msra.mxu0 %v3097
        %3118 = vmatpush.msra.mxu0 %v3096
        %3119 = vmatpush.msra.mxu0 %v3095
        %3120 = vmatpush.msra.mxu0 %v3094
        %3121 = vmatmul.f32.gmra.mxu0 %v3103
        %v3122 = vpop.f32.mrf.mxu0
        %v3123 = vadd.f32 0.0, %v3122
        %3124 = vdwg.mxu0
        %v3125 = vadd.f32 %v3067, %v3123
        %s3126 = scalar_lea.vmem [#allocation10], 32
        %v3127 = vld [vmem:[%s3126] sm:$0xff]
        %v3129 = vsel %vm2897, %v3127, 0
        %3131 = vmatpush.msra.mxu0 0.0
        %3132 = vmatpush.msra.mxu0 0.0
        %3133 = vmatpush.msra.mxu0 0.0
        %3134 = vmatpush.msra.mxu0 0.0
        %3135 = vmatpush.msra.mxu0 0.0
        %3136 = vmatpush.msra.mxu0 0.0
        %3137 = vmatpush.msra.mxu0 0.0
        %3138 = vmatpush.msra.mxu0 0.0
        %3139 = vmatpush.msra.mxu0 0.0
        %3140 = vmatpush.msra.mxu0 0.0
        %3141 = vmatpush.msra.mxu0 0.0
        %3142 = vmatpush.msra.mxu0 0.0
        %3143 = vmatpush.msra.mxu0 0.0
        %3144 = vmatpush.msra.mxu0 0.0
        %3145 = vmatpush.msra.mxu0 0.0
        %3146 = vmatpush.msra.mxu0 %v2895
        %3147 = vmatmul.f32.gmra.mxu0 %v3129
        %v3148 = vpop.f32.mrf.mxu0
        %v3149 = vadd.f32 0.0, %v3148
        %3150 = vdwg.mxu0
        %s3151 = scalar_lea.vmem [#allocation9], 256
        %v3152 = vld [vmem:[%s3151] sm:$0xff]
        %v3153 = vld [vmem:[%s3151 + $0x8] sm:$0xff]
        %v3154 = vld [vmem:[%s3151 + $0x10] sm:$0xff]
        %v3155 = vld [vmem:[%s3151 + $0x18] sm:$0xff]
        %v3156 = vld [vmem:[%s3151 + $0x20] sm:$0xff]
        %v3157 = vld [vmem:[%s3151 + $0x28] sm:$0xff]
        %v3158 = vld [vmem:[%s3151 + $0x30] sm:$0xff]
        %v3159 = vld [vmem:[%s3151 + $0x38] sm:$0xff]
        %v3161 = vsel %vm2963, %v3149, 0
        %3163 = vmatpush.msra.mxu0 0.0
        %3164 = vmatpush.msra.mxu0 0.0
        %3165 = vmatpush.msra.mxu0 0.0
        %3166 = vmatpush.msra.mxu0 0.0
        %3167 = vmatpush.msra.mxu0 0.0
        %3168 = vmatpush.msra.mxu0 0.0
        %3169 = vmatpush.msra.mxu0 0.0
        %3170 = vmatpush.msra.mxu0 0.0
        %3171 = vmatpush.msra.mxu0 %v3159
        %3172 = vmatpush.msra.mxu0 %v3158
        %3173 = vmatpush.msra.mxu0 %v3157
        %3174 = vmatpush.msra.mxu0 %v3156
        %3175 = vmatpush.msra.mxu0 %v3155
        %3176 = vmatpush.msra.mxu0 %v3154
        %3177 = vmatpush.msra.mxu0 %v3153
        %3178 = vmatpush.msra.mxu0 %v3152
        %3179 = vmatmul.f32.gmra.mxu0 %v3161
        %v3180 = vpop.f32.mrf.mxu0
        %v3181 = vadd.f32 0.0, %v3180
        %3182 = vdwg.mxu0
        %v3183 = vadd.f32 %v3125, %v3181
        %s3184 = scalar_lea.vmem [#allocation10], 40
        %v3185 = vld [vmem:[%s3184] sm:$0xff]
        %v3187 = vsel %vm2897, %v3185, 0
        %3189 = vmatpush.msra.mxu0 0.0
        %3190 = vmatpush.msra.mxu0 0.0
        %3191 = vmatpush.msra.mxu0 0.0
        %3192 = vmatpush.msra.mxu0 0.0
        %3193 = vmatpush.msra.mxu0 0.0
        %3194 = vmatpush.msra.mxu0 0.0
        %3195 = vmatpush.msra.mxu0 0.0
        %3196 = vmatpush.msra.mxu0 0.0
        %3197 = vmatpush.msra.mxu0 0.0
        %3198 = vmatpush.msra.mxu0 0.0
        %3199 = vmatpush.msra.mxu0 0.0
        %3200 = vmatpush.msra.mxu0 0.0
        %3201 = vmatpush.msra.mxu0 0.0
        %3202 = vmatpush.msra.mxu0 0.0
        %3203 = vmatpush.msra.mxu0 0.0
        %3204 = vmatpush.msra.mxu0 %v2895
        %3205 = vmatmul.f32.gmra.mxu0 %v3187
        %v3206 = vpop.f32.mrf.mxu0
        %v3207 = vadd.f32 0.0, %v3206
        %3208 = vdwg.mxu0
        %s3209 = scalar_lea.vmem [#allocation9], 320
        %v3210 = vld [vmem:[%s3209] sm:$0xff]
        %v3211 = vld [vmem:[%s3209 + $0x8] sm:$0xff]
        %v3212 = vld [vmem:[%s3209 + $0x10] sm:$0xff]
        %v3213 = vld [vmem:[%s3209 + $0x18] sm:$0xff]
        %v3214 = vld [vmem:[%s3209 + $0x20] sm:$0xff]
        %v3215 = vld [vmem:[%s3209 + $0x28] sm:$0xff]
        %v3216 = vld [vmem:[%s3209 + $0x30] sm:$0xff]
        %v3217 = vld [vmem:[%s3209 + $0x38] sm:$0xff]
        %v3219 = vsel %vm2963, %v3207, 0
        %3221 = vmatpush.msra.mxu0 0.0
        %3222 = vmatpush.msra.mxu0 0.0
        %3223 = vmatpush.msra.mxu0 0.0
        %3224 = vmatpush.msra.mxu0 0.0
        %3225 = vmatpush.msra.mxu0 0.0
        %3226 = vmatpush.msra.mxu0 0.0
        %3227 = vmatpush.msra.mxu0 0.0
        %3228 = vmatpush.msra.mxu0 0.0
        %3229 = vmatpush.msra.mxu0 %v3217
        %3230 = vmatpush.msra.mxu0 %v3216
        %3231 = vmatpush.msra.mxu0 %v3215
        %3232 = vmatpush.msra.mxu0 %v3214
        %3233 = vmatpush.msra.mxu0 %v3213
        %3234 = vmatpush.msra.mxu0 %v3212
        %3235 = vmatpush.msra.mxu0 %v3211
        %3236 = vmatpush.msra.mxu0 %v3210
        %3237 = vmatmul.f32.gmra.mxu0 %v3219
        %v3238 = vpop.f32.mrf.mxu0
        %v3239 = vadd.f32 0.0, %v3238
        %3240 = vdwg.mxu0
        %v3241 = vadd.f32 %v3183, %v3239
        %s3242 = scalar_lea.vmem [#allocation10], 48
        %v3243 = vld [vmem:[%s3242] sm:$0xff]
        %v3245 = vsel %vm2897, %v3243, 0
        %3247 = vmatpush.msra.mxu0 0.0
        %3248 = vmatpush.msra.mxu0 0.0
        %3249 = vmatpush.msra.mxu0 0.0
        %3250 = vmatpush.msra.mxu0 0.0
        %3251 = vmatpush.msra.mxu0 0.0
        %3252 = vmatpush.msra.mxu0 0.0
        %3253 = vmatpush.msra.mxu0 0.0
        %3254 = vmatpush.msra.mxu0 0.0
        %3255 = vmatpush.msra.mxu0 0.0
        %3256 = vmatpush.msra.mxu0 0.0
        %3257 = vmatpush.msra.mxu0 0.0
        %3258 = vmatpush.msra.mxu0 0.0
        %3259 = vmatpush.msra.mxu0 0.0
        %3260 = vmatpush.msra.mxu0 0.0
        %3261 = vmatpush.msra.mxu0 0.0
        %3262 = vmatpush.msra.mxu0 %v2895
        %3263 = vmatmul.f32.gmra.mxu0 %v3245
        %v3264 = vpop.f32.mrf.mxu0
        %v3265 = vadd.f32 0.0, %v3264
        %3266 = vdwg.mxu0
        %s3267 = scalar_lea.vmem [#allocation9], 384
        %v3268 = vld [vmem:[%s3267] sm:$0xff]
        %v3269 = vld [vmem:[%s3267 + $0x8] sm:$0xff]
        %v3270 = vld [vmem:[%s3267 + $0x10] sm:$0xff]
        %v3271 = vld [vmem:[%s3267 + $0x18] sm:$0xff]
        %v3272 = vld [vmem:[%s3267 + $0x20] sm:$0xff]
        %v3273 = vld [vmem:[%s3267 + $0x28] sm:$0xff]
        %v3274 = vld [vmem:[%s3267 + $0x30] sm:$0xff]
        %v3275 = vld [vmem:[%s3267 + $0x38] sm:$0xff]
        %v3277 = vsel %vm2963, %v3265, 0
        %3279 = vmatpush.msra.mxu0 0.0
        %3280 = vmatpush.msra.mxu0 0.0
        %3281 = vmatpush.msra.mxu0 0.0
        %3282 = vmatpush.msra.mxu0 0.0
        %3283 = vmatpush.msra.mxu0 0.0
        %3284 = vmatpush.msra.mxu0 0.0
        %3285 = vmatpush.msra.mxu0 0.0
        %3286 = vmatpush.msra.mxu0 0.0
        %3287 = vmatpush.msra.mxu0 %v3275
        %3288 = vmatpush.msra.mxu0 %v3274
        %3289 = vmatpush.msra.mxu0 %v3273
        %3290 = vmatpush.msra.mxu0 %v3272
        %3291 = vmatpush.msra.mxu0 %v3271
        %3292 = vmatpush.msra.mxu0 %v3270
        %3293 = vmatpush.msra.mxu0 %v3269
        %3294 = vmatpush.msra.mxu0 %v3268
        %3295 = vmatmul.f32.gmra.mxu0 %v3277
        %v3296 = vpop.f32.mrf.mxu0
        %v3297 = vadd.f32 0.0, %v3296
        %3298 = vdwg.mxu0
        %v3299 = vadd.f32 %v3241, %v3297
        %s3300 = scalar_lea.vmem [#allocation10], 56
        %v3301 = vld [vmem:[%s3300] sm:$0xff]
        %v3303 = vsel %vm2897, %v3301, 0
        %3305 = vmatpush.msra.mxu0 0.0
        %3306 = vmatpush.msra.mxu0 0.0
        %3307 = vmatpush.msra.mxu0 0.0
        %3308 = vmatpush.msra.mxu0 0.0
        %3309 = vmatpush.msra.mxu0 0.0
        %3310 = vmatpush.msra.mxu0 0.0
        %3311 = vmatpush.msra.mxu0 0.0
        %3312 = vmatpush.msra.mxu0 0.0
        %3313 = vmatpush.msra.mxu0 0.0
        %3314 = vmatpush.msra.mxu0 0.0
        %3315 = vmatpush.msra.mxu0 0.0
        %3316 = vmatpush.msra.mxu0 0.0
        %3317 = vmatpush.msra.mxu0 0.0
        %3318 = vmatpush.msra.mxu0 0.0
        %3319 = vmatpush.msra.mxu0 0.0
        %3320 = vmatpush.msra.mxu0 %v2895
        %3321 = vmatmul.f32.gmra.mxu0 %v3303
        %v3322 = vpop.f32.mrf.mxu0
        %v3323 = vadd.f32 0.0, %v3322
        %3324 = vdwg.mxu0
        %s3325 = scalar_lea.vmem [#allocation9], 448
        %v3326 = vld [vmem:[%s3325] sm:$0xff]
        %v3327 = vld [vmem:[%s3325 + $0x8] sm:$0xff]
        %v3328 = vld [vmem:[%s3325 + $0x10] sm:$0xff]
        %v3329 = vld [vmem:[%s3325 + $0x18] sm:$0xff]
        %v3330 = vld [vmem:[%s3325 + $0x20] sm:$0xff]
        %v3331 = vld [vmem:[%s3325 + $0x28] sm:$0xff]
        %v3332 = vld [vmem:[%s3325 + $0x30] sm:$0xff]
        %v3333 = vld [vmem:[%s3325 + $0x38] sm:$0xff]
        %v3335 = vsel %vm2963, %v3323, 0
        %3337 = vmatpush.msra.mxu0 0.0
        %3338 = vmatpush.msra.mxu0 0.0
        %3339 = vmatpush.msra.mxu0 0.0
        %3340 = vmatpush.msra.mxu0 0.0
        %3341 = vmatpush.msra.mxu0 0.0
        %3342 = vmatpush.msra.mxu0 0.0
        %3343 = vmatpush.msra.mxu0 0.0
        %3344 = vmatpush.msra.mxu0 0.0
        %3345 = vmatpush.msra.mxu0 %v3333
        %3346 = vmatpush.msra.mxu0 %v3332
        %3347 = vmatpush.msra.mxu0 %v3331
        %3348 = vmatpush.msra.mxu0 %v3330
        %3349 = vmatpush.msra.mxu0 %v3329
        %3350 = vmatpush.msra.mxu0 %v3328
        %3351 = vmatpush.msra.mxu0 %v3327
        %3352 = vmatpush.msra.mxu0 %v3326
        %3353 = vmatmul.f32.gmra.mxu0 %v3335
        %v3354 = vpop.f32.mrf.mxu0
        %v3355 = vadd.f32 0.0, %v3354
        %3356 = vdwg.mxu0
        %v3357 = vadd.f32 %v3299, %v3355
        %s3358 = scalar_lea.vmem [#allocation10], 64
        %v3359 = vld [vmem:[%s3358] sm:$0xff]
        %v3361 = vsel %vm2897, %v3359, 0
        %3363 = vmatpush.msra.mxu0 0.0
        %3364 = vmatpush.msra.mxu0 0.0
        %3365 = vmatpush.msra.mxu0 0.0
        %3366 = vmatpush.msra.mxu0 0.0
        %3367 = vmatpush.msra.mxu0 0.0
        %3368 = vmatpush.msra.mxu0 0.0
        %3369 = vmatpush.msra.mxu0 0.0
        %3370 = vmatpush.msra.mxu0 0.0
        %3371 = vmatpush.msra.mxu0 0.0
        %3372 = vmatpush.msra.mxu0 0.0
        %3373 = vmatpush.msra.mxu0 0.0
        %3374 = vmatpush.msra.mxu0 0.0
        %3375 = vmatpush.msra.mxu0 0.0
        %3376 = vmatpush.msra.mxu0 0.0
        %3377 = vmatpush.msra.mxu0 0.0
        %3378 = vmatpush.msra.mxu0 %v2895
        %3379 = vmatmul.f32.gmra.mxu0 %v3361
        %v3380 = vpop.f32.mrf.mxu0
        %v3381 = vadd.f32 0.0, %v3380
        %3382 = vdwg.mxu0
        %s3383 = scalar_lea.vmem [#allocation9], 512
        %v3384 = vld [vmem:[%s3383] sm:$0xff]
        %v3385 = vld [vmem:[%s3383 + $0x8] sm:$0xff]
        %v3386 = vld [vmem:[%s3383 + $0x10] sm:$0xff]
        %v3387 = vld [vmem:[%s3383 + $0x18] sm:$0xff]
        %v3388 = vld [vmem:[%s3383 + $0x20] sm:$0xff]
        %v3389 = vld [vmem:[%s3383 + $0x28] sm:$0xff]
        %v3390 = vld [vmem:[%s3383 + $0x30] sm:$0xff]
        %v3391 = vld [vmem:[%s3383 + $0x38] sm:$0xff]
        %v3393 = vsel %vm2963, %v3381, 0
        %3395 = vmatpush.msra.mxu0 0.0
        %3396 = vmatpush.msra.mxu0 0.0
        %3397 = vmatpush.msra.mxu0 0.0
        %3398 = vmatpush.msra.mxu0 0.0
        %3399 = vmatpush.msra.mxu0 0.0
        %3400 = vmatpush.msra.mxu0 0.0
        %3401 = vmatpush.msra.mxu0 0.0
        %3402 = vmatpush.msra.mxu0 0.0
        %3403 = vmatpush.msra.mxu0 %v3391
        %3404 = vmatpush.msra.mxu0 %v3390
        %3405 = vmatpush.msra.mxu0 %v3389
        %3406 = vmatpush.msra.mxu0 %v3388
        %3407 = vmatpush.msra.mxu0 %v3387
        %3408 = vmatpush.msra.mxu0 %v3386
        %3409 = vmatpush.msra.mxu0 %v3385
        %3410 = vmatpush.msra.mxu0 %v3384
        %3411 = vmatmul.f32.gmra.mxu0 %v3393
        %v3412 = vpop.f32.mrf.mxu0
        %v3413 = vadd.f32 0.0, %v3412
        %3414 = vdwg.mxu0
        %v3415 = vadd.f32 %v3357, %v3413
        %v3416 = vld [vmem:[#allocation12] sm:$0xff]
        %3418 = vset.pattern.permute.xlu0 0
        %3419 = vperm.xlu0 %3418, %v3416
        %v3420 = vpop.permute.xlu0 %3419
        %v3422 = vadd.f32 %v3415, %v3420
        %v3423 = vld [vmem:[#allocation13] sm:$0xff]
        %v3424 = vld [vmem:[#allocation13 + $0x8] sm:$0xff]
        %v3425 = vld [vmem:[#allocation13 + $0x10] sm:$0xff]
        %v3426 = vld [vmem:[#allocation13 + $0x18] sm:$0xff]
        %v3427 = vld [vmem:[#allocation13 + $0x20] sm:$0xff]
        %v3428 = vld [vmem:[#allocation13 + $0x28] sm:$0xff]
        %v3429 = vld [vmem:[#allocation13 + $0x30] sm:$0xff]
        %v3430 = vld [vmem:[#allocation13 + $0x38] sm:$0xff]
        %v3432 = vsel %vm2963, %v3422, 0
        %3434 = vmatpush.msra.mxu0 0.0
        %3435 = vmatpush.msra.mxu0 0.0
        %3436 = vmatpush.msra.mxu0 0.0
        %3437 = vmatpush.msra.mxu0 0.0
        %3438 = vmatpush.msra.mxu0 0.0
        %3439 = vmatpush.msra.mxu0 0.0
        %3440 = vmatpush.msra.mxu0 0.0
        %3441 = vmatpush.msra.mxu0 0.0
        %3442 = vmatpush.msra.mxu0 %v3430
        %3443 = vmatpush.msra.mxu0 %v3429
        %3444 = vmatpush.msra.mxu0 %v3428
        %3445 = vmatpush.msra.mxu0 %v3427
        %3446 = vmatpush.msra.mxu0 %v3426
        %3447 = vmatpush.msra.mxu0 %v3425
        %3448 = vmatpush.msra.mxu0 %v3424
        %3449 = vmatpush.msra.mxu0 %v3423
        %3450 = vmatmul.f32.gmra.mxu0 %v3432
        %v3451 = vpop.f32.mrf.mxu0
        %v3452 = vadd.f32 0.0, %v3451
        %3453 = vdwg.mxu0
        %s3454 = scalar_lea.vmem [#allocation13], 64
        %v3455 = vld [vmem:[%s3454] sm:$0xff]
        %v3456 = vld [vmem:[%s3454 + $0x8] sm:$0xff]
        %v3457 = vld [vmem:[%s3454 + $0x10] sm:$0xff]
        %v3458 = vld [vmem:[%s3454 + $0x18] sm:$0xff]
        %v3459 = vld [vmem:[%s3454 + $0x20] sm:$0xff]
        %v3460 = vld [vmem:[%s3454 + $0x28] sm:$0xff]
        %v3461 = vld [vmem:[%s3454 + $0x30] sm:$0xff]
        %v3462 = vld [vmem:[%s3454 + $0x38] sm:$0xff]
        %3463 = vmatpush.msra.mxu0 0.0
        %3464 = vmatpush.msra.mxu0 0.0
        %3465 = vmatpush.msra.mxu0 0.0
        %3466 = vmatpush.msra.mxu0 0.0
        %3467 = vmatpush.msra.mxu0 0.0
        %3468 = vmatpush.msra.mxu0 0.0
        %3469 = vmatpush.msra.mxu0 0.0
        %3470 = vmatpush.msra.mxu0 0.0
        %3471 = vmatpush.msra.mxu0 %v3462
        %3472 = vmatpush.msra.mxu0 %v3461
        %3473 = vmatpush.msra.mxu0 %v3460
        %3474 = vmatpush.msra.mxu0 %v3459
        %3475 = vmatpush.msra.mxu0 %v3458
        %3476 = vmatpush.msra.mxu0 %v3457
        %3477 = vmatpush.msra.mxu0 %v3456
        %3478 = vmatpush.msra.mxu0 %v3455
        %3479 = vmatmul.f32.gmra.mxu0 %v3432
        %v3480 = vpop.f32.mrf.mxu0
        %v3481 = vadd.f32 0.0, %v3480
        %3482 = vdwg.mxu0
        %v3483 = vmax.f32 %v3452, %v3481
        %s3484 = scalar_lea.vmem [#allocation13], 128
        %v3485 = vld [vmem:[%s3484] sm:$0xff]
        %v3486 = vld [vmem:[%s3484 + $0x8] sm:$0xff]
        %v3487 = vld [vmem:[%s3484 + $0x10] sm:$0xff]
        %v3488 = vld [vmem:[%s3484 + $0x18] sm:$0xff]
        %v3489 = vld [vmem:[%s3484 + $0x20] sm:$0xff]
        %v3490 = vld [vmem:[%s3484 + $0x28] sm:$0xff]
        %v3491 = vld [vmem:[%s3484 + $0x30] sm:$0xff]
        %v3492 = vld [vmem:[%s3484 + $0x38] sm:$0xff]
        %3493 = vmatpush.msra.mxu0 0.0
        %3494 = vmatpush.msra.mxu0 0.0
        %3495 = vmatpush.msra.mxu0 0.0
        %3496 = vmatpush.msra.mxu0 0.0
        %3497 = vmatpush.msra.mxu0 0.0
        %3498 = vmatpush.msra.mxu0 0.0
        %3499 = vmatpush.msra.mxu0 0.0
        %3500 = vmatpush.msra.mxu0 0.0
        %3501 = vmatpush.msra.mxu0 %v3492
        %3502 = vmatpush.msra.mxu0 %v3491
        %3503 = vmatpush.msra.mxu0 %v3490
        %3504 = vmatpush.msra.mxu0 %v3489
        %3505 = vmatpush.msra.mxu0 %v3488
        %3506 = vmatpush.msra.mxu0 %v3487
        %3507 = vmatpush.msra.mxu0 %v3486
        %3508 = vmatpush.msra.mxu0 %v3485
        %3509 = vmatmul.f32.gmra.mxu0 %v3432
        %v3510 = vpop.f32.mrf.mxu0
        %v3511 = vadd.f32 0.0, %v3510
        %3512 = vdwg.mxu0
        %v3513 = vmax.f32 %v3483, %v3511
        %s3514 = scalar_lea.vmem [#allocation13], 192
        %v3515 = vld [vmem:[%s3514] sm:$0xff]
        %v3516 = vld [vmem:[%s3514 + $0x8] sm:$0xff]
        %v3517 = vld [vmem:[%s3514 + $0x10] sm:$0xff]
        %v3518 = vld [vmem:[%s3514 + $0x18] sm:$0xff]
        %v3519 = vld [vmem:[%s3514 + $0x20] sm:$0xff]
        %v3520 = vld [vmem:[%s3514 + $0x28] sm:$0xff]
        %v3521 = vld [vmem:[%s3514 + $0x30] sm:$0xff]
        %v3522 = vld [vmem:[%s3514 + $0x38] sm:$0xff]
        %3523 = vmatpush.msra.mxu0 0.0
        %3524 = vmatpush.msra.mxu0 0.0
        %3525 = vmatpush.msra.mxu0 0.0
        %3526 = vmatpush.msra.mxu0 0.0
        %3527 = vmatpush.msra.mxu0 0.0
        %3528 = vmatpush.msra.mxu0 0.0
        %3529 = vmatpush.msra.mxu0 0.0
        %3530 = vmatpush.msra.mxu0 0.0
        %3531 = vmatpush.msra.mxu0 %v3522
        %3532 = vmatpush.msra.mxu0 %v3521
        %3533 = vmatpush.msra.mxu0 %v3520
        %3534 = vmatpush.msra.mxu0 %v3519
        %3535 = vmatpush.msra.mxu0 %v3518
        %3536 = vmatpush.msra.mxu0 %v3517
        %3537 = vmatpush.msra.mxu0 %v3516
        %3538 = vmatpush.msra.mxu0 %v3515
        %3539 = vmatmul.f32.gmra.mxu0 %v3432
        %v3540 = vpop.f32.mrf.mxu0
        %v3541 = vadd.f32 0.0, %v3540
        %3542 = vdwg.mxu0
        %v3543 = vmax.f32 %v3513, %v3541
        %v3544 = vmax.f32 %v3543, 0.0
        %v3545 = vld [vmem:[#allocation16] sm:$0xff]
        %v3547 = vsel %vm2897, %v3545, 0
        %3549 = vmatpush.msra.mxu0 0.0
        %3550 = vmatpush.msra.mxu0 0.0
        %3551 = vmatpush.msra.mxu0 0.0
        %3552 = vmatpush.msra.mxu0 0.0
        %3553 = vmatpush.msra.mxu0 0.0
        %3554 = vmatpush.msra.mxu0 0.0
        %3555 = vmatpush.msra.mxu0 0.0
        %3556 = vmatpush.msra.mxu0 0.0
        %3557 = vmatpush.msra.mxu0 0.0
        %3558 = vmatpush.msra.mxu0 0.0
        %3559 = vmatpush.msra.mxu0 0.0
        %3560 = vmatpush.msra.mxu0 0.0
        %3561 = vmatpush.msra.mxu0 0.0
        %3562 = vmatpush.msra.mxu0 0.0
        %3563 = vmatpush.msra.mxu0 0.0
        %3564 = vmatpush.msra.mxu0 %v3544
        %3565 = vmatmul.f32.gmra.mxu0 %v3547
        %v3566 = vpop.f32.mrf.mxu0
        %v3567 = vadd.f32 0.0, %v3566
        %3568 = vdwg.mxu0
        %v3569 = vld [vmem:[#allocation15] sm:$0xff]
        %v3570 = vld [vmem:[#allocation15 + $0x8] sm:$0xff]
        %s3571 = scalar_lea.vmem [#allocation16], 8
        %v3572 = vld [vmem:[%s3571] sm:$0xff]
        %v3574 = vsel %vm2897, %v3572, 0
        %3576 = vmatpush.msra.mxu0 0.0
        %3577 = vmatpush.msra.mxu0 0.0
        %3578 = vmatpush.msra.mxu0 0.0
        %3579 = vmatpush.msra.mxu0 0.0
        %3580 = vmatpush.msra.mxu0 0.0
        %3581 = vmatpush.msra.mxu0 0.0
        %3582 = vmatpush.msra.mxu0 0.0
        %3583 = vmatpush.msra.mxu0 0.0
        %3584 = vmatpush.msra.mxu0 0.0
        %3585 = vmatpush.msra.mxu0 0.0
        %3586 = vmatpush.msra.mxu0 0.0
        %3587 = vmatpush.msra.mxu0 0.0
        %3588 = vmatpush.msra.mxu0 0.0
        %3589 = vmatpush.msra.mxu0 0.0
        %3590 = vmatpush.msra.mxu0 0.0
        %3591 = vmatpush.msra.mxu0 %v3544
        %3592 = vmatmul.f32.gmra.mxu0 %v3574
        %v3593 = vpop.f32.mrf.mxu0
        %v3594 = vadd.f32 0.0, %v3593
        %3595 = vdwg.mxu0
        %s3596 = scalar_lea.vmem [#allocation15], 16
        %v3597 = vld [vmem:[%s3596] sm:$0xff]
        %v3598 = vld [vmem:[%s3596 + $0x8] sm:$0xff]
        %vm3599 = vcmask 130048
        %v3601 = vsel %vm3599, %v3594, 0
        %3603 = vmatpush.msra.mxu0 0.0
        %3604 = vmatpush.msra.mxu0 0.0
        %3605 = vmatpush.msra.mxu0 0.0
        %3606 = vmatpush.msra.mxu0 0.0
        %3607 = vmatpush.msra.mxu0 0.0
        %3608 = vmatpush.msra.mxu0 0.0
        %3609 = vmatpush.msra.mxu0 0.0
        %3610 = vmatpush.msra.mxu0 0.0
        %3611 = vmatpush.msra.mxu0 0.0
        %3612 = vmatpush.msra.mxu0 0.0
        %3613 = vmatpush.msra.mxu0 0.0
        %3614 = vmatpush.msra.mxu0 0.0
        %3615 = vmatpush.msra.mxu0 0.0
        %3616 = vmatpush.msra.mxu0 0.0
        %3617 = vmatpush.msra.mxu0 %v3598
        %3618 = vmatpush.msra.mxu0 %v3597
        %3619 = vmatmul.f32.gmra.mxu0 %v3601
        %v3620 = vpop.f32.mrf.mxu0
        %v3621 = vadd.f32 0.0, %v3620
        %3622 = vdwg.mxu0
        %v3624 = vsel %vm3599, %v3567, 0
        %3626 = vmatpush.msra.mxu0 0.0
        %3627 = vmatpush.msra.mxu0 0.0
        %3628 = vmatpush.msra.mxu0 0.0
        %3629 = vmatpush.msra.mxu0 0.0
        %3630 = vmatpush.msra.mxu0 0.0
        %3631 = vmatpush.msra.mxu0 0.0
        %3632 = vmatpush.msra.mxu0 0.0
        %3633 = vmatpush.msra.mxu0 0.0
        %3634 = vmatpush.msra.mxu0 0.0
        %3635 = vmatpush.msra.mxu0 0.0
        %3636 = vmatpush.msra.mxu0 0.0
        %3637 = vmatpush.msra.mxu0 0.0
        %3638 = vmatpush.msra.mxu0 0.0
        %3639 = vmatpush.msra.mxu0 0.0
        %3640 = vmatpush.msra.mxu0 %v3570
        %3641 = vmatpush.msra.mxu0 %v3569
        %3642 = vmatmul.f32.gmra.mxu0 %v3624
        %v3643 = vpop.f32.mrf.mxu0
        %v3644 = vadd.f32 %v3621, %v3643
        %3645 = vdwg.mxu0
        %s3646 = scalar_lea.vmem [#allocation16], 16
        %v3647 = vld [vmem:[%s3646] sm:$0xff]
        %v3649 = vsel %vm2897, %v3647, 0
        %3651 = vmatpush.msra.mxu0 0.0
        %3652 = vmatpush.msra.mxu0 0.0
        %3653 = vmatpush.msra.mxu0 0.0
        %3654 = vmatpush.msra.mxu0 0.0
        %3655 = vmatpush.msra.mxu0 0.0
        %3656 = vmatpush.msra.mxu0 0.0
        %3657 = vmatpush.msra.mxu0 0.0
        %3658 = vmatpush.msra.mxu0 0.0
        %3659 = vmatpush.msra.mxu0 0.0
        %3660 = vmatpush.msra.mxu0 0.0
        %3661 = vmatpush.msra.mxu0 0.0
        %3662 = vmatpush.msra.mxu0 0.0
        %3663 = vmatpush.msra.mxu0 0.0
        %3664 = vmatpush.msra.mxu0 0.0
        %3665 = vmatpush.msra.mxu0 0.0
        %3666 = vmatpush.msra.mxu0 %v3544
        %3667 = vmatmul.f32.gmra.mxu0 %v3649
        %v3668 = vpop.f32.mrf.mxu0
        %v3669 = vadd.f32 0.0, %v3668
        %3670 = vdwg.mxu0
        %s3671 = scalar_lea.vmem [#allocation15], 32
        %v3672 = vld [vmem:[%s3671] sm:$0xff]
        %v3673 = vld [vmem:[%s3671 + $0x8] sm:$0xff]
        %v3675 = vsel %vm3599, %v3669, 0
        %3677 = vmatpush.msra.mxu0 0.0
        %3678 = vmatpush.msra.mxu0 0.0
        %3679 = vmatpush.msra.mxu0 0.0
        %3680 = vmatpush.msra.mxu0 0.0
        %3681 = vmatpush.msra.mxu0 0.0
        %3682 = vmatpush.msra.mxu0 0.0
        %3683 = vmatpush.msra.mxu0 0.0
        %3684 = vmatpush.msra.mxu0 0.0
        %3685 = vmatpush.msra.mxu0 0.0
        %3686 = vmatpush.msra.mxu0 0.0
        %3687 = vmatpush.msra.mxu0 0.0
        %3688 = vmatpush.msra.mxu0 0.0
        %3689 = vmatpush.msra.mxu0 0.0
        %3690 = vmatpush.msra.mxu0 0.0
        %3691 = vmatpush.msra.mxu0 %v3673
        %3692 = vmatpush.msra.mxu0 %v3672
        %3693 = vmatmul.f32.gmra.mxu0 %v3675
        %v3694 = vpop.f32.mrf.mxu0
        %v3695 = vadd.f32 0.0, %v3694
        %3696 = vdwg.mxu0
        %v3697 = vadd.f32 %v3644, %v3695
        %s3698 = scalar_lea.vmem [#allocation16], 24
        %v3699 = vld [vmem:[%s3698] sm:$0xff]
        %v3701 = vsel %vm2897, %v3699, 0
        %3703 = vmatpush.msra.mxu0 0.0
        %3704 = vmatpush.msra.mxu0 0.0
        %3705 = vmatpush.msra.mxu0 0.0
        %3706 = vmatpush.msra.mxu0 0.0
        %3707 = vmatpush.msra.mxu0 0.0
        %3708 = vmatpush.msra.mxu0 0.0
        %3709 = vmatpush.msra.mxu0 0.0
        %3710 = vmatpush.msra.mxu0 0.0
        %3711 = vmatpush.msra.mxu0 0.0
        %3712 = vmatpush.msra.mxu0 0.0
        %3713 = vmatpush.msra.mxu0 0.0
        %3714 = vmatpush.msra.mxu0 0.0
        %3715 = vmatpush.msra.mxu0 0.0
        %3716 = vmatpush.msra.mxu0 0.0
        %3717 = vmatpush.msra.mxu0 0.0
        %3718 = vmatpush.msra.mxu0 %v3544
        %3719 = vmatmul.f32.gmra.mxu0 %v3701
        %v3720 = vpop.f32.mrf.mxu0
        %v3721 = vadd.f32 0.0, %v3720
        %3722 = vdwg.mxu0
        %s3723 = scalar_lea.vmem [#allocation15], 48
        %v3724 = vld [vmem:[%s3723] sm:$0xff]
        %v3725 = vld [vmem:[%s3723 + $0x8] sm:$0xff]
        %v3727 = vsel %vm3599, %v3721, 0
        %3729 = vmatpush.msra.mxu0 0.0
        %3730 = vmatpush.msra.mxu0 0.0
        %3731 = vmatpush.msra.mxu0 0.0
        %3732 = vmatpush.msra.mxu0 0.0
        %3733 = vmatpush.msra.mxu0 0.0
        %3734 = vmatpush.msra.mxu0 0.0
        %3735 = vmatpush.msra.mxu0 0.0
        %3736 = vmatpush.msra.mxu0 0.0
        %3737 = vmatpush.msra.mxu0 0.0
        %3738 = vmatpush.msra.mxu0 0.0
        %3739 = vmatpush.msra.mxu0 0.0
        %3740 = vmatpush.msra.mxu0 0.0
        %3741 = vmatpush.msra.mxu0 0.0
        %3742 = vmatpush.msra.mxu0 0.0
        %3743 = vmatpush.msra.mxu0 %v3725
        %3744 = vmatpush.msra.mxu0 %v3724
        %3745 = vmatmul.f32.gmra.mxu0 %v3727
        %v3746 = vpop.f32.mrf.mxu0
        %v3747 = vadd.f32 0.0, %v3746
        %3748 = vdwg.mxu0
        %v3749 = vadd.f32 %v3697, %v3747
        %s3750 = scalar_lea.vmem [#allocation16], 32
        %v3751 = vld [vmem:[%s3750] sm:$0xff]
        %v3753 = vsel %vm2897, %v3751, 0
        %3755 = vmatpush.msra.mxu0 0.0
        %3756 = vmatpush.msra.mxu0 0.0
        %3757 = vmatpush.msra.mxu0 0.0
        %3758 = vmatpush.msra.mxu0 0.0
        %3759 = vmatpush.msra.mxu0 0.0
        %3760 = vmatpush.msra.mxu0 0.0
        %3761 = vmatpush.msra.mxu0 0.0
        %3762 = vmatpush.msra.mxu0 0.0
        %3763 = vmatpush.msra.mxu0 0.0
        %3764 = vmatpush.msra.mxu0 0.0
        %3765 = vmatpush.msra.mxu0 0.0
        %3766 = vmatpush.msra.mxu0 0.0
        %3767 = vmatpush.msra.mxu0 0.0
        %3768 = vmatpush.msra.mxu0 0.0
        %3769 = vmatpush.msra.mxu0 0.0
        %3770 = vmatpush.msra.mxu0 %v3544
        %3771 = vmatmul.f32.gmra.mxu0 %v3753
        %v3772 = vpop.f32.mrf.mxu0
        %v3773 = vadd.f32 0.0, %v3772
        %3774 = vdwg.mxu0
        %s3775 = scalar_lea.vmem [#allocation15], 64
        %v3776 = vld [vmem:[%s3775] sm:$0xff]
        %v3777 = vld [vmem:[%s3775 + $0x8] sm:$0xff]
        %v3779 = vsel %vm3599, %v3773, 0
        %3781 = vmatpush.msra.mxu0 0.0
        %3782 = vmatpush.msra.mxu0 0.0
        %3783 = vmatpush.msra.mxu0 0.0
        %3784 = vmatpush.msra.mxu0 0.0
        %3785 = vmatpush.msra.mxu0 0.0
        %3786 = vmatpush.msra.mxu0 0.0
        %3787 = vmatpush.msra.mxu0 0.0
        %3788 = vmatpush.msra.mxu0 0.0
        %3789 = vmatpush.msra.mxu0 0.0
        %3790 = vmatpush.msra.mxu0 0.0
        %3791 = vmatpush.msra.mxu0 0.0
        %3792 = vmatpush.msra.mxu0 0.0
        %3793 = vmatpush.msra.mxu0 0.0
        %3794 = vmatpush.msra.mxu0 0.0
        %3795 = vmatpush.msra.mxu0 %v3777
        %3796 = vmatpush.msra.mxu0 %v3776
        %3797 = vmatmul.f32.gmra.mxu0 %v3779
        %v3798 = vpop.f32.mrf.mxu0
        %v3799 = vadd.f32 0.0, %v3798
        %3800 = vdwg.mxu0
        %v3801 = vadd.f32 %v3749, %v3799
        %s3802 = scalar_lea.vmem [#allocation16], 40
        %v3803 = vld [vmem:[%s3802] sm:$0xff]
        %v3805 = vsel %vm2897, %v3803, 0
        %3807 = vmatpush.msra.mxu0 0.0
        %3808 = vmatpush.msra.mxu0 0.0
        %3809 = vmatpush.msra.mxu0 0.0
        %3810 = vmatpush.msra.mxu0 0.0
        %3811 = vmatpush.msra.mxu0 0.0
        %3812 = vmatpush.msra.mxu0 0.0
        %3813 = vmatpush.msra.mxu0 0.0
        %3814 = vmatpush.msra.mxu0 0.0
        %3815 = vmatpush.msra.mxu0 0.0
        %3816 = vmatpush.msra.mxu0 0.0
        %3817 = vmatpush.msra.mxu0 0.0
        %3818 = vmatpush.msra.mxu0 0.0
        %3819 = vmatpush.msra.mxu0 0.0
        %3820 = vmatpush.msra.mxu0 0.0
        %3821 = vmatpush.msra.mxu0 0.0
        %3822 = vmatpush.msra.mxu0 %v3544
        %3823 = vmatmul.f32.gmra.mxu0 %v3805
        %v3824 = vpop.f32.mrf.mxu0
        %v3825 = vadd.f32 0.0, %v3824
        %3826 = vdwg.mxu0
        %s3827 = scalar_lea.vmem [#allocation15], 80
        %v3828 = vld [vmem:[%s3827] sm:$0xff]
        %v3829 = vld [vmem:[%s3827 + $0x8] sm:$0xff]
        %v3831 = vsel %vm3599, %v3825, 0
        %3833 = vmatpush.msra.mxu0 0.0
        %3834 = vmatpush.msra.mxu0 0.0
        %3835 = vmatpush.msra.mxu0 0.0
        %3836 = vmatpush.msra.mxu0 0.0
        %3837 = vmatpush.msra.mxu0 0.0
        %3838 = vmatpush.msra.mxu0 0.0
        %3839 = vmatpush.msra.mxu0 0.0
        %3840 = vmatpush.msra.mxu0 0.0
        %3841 = vmatpush.msra.mxu0 0.0
        %3842 = vmatpush.msra.mxu0 0.0
        %3843 = vmatpush.msra.mxu0 0.0
        %3844 = vmatpush.msra.mxu0 0.0
        %3845 = vmatpush.msra.mxu0 0.0
        %3846 = vmatpush.msra.mxu0 0.0
        %3847 = vmatpush.msra.mxu0 %v3829
        %3848 = vmatpush.msra.mxu0 %v3828
        %3849 = vmatmul.f32.gmra.mxu0 %v3831
        %v3850 = vpop.f32.mrf.mxu0
        %v3851 = vadd.f32 0.0, %v3850
        %3852 = vdwg.mxu0
        %v3853 = vadd.f32 %v3801, %v3851
        %s3854 = scalar_lea.vmem [#allocation16], 48
        %v3855 = vld [vmem:[%s3854] sm:$0xff]
        %v3857 = vsel %vm2897, %v3855, 0
        %3859 = vmatpush.msra.mxu0 0.0
        %3860 = vmatpush.msra.mxu0 0.0
        %3861 = vmatpush.msra.mxu0 0.0
        %3862 = vmatpush.msra.mxu0 0.0
        %3863 = vmatpush.msra.mxu0 0.0
        %3864 = vmatpush.msra.mxu0 0.0
        %3865 = vmatpush.msra.mxu0 0.0
        %3866 = vmatpush.msra.mxu0 0.0
        %3867 = vmatpush.msra.mxu0 0.0
        %3868 = vmatpush.msra.mxu0 0.0
        %3869 = vmatpush.msra.mxu0 0.0
        %3870 = vmatpush.msra.mxu0 0.0
        %3871 = vmatpush.msra.mxu0 0.0
        %3872 = vmatpush.msra.mxu0 0.0
        %3873 = vmatpush.msra.mxu0 0.0
        %3874 = vmatpush.msra.mxu0 %v3544
        %3875 = vmatmul.f32.gmra.mxu0 %v3857
        %v3876 = vpop.f32.mrf.mxu0
        %v3877 = vadd.f32 0.0, %v3876
        %3878 = vdwg.mxu0
        %s3879 = scalar_lea.vmem [#allocation15], 96
        %v3880 = vld [vmem:[%s3879] sm:$0xff]
        %v3881 = vld [vmem:[%s3879 + $0x8] sm:$0xff]
        %v3883 = vsel %vm3599, %v3877, 0
        %3885 = vmatpush.msra.mxu0 0.0
        %3886 = vmatpush.msra.mxu0 0.0
        %3887 = vmatpush.msra.mxu0 0.0
        %3888 = vmatpush.msra.mxu0 0.0
        %3889 = vmatpush.msra.mxu0 0.0
        %3890 = vmatpush.msra.mxu0 0.0
        %3891 = vmatpush.msra.mxu0 0.0
        %3892 = vmatpush.msra.mxu0 0.0
        %3893 = vmatpush.msra.mxu0 0.0
        %3894 = vmatpush.msra.mxu0 0.0
        %3895 = vmatpush.msra.mxu0 0.0
        %3896 = vmatpush.msra.mxu0 0.0
        %3897 = vmatpush.msra.mxu0 0.0
        %3898 = vmatpush.msra.mxu0 0.0
        %3899 = vmatpush.msra.mxu0 %v3881
        %3900 = vmatpush.msra.mxu0 %v3880
        %3901 = vmatmul.f32.gmra.mxu0 %v3883
        %v3902 = vpop.f32.mrf.mxu0
        %v3903 = vadd.f32 0.0, %v3902
        %3904 = vdwg.mxu0
        %v3905 = vadd.f32 %v3853, %v3903
        %s3906 = scalar_lea.vmem [#allocation16], 56
        %v3907 = vld [vmem:[%s3906] sm:$0xff]
        %v3909 = vsel %vm2897, %v3907, 0
        %3911 = vmatpush.msra.mxu0 0.0
        %3912 = vmatpush.msra.mxu0 0.0
        %3913 = vmatpush.msra.mxu0 0.0
        %3914 = vmatpush.msra.mxu0 0.0
        %3915 = vmatpush.msra.mxu0 0.0
        %3916 = vmatpush.msra.mxu0 0.0
        %3917 = vmatpush.msra.mxu0 0.0
        %3918 = vmatpush.msra.mxu0 0.0
        %3919 = vmatpush.msra.mxu0 0.0
        %3920 = vmatpush.msra.mxu0 0.0
        %3921 = vmatpush.msra.mxu0 0.0
        %3922 = vmatpush.msra.mxu0 0.0
        %3923 = vmatpush.msra.mxu0 0.0
        %3924 = vmatpush.msra.mxu0 0.0
        %3925 = vmatpush.msra.mxu0 0.0
        %3926 = vmatpush.msra.mxu0 %v3544
        %3927 = vmatmul.f32.gmra.mxu0 %v3909
        %v3928 = vpop.f32.mrf.mxu0
        %v3929 = vadd.f32 0.0, %v3928
        %3930 = vdwg.mxu0
        %s3931 = scalar_lea.vmem [#allocation15], 112
        %v3932 = vld [vmem:[%s3931] sm:$0xff]
        %v3933 = vld [vmem:[%s3931 + $0x8] sm:$0xff]
        %v3935 = vsel %vm3599, %v3929, 0
        %3937 = vmatpush.msra.mxu0 0.0
        %3938 = vmatpush.msra.mxu0 0.0
        %3939 = vmatpush.msra.mxu0 0.0
        %3940 = vmatpush.msra.mxu0 0.0
        %3941 = vmatpush.msra.mxu0 0.0
        %3942 = vmatpush.msra.mxu0 0.0
        %3943 = vmatpush.msra.mxu0 0.0
        %3944 = vmatpush.msra.mxu0 0.0
        %3945 = vmatpush.msra.mxu0 0.0
        %3946 = vmatpush.msra.mxu0 0.0
        %3947 = vmatpush.msra.mxu0 0.0
        %3948 = vmatpush.msra.mxu0 0.0
        %3949 = vmatpush.msra.mxu0 0.0
        %3950 = vmatpush.msra.mxu0 0.0
        %3951 = vmatpush.msra.mxu0 %v3933
        %3952 = vmatpush.msra.mxu0 %v3932
        %3953 = vmatmul.f32.gmra.mxu0 %v3935
        %v3954 = vpop.f32.mrf.mxu0
        %v3955 = vadd.f32 0.0, %v3954
        %3956 = vdwg.mxu0
        %v3957 = vadd.f32 %v3905, %v3955
        %s3958 = scalar_lea.vmem [#allocation16], 64
        %v3959 = vld [vmem:[%s3958] sm:$0xff]
        %v3961 = vsel %vm2897, %v3959, 0
        %3963 = vmatpush.msra.mxu0 0.0
        %3964 = vmatpush.msra.mxu0 0.0
        %3965 = vmatpush.msra.mxu0 0.0
        %3966 = vmatpush.msra.mxu0 0.0
        %3967 = vmatpush.msra.mxu0 0.0
        %3968 = vmatpush.msra.mxu0 0.0
        %3969 = vmatpush.msra.mxu0 0.0
        %3970 = vmatpush.msra.mxu0 0.0
        %3971 = vmatpush.msra.mxu0 0.0
        %3972 = vmatpush.msra.mxu0 0.0
        %3973 = vmatpush.msra.mxu0 0.0
        %3974 = vmatpush.msra.mxu0 0.0
        %3975 = vmatpush.msra.mxu0 0.0
        %3976 = vmatpush.msra.mxu0 0.0
        %3977 = vmatpush.msra.mxu0 0.0
        %3978 = vmatpush.msra.mxu0 %v3544
        %3979 = vmatmul.f32.gmra.mxu0 %v3961
        %v3980 = vpop.f32.mrf.mxu0
        %v3981 = vadd.f32 0.0, %v3980
        %3982 = vdwg.mxu0
        %s3983 = scalar_lea.vmem [#allocation15], 128
        %v3984 = vld [vmem:[%s3983] sm:$0xff]
        %v3985 = vld [vmem:[%s3983 + $0x8] sm:$0xff]
        %v3987 = vsel %vm3599, %v3981, 0
        %3989 = vmatpush.msra.mxu0 0.0
        %3990 = vmatpush.msra.mxu0 0.0
        %3991 = vmatpush.msra.mxu0 0.0
        %3992 = vmatpush.msra.mxu0 0.0
        %3993 = vmatpush.msra.mxu0 0.0
        %3994 = vmatpush.msra.mxu0 0.0
        %3995 = vmatpush.msra.mxu0 0.0
        %3996 = vmatpush.msra.mxu0 0.0
        %3997 = vmatpush.msra.mxu0 0.0
        %3998 = vmatpush.msra.mxu0 0.0
        %3999 = vmatpush.msra.mxu0 0.0
        %4000 = vmatpush.msra.mxu0 0.0
        %4001 = vmatpush.msra.mxu0 0.0
        %4002 = vmatpush.msra.mxu0 0.0
        %4003 = vmatpush.msra.mxu0 %v3985
        %4004 = vmatpush.msra.mxu0 %v3984
        %4005 = vmatmul.f32.gmra.mxu0 %v3987
        %v4006 = vpop.f32.mrf.mxu0
        %v4007 = vadd.f32 0.0, %v4006
        %4008 = vdwg.mxu0
        %v4009 = vadd.f32 %v3957, %v4007
        %v4010 = vld [vmem:[#allocation18] sm:$0xff]
        %4012 = vset.pattern.permute.xlu0 0
        %4013 = vperm.xlu0 %4012, %v4010
        %v4014 = vpop.permute.xlu0 %4013
        %v4016 = vadd.f32 %v4009, %v4014
        %v4017 = vld [vmem:[#allocation19] sm:$0xff]
        %v4018 = vld [vmem:[#allocation19 + $0x8] sm:$0xff]
        %v4020 = vsel %vm3599, %v4016, 0
        %4022 = vmatpush.msra.mxu0 0.0
        %4023 = vmatpush.msra.mxu0 0.0
        %4024 = vmatpush.msra.mxu0 0.0
        %4025 = vmatpush.msra.mxu0 0.0
        %4026 = vmatpush.msra.mxu0 0.0
        %4027 = vmatpush.msra.mxu0 0.0
        %4028 = vmatpush.msra.mxu0 0.0
        %4029 = vmatpush.msra.mxu0 0.0
        %4030 = vmatpush.msra.mxu0 0.0
        %4031 = vmatpush.msra.mxu0 0.0
        %4032 = vmatpush.msra.mxu0 0.0
        %4033 = vmatpush.msra.mxu0 0.0
        %4034 = vmatpush.msra.mxu0 0.0
        %4035 = vmatpush.msra.mxu0 0.0
        %4036 = vmatpush.msra.mxu0 %v4018
        %4037 = vmatpush.msra.mxu0 %v4017
        %4038 = vmatmul.f32.gmra.mxu0 %v4020
        %v4039 = vpop.f32.mrf.mxu0
        %v4040 = vadd.f32 0.0, %v4039
        %4041 = vdwg.mxu0
        %s4042 = scalar_lea.vmem [#allocation19], 16
        %v4043 = vld [vmem:[%s4042] sm:$0xff]
        %v4044 = vld [vmem:[%s4042 + $0x8] sm:$0xff]
        %4045 = vmatpush.msra.mxu0 0.0
        %4046 = vmatpush.msra.mxu0 0.0
        %4047 = vmatpush.msra.mxu0 0.0
        %4048 = vmatpush.msra.mxu0 0.0
        %4049 = vmatpush.msra.mxu0 0.0
        %4050 = vmatpush.msra.mxu0 0.0
        %4051 = vmatpush.msra.mxu0 0.0
        %4052 = vmatpush.msra.mxu0 0.0
        %4053 = vmatpush.msra.mxu0 0.0
        %4054 = vmatpush.msra.mxu0 0.0
        %4055 = vmatpush.msra.mxu0 0.0
        %4056 = vmatpush.msra.mxu0 0.0
        %4057 = vmatpush.msra.mxu0 0.0
        %4058 = vmatpush.msra.mxu0 0.0
        %4059 = vmatpush.msra.mxu0 %v4044
        %4060 = vmatpush.msra.mxu0 %v4043
        %4061 = vmatmul.f32.gmra.mxu0 %v4020
        %v4062 = vpop.f32.mrf.mxu0
        %v4063 = vadd.f32 0.0, %v4062
        %4064 = vdwg.mxu0
        %v4065 = vmax.f32 %v4040, %v4063
        %s4066 = scalar_lea.vmem [#allocation19], 32
        %v4067 = vld [vmem:[%s4066] sm:$0xff]
        %v4068 = vld [vmem:[%s4066 + $0x8] sm:$0xff]
        %4069 = vmatpush.msra.mxu0 0.0
        %4070 = vmatpush.msra.mxu0 0.0
        %4071 = vmatpush.msra.mxu0 0.0
        %4072 = vmatpush.msra.mxu0 0.0
        %4073 = vmatpush.msra.mxu0 0.0
        %4074 = vmatpush.msra.mxu0 0.0
        %4075 = vmatpush.msra.mxu0 0.0
        %4076 = vmatpush.msra.mxu0 0.0
        %4077 = vmatpush.msra.mxu0 0.0
        %4078 = vmatpush.msra.mxu0 0.0
        %4079 = vmatpush.msra.mxu0 0.0
        %4080 = vmatpush.msra.mxu0 0.0
        %4081 = vmatpush.msra.mxu0 0.0
        %4082 = vmatpush.msra.mxu0 0.0
        %4083 = vmatpush.msra.mxu0 %v4068
        %4084 = vmatpush.msra.mxu0 %v4067
        %4085 = vmatmul.f32.gmra.mxu0 %v4020
        %v4086 = vpop.f32.mrf.mxu0
        %v4087 = vadd.f32 0.0, %v4086
        %4088 = vdwg.mxu0
        %v4089 = vmax.f32 %v4065, %v4087
        %s4090 = scalar_lea.vmem [#allocation19], 48
        %v4091 = vld [vmem:[%s4090] sm:$0xff]
        %v4092 = vld [vmem:[%s4090 + $0x8] sm:$0xff]
        %4093 = vmatpush.msra.mxu0 0.0
        %4094 = vmatpush.msra.mxu0 0.0
        %4095 = vmatpush.msra.mxu0 0.0
        %4096 = vmatpush.msra.mxu0 0.0
        %4097 = vmatpush.msra.mxu0 0.0
        %4098 = vmatpush.msra.mxu0 0.0
        %4099 = vmatpush.msra.mxu0 0.0
        %4100 = vmatpush.msra.mxu0 0.0
        %4101 = vmatpush.msra.mxu0 0.0
        %4102 = vmatpush.msra.mxu0 0.0
        %4103 = vmatpush.msra.mxu0 0.0
        %4104 = vmatpush.msra.mxu0 0.0
        %4105 = vmatpush.msra.mxu0 0.0
        %4106 = vmatpush.msra.mxu0 0.0
        %4107 = vmatpush.msra.mxu0 %v4092
        %4108 = vmatpush.msra.mxu0 %v4091
        %4109 = vmatmul.f32.gmra.mxu0 %v4020
        %v4110 = vpop.f32.mrf.mxu0
        %v4111 = vadd.f32 0.0, %v4110
        %4112 = vdwg.mxu0
        %v4113 = vmax.f32 %v4089, %v4111
        %v4114 = vmax.f32 %v4113, 0.0
        %v4115 = vld [vmem:[#allocation22] sm:$0x7]
        %v4117 = vsel %vm2897, %v4115, 0
        %4119 = vmatpush.msra.mxu0 0.0
        %4120 = vmatpush.msra.mxu0 0.0
        %4121 = vmatpush.msra.mxu0 0.0
        %4122 = vmatpush.msra.mxu0 0.0
        %4123 = vmatpush.msra.mxu0 0.0
        %4124 = vmatpush.msra.mxu0 0.0
        %4125 = vmatpush.msra.mxu0 0.0
        %4126 = vmatpush.msra.mxu0 0.0
        %4127 = vmatpush.msra.mxu0 0.0
        %4128 = vmatpush.msra.mxu0 0.0
        %4129 = vmatpush.msra.mxu0 0.0
        %4130 = vmatpush.msra.mxu0 0.0
        %4131 = vmatpush.msra.mxu0 0.0
        %4132 = vmatpush.msra.mxu0 0.0
        %4133 = vmatpush.msra.mxu0 0.0
        %4134 = vmatpush.msra.mxu0 %v4114
        %4135 = vmatmul.f32.gmra.mxu0 %v4117
        %v4136 = vpop.f32.mrf.mxu0
        %v4137 = vadd.f32 0.0, %v4136
        %4138 = vdwg.mxu0
        %v4139 = vld [vmem:[#allocation21] sm:$0xf]
        %s4140 = scalar_lea.vmem [#allocation22], 4
        %v4141 = vld [vmem:[%s4140] sm:$0x7]
        %v4143 = vsel %vm2897, %v4141, 0
        %4145 = vmatpush.msra.mxu0 0.0
        %4146 = vmatpush.msra.mxu0 0.0
        %4147 = vmatpush.msra.mxu0 0.0
        %4148 = vmatpush.msra.mxu0 0.0
        %4149 = vmatpush.msra.mxu0 0.0
        %4150 = vmatpush.msra.mxu0 0.0
        %4151 = vmatpush.msra.mxu0 0.0
        %4152 = vmatpush.msra.mxu0 0.0
        %4153 = vmatpush.msra.mxu0 0.0
        %4154 = vmatpush.msra.mxu0 0.0
        %4155 = vmatpush.msra.mxu0 0.0
        %4156 = vmatpush.msra.mxu0 0.0
        %4157 = vmatpush.msra.mxu0 0.0
        %4158 = vmatpush.msra.mxu0 0.0
        %4159 = vmatpush.msra.mxu0 0.0
        %4160 = vmatpush.msra.mxu0 %v4114
        %4161 = vmatmul.f32.gmra.mxu0 %v4143
        %v4162 = vpop.f32.mrf.mxu0
        %v4163 = vadd.f32 0.0, %v4162
        %4164 = vdwg.mxu0
        %s4165 = scalar_lea.vmem [#allocation21], 4
        %v4166 = vld [vmem:[%s4165] sm:$0xf]
        %v4168 = vsel %vm810, %v4163, 0
        %v4171 = vsel %vm814, %v4166, 0
        %4173 = vmatpush.msra.mxu0 0.0
        %4174 = vmatpush.msra.mxu0 0.0
        %4175 = vmatpush.msra.mxu0 0.0
        %4176 = vmatpush.msra.mxu0 0.0
        %4177 = vmatpush.msra.mxu0 0.0
        %4178 = vmatpush.msra.mxu0 0.0
        %4179 = vmatpush.msra.mxu0 0.0
        %4180 = vmatpush.msra.mxu0 0.0
        %4181 = vmatpush.msra.mxu0 0.0
        %4182 = vmatpush.msra.mxu0 0.0
        %4183 = vmatpush.msra.mxu0 0.0
        %4184 = vmatpush.msra.mxu0 0.0
        %4185 = vmatpush.msra.mxu0 0.0
        %4186 = vmatpush.msra.mxu0 0.0
        %4187 = vmatpush.msra.mxu0 0.0
        %4188 = vmatpush.msra.mxu0 %v4171
        %4189 = vmatmul.f32.gmra.mxu0 %v4168
        %v4190 = vpop.f32.mrf.mxu0
        %v4191 = vadd.f32 0.0, %v4190
        %4192 = vdwg.mxu0
        %v4194 = vsel %vm810, %v4137, 0
        %v4197 = vsel %vm814, %v4139, 0
        %4199 = vmatpush.msra.mxu0 0.0
        %4200 = vmatpush.msra.mxu0 0.0
        %4201 = vmatpush.msra.mxu0 0.0
        %4202 = vmatpush.msra.mxu0 0.0
        %4203 = vmatpush.msra.mxu0 0.0
        %4204 = vmatpush.msra.mxu0 0.0
        %4205 = vmatpush.msra.mxu0 0.0
        %4206 = vmatpush.msra.mxu0 0.0
        %4207 = vmatpush.msra.mxu0 0.0
        %4208 = vmatpush.msra.mxu0 0.0
        %4209 = vmatpush.msra.mxu0 0.0
        %4210 = vmatpush.msra.mxu0 0.0
        %4211 = vmatpush.msra.mxu0 0.0
        %4212 = vmatpush.msra.mxu0 0.0
        %4213 = vmatpush.msra.mxu0 0.0
        %4214 = vmatpush.msra.mxu0 %v4197
        %4215 = vmatmul.f32.gmra.mxu0 %v4194
        %v4216 = vpop.f32.mrf.mxu0
        %v4217 = vadd.f32 %v4191, %v4216
        %4218 = vdwg.mxu0
        %s4219 = scalar_lea.vmem [#allocation22], 8
        %v4220 = vld [vmem:[%s4219] sm:$0x7]
        %v4222 = vsel %vm2897, %v4220, 0
        %4224 = vmatpush.msra.mxu0 0.0
        %4225 = vmatpush.msra.mxu0 0.0
        %4226 = vmatpush.msra.mxu0 0.0
        %4227 = vmatpush.msra.mxu0 0.0
        %4228 = vmatpush.msra.mxu0 0.0
        %4229 = vmatpush.msra.mxu0 0.0
        %4230 = vmatpush.msra.mxu0 0.0
        %4231 = vmatpush.msra.mxu0 0.0
        %4232 = vmatpush.msra.mxu0 0.0
        %4233 = vmatpush.msra.mxu0 0.0
        %4234 = vmatpush.msra.mxu0 0.0
        %4235 = vmatpush.msra.mxu0 0.0
        %4236 = vmatpush.msra.mxu0 0.0
        %4237 = vmatpush.msra.mxu0 0.0
        %4238 = vmatpush.msra.mxu0 0.0
        %4239 = vmatpush.msra.mxu0 %v4114
        %4240 = vmatmul.f32.gmra.mxu0 %v4222
        %v4241 = vpop.f32.mrf.mxu0
        %v4242 = vadd.f32 0.0, %v4241
        %4243 = vdwg.mxu0
        %s4244 = scalar_lea.vmem [#allocation21], 8
        %v4245 = vld [vmem:[%s4244] sm:$0xf]
        %v4247 = vsel %vm810, %v4242, 0
        %v4250 = vsel %vm814, %v4245, 0
        %4252 = vmatpush.msra.mxu0 0.0
        %4253 = vmatpush.msra.mxu0 0.0
        %4254 = vmatpush.msra.mxu0 0.0
        %4255 = vmatpush.msra.mxu0 0.0
        %4256 = vmatpush.msra.mxu0 0.0
        %4257 = vmatpush.msra.mxu0 0.0
        %4258 = vmatpush.msra.mxu0 0.0
        %4259 = vmatpush.msra.mxu0 0.0
        %4260 = vmatpush.msra.mxu0 0.0
        %4261 = vmatpush.msra.mxu0 0.0
        %4262 = vmatpush.msra.mxu0 0.0
        %4263 = vmatpush.msra.mxu0 0.0
        %4264 = vmatpush.msra.mxu0 0.0
        %4265 = vmatpush.msra.mxu0 0.0
        %4266 = vmatpush.msra.mxu0 0.0
        %4267 = vmatpush.msra.mxu0 %v4250
        %4268 = vmatmul.f32.gmra.mxu0 %v4247
        %v4269 = vpop.f32.mrf.mxu0
        %v4270 = vadd.f32 0.0, %v4269
        %4271 = vdwg.mxu0
        %v4272 = vadd.f32 %v4217, %v4270
        %s4273 = scalar_lea.vmem [#allocation22], 12
        %v4274 = vld [vmem:[%s4273] sm:$0x7]
        %v4276 = vsel %vm2897, %v4274, 0
        %4278 = vmatpush.msra.mxu0 0.0
        %4279 = vmatpush.msra.mxu0 0.0
        %4280 = vmatpush.msra.mxu0 0.0
        %4281 = vmatpush.msra.mxu0 0.0
        %4282 = vmatpush.msra.mxu0 0.0
        %4283 = vmatpush.msra.mxu0 0.0
        %4284 = vmatpush.msra.mxu0 0.0
        %4285 = vmatpush.msra.mxu0 0.0
        %4286 = vmatpush.msra.mxu0 0.0
        %4287 = vmatpush.msra.mxu0 0.0
        %4288 = vmatpush.msra.mxu0 0.0
        %4289 = vmatpush.msra.mxu0 0.0
        %4290 = vmatpush.msra.mxu0 0.0
        %4291 = vmatpush.msra.mxu0 0.0
        %4292 = vmatpush.msra.mxu0 0.0
        %4293 = vmatpush.msra.mxu0 %v4114
        %4294 = vmatmul.f32.gmra.mxu0 %v4276
        %v4295 = vpop.f32.mrf.mxu0
        %v4296 = vadd.f32 0.0, %v4295
        %4297 = vdwg.mxu0
        %s4298 = scalar_lea.vmem [#allocation21], 12
        %v4299 = vld [vmem:[%s4298] sm:$0xf]
        %v4301 = vsel %vm810, %v4296, 0
        %v4304 = vsel %vm814, %v4299, 0
        %4306 = vmatpush.msra.mxu0 0.0
        %4307 = vmatpush.msra.mxu0 0.0
        %4308 = vmatpush.msra.mxu0 0.0
        %4309 = vmatpush.msra.mxu0 0.0
        %4310 = vmatpush.msra.mxu0 0.0
        %4311 = vmatpush.msra.mxu0 0.0
        %4312 = vmatpush.msra.mxu0 0.0
        %4313 = vmatpush.msra.mxu0 0.0
        %4314 = vmatpush.msra.mxu0 0.0
        %4315 = vmatpush.msra.mxu0 0.0
        %4316 = vmatpush.msra.mxu0 0.0
        %4317 = vmatpush.msra.mxu0 0.0
        %4318 = vmatpush.msra.mxu0 0.0
        %4319 = vmatpush.msra.mxu0 0.0
        %4320 = vmatpush.msra.mxu0 0.0
        %4321 = vmatpush.msra.mxu0 %v4304
        %4322 = vmatmul.f32.gmra.mxu0 %v4301
        %v4323 = vpop.f32.mrf.mxu0
        %v4324 = vadd.f32 0.0, %v4323
        %4325 = vdwg.mxu0
        %v4326 = vadd.f32 %v4272, %v4324
        %s4327 = scalar_lea.vmem [#allocation22], 16
        %v4328 = vld [vmem:[%s4327] sm:$0x7]
        %v4330 = vsel %vm2897, %v4328, 0
        %4332 = vmatpush.msra.mxu0 0.0
        %4333 = vmatpush.msra.mxu0 0.0
        %4334 = vmatpush.msra.mxu0 0.0
        %4335 = vmatpush.msra.mxu0 0.0
        %4336 = vmatpush.msra.mxu0 0.0
        %4337 = vmatpush.msra.mxu0 0.0
        %4338 = vmatpush.msra.mxu0 0.0
        %4339 = vmatpush.msra.mxu0 0.0
        %4340 = vmatpush.msra.mxu0 0.0
        %4341 = vmatpush.msra.mxu0 0.0
        %4342 = vmatpush.msra.mxu0 0.0
        %4343 = vmatpush.msra.mxu0 0.0
        %4344 = vmatpush.msra.mxu0 0.0
        %4345 = vmatpush.msra.mxu0 0.0
        %4346 = vmatpush.msra.mxu0 0.0
        %4347 = vmatpush.msra.mxu0 %v4114
        %4348 = vmatmul.f32.gmra.mxu0 %v4330
        %v4349 = vpop.f32.mrf.mxu0
        %v4350 = vadd.f32 0.0, %v4349
        %4351 = vdwg.mxu0
        %s4352 = scalar_lea.vmem [#allocation21], 16
        %v4353 = vld [vmem:[%s4352] sm:$0xf]
        %v4355 = vsel %vm810, %v4350, 0
        %v4358 = vsel %vm814, %v4353, 0
        %4360 = vmatpush.msra.mxu0 0.0
        %4361 = vmatpush.msra.mxu0 0.0
        %4362 = vmatpush.msra.mxu0 0.0
        %4363 = vmatpush.msra.mxu0 0.0
        %4364 = vmatpush.msra.mxu0 0.0
        %4365 = vmatpush.msra.mxu0 0.0
        %4366 = vmatpush.msra.mxu0 0.0
        %4367 = vmatpush.msra.mxu0 0.0
        %4368 = vmatpush.msra.mxu0 0.0
        %4369 = vmatpush.msra.mxu0 0.0
        %4370 = vmatpush.msra.mxu0 0.0
        %4371 = vmatpush.msra.mxu0 0.0
        %4372 = vmatpush.msra.mxu0 0.0
        %4373 = vmatpush.msra.mxu0 0.0
        %4374 = vmatpush.msra.mxu0 0.0
        %4375 = vmatpush.msra.mxu0 %v4358
        %4376 = vmatmul.f32.gmra.mxu0 %v4355
        %v4377 = vpop.f32.mrf.mxu0
        %v4378 = vadd.f32 0.0, %v4377
        %4379 = vdwg.mxu0
        %v4380 = vadd.f32 %v4326, %v4378
        %s4381 = scalar_lea.vmem [#allocation22], 20
        %v4382 = vld [vmem:[%s4381] sm:$0x7]
        %v4384 = vsel %vm2897, %v4382, 0
        %4386 = vmatpush.msra.mxu0 0.0
        %4387 = vmatpush.msra.mxu0 0.0
        %4388 = vmatpush.msra.mxu0 0.0
        %4389 = vmatpush.msra.mxu0 0.0
        %4390 = vmatpush.msra.mxu0 0.0
        %4391 = vmatpush.msra.mxu0 0.0
        %4392 = vmatpush.msra.mxu0 0.0
        %4393 = vmatpush.msra.mxu0 0.0
        %4394 = vmatpush.msra.mxu0 0.0
        %4395 = vmatpush.msra.mxu0 0.0
        %4396 = vmatpush.msra.mxu0 0.0
        %4397 = vmatpush.msra.mxu0 0.0
        %4398 = vmatpush.msra.mxu0 0.0
        %4399 = vmatpush.msra.mxu0 0.0
        %4400 = vmatpush.msra.mxu0 0.0
        %4401 = vmatpush.msra.mxu0 %v4114
        %4402 = vmatmul.f32.gmra.mxu0 %v4384
        %v4403 = vpop.f32.mrf.mxu0
        %v4404 = vadd.f32 0.0, %v4403
        %4405 = vdwg.mxu0
        %s4406 = scalar_lea.vmem [#allocation21], 20
        %v4407 = vld [vmem:[%s4406] sm:$0xf]
        %v4409 = vsel %vm810, %v4404, 0
        %v4412 = vsel %vm814, %v4407, 0
        %4414 = vmatpush.msra.mxu0 0.0
        %4415 = vmatpush.msra.mxu0 0.0
        %4416 = vmatpush.msra.mxu0 0.0
        %4417 = vmatpush.msra.mxu0 0.0
        %4418 = vmatpush.msra.mxu0 0.0
        %4419 = vmatpush.msra.mxu0 0.0
        %4420 = vmatpush.msra.mxu0 0.0
        %4421 = vmatpush.msra.mxu0 0.0
        %4422 = vmatpush.msra.mxu0 0.0
        %4423 = vmatpush.msra.mxu0 0.0
        %4424 = vmatpush.msra.mxu0 0.0
        %4425 = vmatpush.msra.mxu0 0.0
        %4426 = vmatpush.msra.mxu0 0.0
        %4427 = vmatpush.msra.mxu0 0.0
        %4428 = vmatpush.msra.mxu0 0.0
        %4429 = vmatpush.msra.mxu0 %v4412
        %4430 = vmatmul.f32.gmra.mxu0 %v4409
        %v4431 = vpop.f32.mrf.mxu0
        %v4432 = vadd.f32 0.0, %v4431
        %4433 = vdwg.mxu0
        %v4434 = vadd.f32 %v4380, %v4432
        %s4435 = scalar_lea.vmem [#allocation22], 24
        %v4436 = vld [vmem:[%s4435] sm:$0x7]
        %v4438 = vsel %vm2897, %v4436, 0
        %4440 = vmatpush.msra.mxu0 0.0
        %4441 = vmatpush.msra.mxu0 0.0
        %4442 = vmatpush.msra.mxu0 0.0
        %4443 = vmatpush.msra.mxu0 0.0
        %4444 = vmatpush.msra.mxu0 0.0
        %4445 = vmatpush.msra.mxu0 0.0
        %4446 = vmatpush.msra.mxu0 0.0
        %4447 = vmatpush.msra.mxu0 0.0
        %4448 = vmatpush.msra.mxu0 0.0
        %4449 = vmatpush.msra.mxu0 0.0
        %4450 = vmatpush.msra.mxu0 0.0
        %4451 = vmatpush.msra.mxu0 0.0
        %4452 = vmatpush.msra.mxu0 0.0
        %4453 = vmatpush.msra.mxu0 0.0
        %4454 = vmatpush.msra.mxu0 0.0
        %4455 = vmatpush.msra.mxu0 %v4114
        %4456 = vmatmul.f32.gmra.mxu0 %v4438
        %v4457 = vpop.f32.mrf.mxu0
        %v4458 = vadd.f32 0.0, %v4457
        %4459 = vdwg.mxu0
        %s4460 = scalar_lea.vmem [#allocation21], 24
        %v4461 = vld [vmem:[%s4460] sm:$0xf]
        %v4463 = vsel %vm810, %v4458, 0
        %v4466 = vsel %vm814, %v4461, 0
        %4468 = vmatpush.msra.mxu0 0.0
        %4469 = vmatpush.msra.mxu0 0.0
        %4470 = vmatpush.msra.mxu0 0.0
        %4471 = vmatpush.msra.mxu0 0.0
        %4472 = vmatpush.msra.mxu0 0.0
        %4473 = vmatpush.msra.mxu0 0.0
        %4474 = vmatpush.msra.mxu0 0.0
        %4475 = vmatpush.msra.mxu0 0.0
        %4476 = vmatpush.msra.mxu0 0.0
        %4477 = vmatpush.msra.mxu0 0.0
        %4478 = vmatpush.msra.mxu0 0.0
        %4479 = vmatpush.msra.mxu0 0.0
        %4480 = vmatpush.msra.mxu0 0.0
        %4481 = vmatpush.msra.mxu0 0.0
        %4482 = vmatpush.msra.mxu0 0.0
        %4483 = vmatpush.msra.mxu0 %v4466
        %4484 = vmatmul.f32.gmra.mxu0 %v4463
        %v4485 = vpop.f32.mrf.mxu0
        %v4486 = vadd.f32 0.0, %v4485
        %4487 = vdwg.mxu0
        %v4488 = vadd.f32 %v4434, %v4486
        %s4489 = scalar_lea.vmem [#allocation22], 28
        %v4490 = vld [vmem:[%s4489] sm:$0x7]
        %v4492 = vsel %vm2897, %v4490, 0
        %4494 = vmatpush.msra.mxu0 0.0
        %4495 = vmatpush.msra.mxu0 0.0
        %4496 = vmatpush.msra.mxu0 0.0
        %4497 = vmatpush.msra.mxu0 0.0
        %4498 = vmatpush.msra.mxu0 0.0
        %4499 = vmatpush.msra.mxu0 0.0
        %4500 = vmatpush.msra.mxu0 0.0
        %4501 = vmatpush.msra.mxu0 0.0
        %4502 = vmatpush.msra.mxu0 0.0
        %4503 = vmatpush.msra.mxu0 0.0
        %4504 = vmatpush.msra.mxu0 0.0
        %4505 = vmatpush.msra.mxu0 0.0
        %4506 = vmatpush.msra.mxu0 0.0
        %4507 = vmatpush.msra.mxu0 0.0
        %4508 = vmatpush.msra.mxu0 0.0
        %4509 = vmatpush.msra.mxu0 %v4114
        %4510 = vmatmul.f32.gmra.mxu0 %v4492
        %v4511 = vpop.f32.mrf.mxu0
        %v4512 = vadd.f32 0.0, %v4511
        %4513 = vdwg.mxu0
        %s4514 = scalar_lea.vmem [#allocation21], 28
        %v4515 = vld [vmem:[%s4514] sm:$0xf]
        %v4517 = vsel %vm810, %v4512, 0
        %v4520 = vsel %vm814, %v4515, 0
        %4522 = vmatpush.msra.mxu0 0.0
        %4523 = vmatpush.msra.mxu0 0.0
        %4524 = vmatpush.msra.mxu0 0.0
        %4525 = vmatpush.msra.mxu0 0.0
        %4526 = vmatpush.msra.mxu0 0.0
        %4527 = vmatpush.msra.mxu0 0.0
        %4528 = vmatpush.msra.mxu0 0.0
        %4529 = vmatpush.msra.mxu0 0.0
        %4530 = vmatpush.msra.mxu0 0.0
        %4531 = vmatpush.msra.mxu0 0.0
        %4532 = vmatpush.msra.mxu0 0.0
        %4533 = vmatpush.msra.mxu0 0.0
        %4534 = vmatpush.msra.mxu0 0.0
        %4535 = vmatpush.msra.mxu0 0.0
        %4536 = vmatpush.msra.mxu0 0.0
        %4537 = vmatpush.msra.mxu0 %v4520
        %4538 = vmatmul.f32.gmra.mxu0 %v4517
        %v4539 = vpop.f32.mrf.mxu0
        %v4540 = vadd.f32 0.0, %v4539
        %4541 = vdwg.mxu0
        %v4542 = vadd.f32 %v4488, %v4540
        %s4543 = scalar_lea.vmem [#allocation22], 32
        %v4544 = vld [vmem:[%s4543] sm:$0x7]
        %v4546 = vsel %vm2897, %v4544, 0
        %4548 = vmatpush.msra.mxu0 0.0
        %4549 = vmatpush.msra.mxu0 0.0
        %4550 = vmatpush.msra.mxu0 0.0
        %4551 = vmatpush.msra.mxu0 0.0
        %4552 = vmatpush.msra.mxu0 0.0
        %4553 = vmatpush.msra.mxu0 0.0
        %4554 = vmatpush.msra.mxu0 0.0
        %4555 = vmatpush.msra.mxu0 0.0
        %4556 = vmatpush.msra.mxu0 0.0
        %4557 = vmatpush.msra.mxu0 0.0
        %4558 = vmatpush.msra.mxu0 0.0
        %4559 = vmatpush.msra.mxu0 0.0
        %4560 = vmatpush.msra.mxu0 0.0
        %4561 = vmatpush.msra.mxu0 0.0
        %4562 = vmatpush.msra.mxu0 0.0
        %4563 = vmatpush.msra.mxu0 %v4114
        %4564 = vmatmul.f32.gmra.mxu0 %v4546
        %v4565 = vpop.f32.mrf.mxu0
        %v4566 = vadd.f32 0.0, %v4565
        %4567 = vdwg.mxu0
        %s4568 = scalar_lea.vmem [#allocation21], 32
        %v4569 = vld [vmem:[%s4568] sm:$0xf]
        %v4571 = vsel %vm810, %v4566, 0
        %v4574 = vsel %vm814, %v4569, 0
        %4576 = vmatpush.msra.mxu0 0.0
        %4577 = vmatpush.msra.mxu0 0.0
        %4578 = vmatpush.msra.mxu0 0.0
        %4579 = vmatpush.msra.mxu0 0.0
        %4580 = vmatpush.msra.mxu0 0.0
        %4581 = vmatpush.msra.mxu0 0.0
        %4582 = vmatpush.msra.mxu0 0.0
        %4583 = vmatpush.msra.mxu0 0.0
        %4584 = vmatpush.msra.mxu0 0.0
        %4585 = vmatpush.msra.mxu0 0.0
        %4586 = vmatpush.msra.mxu0 0.0
        %4587 = vmatpush.msra.mxu0 0.0
        %4588 = vmatpush.msra.mxu0 0.0
        %4589 = vmatpush.msra.mxu0 0.0
        %4590 = vmatpush.msra.mxu0 0.0
        %4591 = vmatpush.msra.mxu0 %v4574
        %4592 = vmatmul.f32.gmra.mxu0 %v4571
        %v4593 = vpop.f32.mrf.mxu0
        %v4594 = vadd.f32 0.0, %v4593
        %4595 = vdwg.mxu0
        %v4596 = vadd.f32 %v4542, %v4594
        %v4597 = vld [vmem:[#allocation24] sm:$0x7]
        %4599 = vset.pattern.permute.xlu0 0
        %4600 = vperm.xlu0 %4599, %v4597
        %v4601 = vpop.permute.xlu0 %4600
        %v4603 = vadd.f32 %v4596, %v4601
        %v4604 = vld [vmem:[#allocation25] sm:$0xf]
        %v4606 = vsel %vm810, %v4603, 0
        %v4609 = vsel %vm814, %v4604, 0
        %4611 = vmatpush.msra.mxu0 0.0
        %4612 = vmatpush.msra.mxu0 0.0
        %4613 = vmatpush.msra.mxu0 0.0
        %4614 = vmatpush.msra.mxu0 0.0
        %4615 = vmatpush.msra.mxu0 0.0
        %4616 = vmatpush.msra.mxu0 0.0
        %4617 = vmatpush.msra.mxu0 0.0
        %4618 = vmatpush.msra.mxu0 0.0
        %4619 = vmatpush.msra.mxu0 0.0
        %4620 = vmatpush.msra.mxu0 0.0
        %4621 = vmatpush.msra.mxu0 0.0
        %4622 = vmatpush.msra.mxu0 0.0
        %4623 = vmatpush.msra.mxu0 0.0
        %4624 = vmatpush.msra.mxu0 0.0
        %4625 = vmatpush.msra.mxu0 0.0
        %4626 = vmatpush.msra.mxu0 %v4609
        %4627 = vmatmul.f32.gmra.mxu0 %v4606
        %v4628 = vpop.f32.mrf.mxu0
        %v4629 = vadd.f32 0.0, %v4628
        %4630 = vdwg.mxu0
        %s4631 = scalar_lea.vmem [#allocation25], 4
        %v4632 = vld [vmem:[%s4631] sm:$0xf]
        %v4634 = vsel %vm814, %v4632, 0
        %4636 = vmatpush.msra.mxu0 0.0
        %4637 = vmatpush.msra.mxu0 0.0
        %4638 = vmatpush.msra.mxu0 0.0
        %4639 = vmatpush.msra.mxu0 0.0
        %4640 = vmatpush.msra.mxu0 0.0
        %4641 = vmatpush.msra.mxu0 0.0
        %4642 = vmatpush.msra.mxu0 0.0
        %4643 = vmatpush.msra.mxu0 0.0
        %4644 = vmatpush.msra.mxu0 0.0
        %4645 = vmatpush.msra.mxu0 0.0
        %4646 = vmatpush.msra.mxu0 0.0
        %4647 = vmatpush.msra.mxu0 0.0
        %4648 = vmatpush.msra.mxu0 0.0
        %4649 = vmatpush.msra.mxu0 0.0
        %4650 = vmatpush.msra.mxu0 0.0
        %4651 = vmatpush.msra.mxu0 %v4634
        %4652 = vmatmul.f32.gmra.mxu0 %v4606
        %v4653 = vpop.f32.mrf.mxu0
        %v4654 = vadd.f32 0.0, %v4653
        %4655 = vdwg.mxu0
        %v4656 = vmax.f32 %v4629, %v4654
        %s4657 = scalar_lea.vmem [#allocation25], 8
        %v4658 = vld [vmem:[%s4657] sm:$0xf]
        %v4660 = vsel %vm814, %v4658, 0
        %4662 = vmatpush.msra.mxu0 0.0
        %4663 = vmatpush.msra.mxu0 0.0
        %4664 = vmatpush.msra.mxu0 0.0
        %4665 = vmatpush.msra.mxu0 0.0
        %4666 = vmatpush.msra.mxu0 0.0
        %4667 = vmatpush.msra.mxu0 0.0
        %4668 = vmatpush.msra.mxu0 0.0
        %4669 = vmatpush.msra.mxu0 0.0
        %4670 = vmatpush.msra.mxu0 0.0
        %4671 = vmatpush.msra.mxu0 0.0
        %4672 = vmatpush.msra.mxu0 0.0
        %4673 = vmatpush.msra.mxu0 0.0
        %4674 = vmatpush.msra.mxu0 0.0
        %4675 = vmatpush.msra.mxu0 0.0
        %4676 = vmatpush.msra.mxu0 0.0
        %4677 = vmatpush.msra.mxu0 %v4660
        %4678 = vmatmul.f32.gmra.mxu0 %v4606
        %v4679 = vpop.f32.mrf.mxu0
        %v4680 = vadd.f32 0.0, %v4679
        %4681 = vdwg.mxu0
        %v4682 = vmax.f32 %v4656, %v4680
        %s4683 = scalar_lea.vmem [#allocation25], 12
        %v4684 = vld [vmem:[%s4683] sm:$0xf]
        %v4686 = vsel %vm814, %v4684, 0
        %4688 = vmatpush.msra.mxu0 0.0
        %4689 = vmatpush.msra.mxu0 0.0
        %4690 = vmatpush.msra.mxu0 0.0
        %4691 = vmatpush.msra.mxu0 0.0
        %4692 = vmatpush.msra.mxu0 0.0
        %4693 = vmatpush.msra.mxu0 0.0
        %4694 = vmatpush.msra.mxu0 0.0
        %4695 = vmatpush.msra.mxu0 0.0
        %4696 = vmatpush.msra.mxu0 0.0
        %4697 = vmatpush.msra.mxu0 0.0
        %4698 = vmatpush.msra.mxu0 0.0
        %4699 = vmatpush.msra.mxu0 0.0
        %4700 = vmatpush.msra.mxu0 0.0
        %4701 = vmatpush.msra.mxu0 0.0
        %4702 = vmatpush.msra.mxu0 0.0
        %4703 = vmatpush.msra.mxu0 %v4686
        %4704 = vmatmul.f32.gmra.mxu0 %v4606
        %v4705 = vpop.f32.mrf.mxu0
        %v4706 = vadd.f32 0.0, %v4705
        %4707 = vdwg.mxu0
        %v4708 = vmax.f32 %v4682, %v4706
        %vm4709 = vcmask 2048
        %4710 = vst.msk [vmem:[%s803] sm:$0x7] %vm4709, %v4708
        %p4711 = scmp.lt.s32.totalorder %s37, 1
        %s4712 = scalar_select %p4711, %s37, 1
        %s4713 = smul.addr %s4712, 4
        %s4714 = scalar_lea.vmem %s17, %s4713
        // Predicated region
        $region153: #{_lambda_.1} parent=87 // pred_check
          %p4715 = pneg %p417
        $region154: #{_lambda_.1} parent=87 // pred_check_branch
          %4717 = sbr.rel (%p4715) target = $region156
        $region155: #{_lambda_.1} parent=87 // pred_region
          _
        $region156: #{_lambda_.1} parent=87 // pred_fallthru
          _
      $region88: #{_lambda_.1} parent=5 // pred_fallthru
        _
      %p4718 = scmp.le.s32.totalorder 2, %s32
      // Predicated region
      $region157: #{_lambda_.1} parent=5 // pred_check
        %p4719 = pneg %p4718
      $region158: #{_lambda_.1} parent=5 // pred_check_branch
        %4721 = sbr.rel (%p4719) target = $region160
      $region159: #{_lambda_.1} parent=5 // pred_region
        %s4722 = ssub.s32 %s32, 2
        // Predicated region
        $region161: #{_lambda_.1} parent=159 // pred_check
          %p4723 = pneg %p423
        $region162: #{_lambda_.1} parent=159 // pred_check_branch
          %4725 = sbr.rel (%p4723) target = $region164
        $region163: #{_lambda_.1} parent=159 // pred_region
          %p4726 = scmp.lt.s32.totalorder %s38, 1
          %s4727 = scalar_select %p4726, %s38, 1
          %s4728 = smul.addr %s4727, 4
          %s4729 = scalar_lea.vmem %s17, %s4728
        $region164: #{_lambda_.1} parent=159 // pred_fallthru
          _
      $region160: #{_lambda_.1} parent=5 // pred_fallthru
        _
    $region6: #{_lambda_.1} parent=1 // loop_footer
      %s36 = sadd.s32 1, %s32
    $region7: #{_lambda_.1} parent=1 // loop_footer_branch
      %31 = sbr.rel target = $region3
    $region8: #{_lambda_.1} parent=1 // loop_exit
      _
    %4730 = vsyncpa [#allocation3], 1
    %s4731 = scalar_lea.sflag [#allocation3], 1
    %4732 = vsyncpa %s4731, 1
    %4733 = vsyncpa [#allocation5], 1
    %4734 = vsyncpa [#allocation8], 1
    %4735 = vsyncpa [#allocation11], 1
    %4736 = vsyncpa [#allocation14], 1
    %4737 = vsyncpa [#allocation17], 1
    %4738 = vsyncpa [#allocation20], 1
    %4739 = vsyncpa [#allocation23], 1
    %4740 = vsyncpa [#allocation26], 1

</llo_original>
